<compile_context>
chip_gen: v6e
topology: v6e:2x2x1
jax: 0.10.0
libtpu: 0.0.40
codegen_flags: <defaults>
</compile_context>

<pallas_src>
import functools
import math

import jax
import jax.numpy as jnp
from jax.experimental import pallas as pl
from jax.experimental.pallas import tpu as pltpu


def _device_kind():
    try:
        return jax.devices()[0].device_kind.lower()
    except Exception:
        return ""


_KIND = _device_kind()
_BIG_VMEM = ("v5" in _KIND) or ("v6" in _KIND)          # 128 MiB parts
_VMEM_LIMIT = (100 if _BIG_VMEM else 48) * 1024 * 1024
_MATMUL_VMEM_BUDGET = (64 if _BIG_VMEM else 24) * 1024 * 1024


def _cparams(dimension_semantics):
    return pltpu.CompilerParams(
        dimension_semantics=dimension_semantics,
        vmem_limit_bytes=_VMEM_LIMIT,
    )


def _round_up(x, m):
    return (x + m - 1) // m * m


def _rup128(c):
    return _round_up(c, 128)


# ----------------------------------------------------------------------------
# Pallas kernels
# ----------------------------------------------------------------------------
def _matmul_bias_act_kernel(x_ref, w_ref, b_ref, o_ref, *, act):
    """y = act(x @ w + b); BN scale is pre-folded into w."""
    y = jnp.dot(x_ref[...], w_ref[...], preferred_element_type=jnp.float32)
    y = y + b_ref[...]
    if act == "relu":
        y = jnp.maximum(y, 0.0)
    elif act == "softmax":
        y = y - jnp.max(y, axis=-1, keepdims=True)
        e = jnp.exp(y)
        y = e / jnp.sum(e, axis=-1, keepdims=True)
    o_ref[...] = y.astype(o_ref.dtype)


def _dw_kernel(*refs, stride, Ho, Wo, R, n_taps):
    """Depthwise 3x3x3 conv + folded BN for one (batch, t_out) grid step.

    stride == 1: n_taps = 3 temporal-tap planes of shape (Ho+2, Wo+2, C).
    stride == 2: n_taps = 12 (3 temporal taps x 4 even/odd spatial phases),
                 each (Ho+1, Wo+1, C), so every tap is a contiguous slice.

    All taps are cast to f32 once into a VMEM scratch (xf_ref); the 27-tap
    accumulation runs over R-row output chunks so the accumulator stays in
    vregs.  BN scale is pre-folded into w; only the bias is added here.
    """
    x_refs = refs[:n_taps]
    w_ref = refs[n_taps]
    b_ref = refs[n_taps + 1]
    o_ref = refs[n_taps + 2]
    xf_ref = refs[n_taps + 3]

    # Hoisted bf16 -> f32 cast: one pass per tap plane instead of 27 per-tap.
    for i in range(n_taps):
        xf_ref[i] = x_refs[i][...].astype(jnp.float32)

    bias = b_ref[...]                                    # (1, C) f32

    for r0 in range(0, Ho, R):
        rr = min(R, Ho - r0)
        acc = None
        for dt in range(3):
            for dh in range(3):
                for dx in range(3):
                    widx = dt * 9 + dh * 3 + dx
                    if stride == 1:
                        sl = xf_ref[dt,
                                    r0 + dh:r0 + dh + rr,
                                    dx:dx + Wo, :]
                    else:
                        ph = dt * 4 + (dh % 2) * 2 + (dx % 2)
                        sl = xf_ref[ph,
                                    r0 + dh // 2:r0 + dh // 2 + rr,
                                    dx // 2:dx // 2 + Wo, :]
                    term = sl * w_ref[widx]
                    acc = term if acc is None else acc + term
        o_ref[r0:r0 + rr] = (acc + bias).astype(o_ref.dtype)


# ----------------------------------------------------------------------------
# Pallas wrappers (jitted so identical shapes share a single compilation)
# ----------------------------------------------------------------------------
def _pick_tm(M, K, N, out_bytes):
    """Largest M-tile that fits the VMEM budget (double-buffered x/out + w);
    prefer a divisor of M so the tail never needs a full-tensor pad copy."""
    mr = _round_up(M, 8)
    denom = max(4 * K + 2 * N * out_bytes, 1)
    cap = (_MATMUL_VMEM_BUDGET - 4 * K * N - 8 * N) // denom
    cap = max(8, min(cap, 4096))
    cap = cap // 8 * 8
    if mr <= cap:
        return mr
    if M % 8 == 0:
        tm = cap
        while tm >= 128:
            if M % tm == 0:
                return tm
            tm -= 8
    return cap


@functools.partial(jax.jit, static_argnames=("act", "out_dtype"))
def fused_matmul(x, w, bias, *, act, out_dtype=jnp.bfloat16):
    """y = act(x @ w + b);   x: (M, K), w: (K, N) with BN scale pre-folded."""
    M, K = x.shape
    N = w.shape[1]
    out_bytes = jnp.dtype(out_dtype).itemsize
    tm = _pick_tm(M, K, N, out_bytes)
    mp = _round_up(M, tm)

    n_split = 1
    if mp // tm == 1:
        # Single-step grid would leave the second v7x TensorCore idle.
        if act != "softmax" and N >= 256 and N % 256 == 0:
            n_split = 2
        elif mp >= 512 and (mp // 2) % 8 == 0:
            tm = mp // 2
            mp = _round_up(M, tm)
    tn = N // n_split

    xb = x.astype(jnp.bfloat16)
    if mp != M:
        xb = jnp.pad(xb, ((0, mp - M), (0, 0)))

    out = pl.pallas_call(
        functools.partial(_matmul_bias_act_kernel, act=act),
        out_shape=jax.ShapeDtypeStruct((mp, N), out_dtype),
        grid_spec=pltpu.PrefetchScalarGridSpec(
            num_scalar_prefetch=0,
            grid=(mp // tm, n_split),
            in_specs=[
                pl.BlockSpec((tm, K), lambda i, j: (i, 0)),
                pl.BlockSpec((K, tn), lambda i, j: (0, j)),
                pl.BlockSpec((1, tn), lambda i, j: (0, j)),
            ],
            out_specs=pl.BlockSpec((tm, tn), lambda i, j: (i, j)),
        ),
        compiler_params=_cparams(("parallel", "parallel")),
    )(xb, w.astype(jnp.bfloat16), bias.reshape(1, N).astype(jnp.float32))
    return out[:M]


@functools.partial(jax.jit, static_argnames=("stride",))
def depthwise_conv3d(x, w, bias, *, stride):
    """Depthwise 3x3x3 Conv3d (groups == C) + folded BN (no activation).

    x: (B, T, H, W, C) channels-last; w: (27, 1, C) f32 with BN scale folded;
    bias: (C,) f32.  stride (1 or 2) applies to (T, H, W); padding 1.
    Taps are formed in-kernel (no im2col materialization in HBM).
    """
    B, T, H, W, C = x.shape
    To = (T - 1) // stride + 1
    Ho = (H - 1) // stride + 1
    Wo = (W - 1) // stride + 1
    xp = jnp.pad(x.astype(jnp.bfloat16),
                 ((0, 0), (1, 1), (1, 1), (1, 1), (0, 0)))

    if stride == 1:
        n_taps = 3
        Hb, Wb = H + 2, W + 2
        x_ops = [xp, xp, xp]
    else:
        # Even/odd spatial phase split (one cheap copy) so every stride-2 tap
        # is a contiguous slice inside the kernel.
        n_taps = 12
        Hb, Wb = Ho + 1, Wo + 1
        phases = [xp[:, :, ph::2, pw::2, :] for ph in range(2) for pw in range(2)]
        x_ops = []
        for dt in range(3):
            for p_ in range(4):
                x_ops.append(phases[p_])

    def tap_spec(dt):
        if stride == 1:
            imap = lambda b, t, dt=dt: (b, t + dt, 0, 0, 0)
        else:
            imap = lambda b, t, dt=dt: (b, 2 * t + dt, 0, 0, 0)
        return pl.BlockSpec((None, None, Hb, Wb, C), imap)

    if stride == 1:
        x_specs = [tap_spec(dt) for dt in range(3)]
    else:
        x_specs = [tap_spec(dt) for dt in range(3) for _ in range(4)]

    # Row-chunk size: keep the f32 accumulator within ~16 vregs.
    vregs_per_row = (-(-Wo // 8)) * (-(-C // 128))
    R = 1
    for cand in range(min(8, Ho), 0, -1):
        if Ho % cand == 0 and cand * vregs_per_row <= 16:
            R = cand
            break

    out = pl.pallas_call(
        functools.partial(_dw_kernel, stride=stride, Ho=Ho, Wo=Wo, R=R,
                          n_taps=n_taps),
        out_shape=jax.ShapeDtypeStruct((B, To, Ho, Wo, C), jnp.bfloat16),
        grid_spec=pltpu.PrefetchScalarGridSpec(
            num_scalar_prefetch=0,
            grid=(B, To),
            in_specs=x_specs + [
                pl.BlockSpec((27, 1, C), lambda b, t: (0, 0, 0)),
                pl.BlockSpec((1, C), lambda b, t: (0, 0)),
            ],
            out_specs=pl.BlockSpec((None, None, Ho, Wo, C),
                                   lambda b, t: (b, t, 0, 0, 0)),
            scratch_shapes=[pltpu.VMEM((n_taps, Hb, Wb, C), jnp.float32)],
        ),
        compiler_params=_cparams(("parallel", "parallel")),
    )(*x_ops, w, bias.reshape(1, C).astype(jnp.float32))
    return out


# ----------------------------------------------------------------------------
# Conv helpers built on the Pallas kernels
# ----------------------------------------------------------------------------
def pointwise_conv(x, w, bias, act):
    """1x1x1 Conv3d + folded BN + activation.  w: (Kp, Np) bf16, scale folded."""
    B, T, H, W, K = x.shape
    N = w.shape[1]
    y = fused_matmul(x.reshape(-1, K), w, bias, act=act)
    return y.reshape(B, T, H, W, N)


@jax.jit
def first_conv_apply(x, w, bias):
    """Conv3d(3, 24, k=3, stride=(1,2,2), pad=1) + BN + ReLU via im2col matmul."""
    # TODO(synk): fold the im2col into the kernel (haloed in_specs) to save one
    # write+read of the (M, 81) bf16 patch matrix (~4 MB, one-off).
    B, T, H, W, C = x.shape
    xp = jnp.pad(x, ((0, 0), (1, 1), (1, 1), (1, 1), (0, 0)))
    To, Ho, Wo = T, (H - 1) // 2 + 1, (W - 1) // 2 + 1
    cols = []
    for dt in range(3):
        for dh in range(3):
            for dw in range(3):
                cols.append(xp[:, dt:dt + To, dh:dh + 2 * Ho:2,
                               dw:dw + 2 * Wo:2, :])
    # (B,To,Ho,Wo,Cin,27) flattened (cin-major, then dt,dh,dw) to match weights.
    patches = jnp.stack(cols, axis=-1).reshape(B * To * Ho * Wo, C * 27)
    y = fused_matmul(patches, w, bias, act="relu")
    return y.reshape(B, To, Ho, Wo, -1)


# ----------------------------------------------------------------------------
# Parameter initialization (deterministic; matches the module's __init__ shapes,
# then pads channels to lane multiples of 128 and folds eval-mode BN scales).
# ----------------------------------------------------------------------------
def _bn_eval(c):
    eps = 1e-5
    gamma = jnp.ones((c,), jnp.float32)
    beta = jnp.zeros((c,), jnp.float32)
    mean = jnp.zeros((c,), jnp.float32)
    var = jnp.ones((c,), jnp.float32)
    scale = gamma / jnp.sqrt(var + eps)
    bias = beta - mean * scale
    return scale, bias


def _kaiming(key, shape):
    # kaiming_normal_(mode='fan_out', nonlinearity='relu') for Conv3d weights
    fan_out = shape[0] * shape[2] * shape[3] * shape[4]
    return jax.random.normal(key, shape, jnp.float32) * math.sqrt(2.0 / fan_out)


def _pw_mat(w, scale, kp, np_, row_map=None):
    """Padded, BN-scale-folded 1x1x1 conv weight: (Kp, Np) bf16.
    row_map[j] gives the padded-input row index carrying logical input ch j."""
    cout, cin = w.shape[0], w.shape[1]
    wf = (w.reshape(cout, cin) * scale[:, None]).T        # (cin, cout) f32
    rows = jnp.arange(cin) if row_map is None else jnp.asarray(row_map)
    out = jnp.zeros((kp, np_), jnp.float32)
    out = out.at[rows, :cout].set(wf)
    return out.astype(jnp.bfloat16)


def _dw_mat(w, scale, cp):
    """Padded, BN-scale-folded depthwise weight: (27, 1, Cp) f32."""
    c = w.shape[0]
    wt = w.reshape(c, 27).T * scale[None, :]               # (27, c)
    out = jnp.zeros((27, 1, cp), jnp.float32)
    out = out.at[:, 0, :c].set(wt)
    return out


def _pad_vec(v, n):
    return jnp.zeros((n,), jnp.float32).at[:v.shape[0]].set(v)


def init_params(key, num_classes):
    stage_repeats = [4, 8, 4]
    soc = [-1, 24, 244, 488, 976, 2048]                    # model_size '2.0x'
    keys = iter(jax.random.split(key, 256))

    params = {"blocks": []}
    meta = {"blocks": []}

    c1 = soc[1]
    w = _kaiming(next(keys), (c1, 3, 3, 3, 3))
    s, b = _bn_eval(c1)
    params["first_conv_w"] = ((w.reshape(c1, 3 * 27) * s[:, None]).T
                              ).astype(jnp.bfloat16)       # (81, 24)
    params["first_conv_b"] = b

    input_channel = c1
    in_p = c1                       # padded width of the current activation
    for idxstage in range(3):
        oup = soc[idxstage + 2]
        for i in range(stage_repeats[idxstage]):
            blk, m = {}, {}
            mid = oup // 2
            midp = _rup128(mid)
            if i == 0:
                # stride-2 block: branch_main + branch_proj on the full input.
                inp = input_channel
                outputs = oup - inp
                hp = _rup128(outputs)
                gp = _rup128(inp)
                cp_out = _rup128(oup)

                w1 = _kaiming(next(keys), (mid, inp, 1, 1, 1))
                s1, b1 = _bn_eval(mid)
                blk["pw1_w"] = _pw_mat(w1, s1, in_p, midp)
                blk["pw1_b"] = _pad_vec(b1, midp)

                wd = _kaiming(next(keys), (mid, 1, 3, 3, 3))
                s2, b2 = _bn_eval(mid)
                blk["dw_w"] = _dw_mat(wd, s2, midp)
                blk["dw_b"] = _pad_vec(b2, midp)

                w2 = _kaiming(next(keys), (outputs, mid, 1, 1, 1))
                s3, b3 = _bn_eval(outputs)
                blk["pw2_w"] = _pw_mat(w2, s3, midp, hp)
                blk["pw2_b"] = _pad_vec(b3, hp)

                wdp = _kaiming(next(keys), (inp, 1, 3, 3, 3))
                sp1, bp1 = _bn_eval(inp)
                blk["dwp_w"] = _dw_mat(wdp, sp1, in_p)
                blk["dwp_b"] = _pad_vec(bp1, in_p)

                wpp = _kaiming(next(keys), (inp, inp, 1, 1, 1))
                sp2, bp2 = _bn_eval(inp)
                blk["pwp_w"] = _pw_mat(wpp, sp2, in_p, gp)
                blk["pwp_b"] = _pad_vec(bp2, gp)

                m.update(stride=2, inp=inp, outputs=outputs, cp_out=cp_out)
                in_p = cp_out
            else:
                # stride-1 block: channel shuffle (evens pass through, odds go
                # through the branch).  pw1 takes the FULL padded input with
                # odd-channel-selecting weight rows (no xb slice in HBM).
                C = input_channel                      # == oup
                inp = C // 2
                outputs = oup - inp                    # == C // 2
                hp = in_p // 2                         # == _rup128(outputs)

                w1 = _kaiming(next(keys), (mid, inp, 1, 1, 1))
                s1, b1 = _bn_eval(mid)
                row_map = [2 * j + 1 for j in range(inp)]
                blk["pw1_w"] = _pw_mat(w1, s1, in_p, midp, row_map)
                blk["pw1_b"] = _pad_vec(b1, midp)

                wd = _kaiming(next(keys), (mid, 1, 3, 3, 3))
                s2, b2 = _bn_eval(mid)
                blk["dw_w"] = _dw_mat(wd, s2, midp)
                blk["dw_b"] = _pad_vec(b2, midp)

                w2 = _kaiming(next(keys), (outputs, mid, 1, 1, 1))
                s3, b3 = _bn_eval(outputs)
                blk["pw2_w"] = _pw_mat(w2, s3, midp, hp)
                blk["pw2_b"] = _pad_vec(b3, hp)

                m.update(stride=1, C=C, cp_out=in_p)

            params["blocks"].append(blk)
            meta["blocks"].append(m)
            input_channel = oup

    wl = _kaiming(next(keys), (soc[-1], input_channel, 1, 1, 1))
    sl_, bl_ = _bn_eval(soc[-1])
    params["conv_last_w"] = _pw_mat(wl, sl_, in_p, soc[-1])
    params["conv_last_b"] = bl_

    wpj = 0.01 * jax.random.normal(next(keys), (num_classes, soc[-1]),
                                   jnp.float32)
    params["proj_w"] = wpj.T.astype(jnp.bfloat16)          # (2048, nc)
    params["proj_b"] = jnp.zeros((num_classes,), jnp.float32)
    return params, meta


# ----------------------------------------------------------------------------
# Forward pass
# ----------------------------------------------------------------------------
def shuffle_block_forward(x, p, m):
    if m["stride"] == 2:
        h = pointwise_conv(x, p["pw1_w"], p["pw1_b"], "relu")
        h = depthwise_conv3d(h, p["dw_w"], p["dw_b"], stride=2)
        h = pointwise_conv(h, p["pw2_w"], p["pw2_b"], "relu")
        g = depthwise_conv3d(x, p["dwp_w"], p["dwp_b"], stride=2)
        g = pointwise_conv(g, p["pwp_w"], p["pwp_b"], "relu")
        parts = [g[..., :m["inp"]], h[..., :m["outputs"]]]
        pad = m["cp_out"] - m["inp"] - m["outputs"]
    else:
        # channel_shuffle: even channels pass through, odd channels -> branch.
        # TODO(synk): fold the concat into the pw2 kernel via channel-offset
        # out_specs + input_output_aliases to drop this HBM copy.
        C = m["C"]
        x_proj = x[..., 0:C:2]
        h = pointwise_conv(x, p["pw1_w"], p["pw1_b"], "relu")
        h = depthwise_conv3d(h, p["dw_w"], p["dw_b"], stride=1)
        h = pointwise_conv(h, p["pw2_w"], p["pw2_b"], "relu")
        parts = [x_proj, h[..., :C // 2]]
        pad = m["cp_out"] - C
    if pad:
        parts.append(jnp.zeros(parts[0].shape[:-1] + (pad,), parts[0].dtype))
    return jnp.concatenate(parts, axis=-1)


def mgma_shufflenet_forward(params, meta, x_ncthw):
    # x_ncthw: (B, 3, T, H, W) like the PyTorch module; convert to NDHWC bf16.
    x = jnp.transpose(x_ncthw, (0, 2, 3, 4, 1)).astype(jnp.bfloat16)
    x = first_conv_apply(x, params["first_conv_w"], params["first_conv_b"])
    for p, m in zip(params["blocks"], meta["blocks"]):
        x = shuffle_block_forward(x, p, m)
    x = pointwise_conv(x, params["conv_last_w"], params["conv_last_b"], "relu")
    B, T, H, W, C = x.shape
    # AvgPool3d((T/8, 7, 7), stride 1): feature map is exactly (T/8, 7, 7).
    assert H == 7 and W == 7, "input spatial size must be 112 (fixed 7x7 pool)"
    pooled = jnp.mean(x.astype(jnp.float32), axis=(1, 2, 3))      # (B, 2048)
    # permute(0,2,3,4,1) -> Linear -> Softmax(dim=4) -> mean over singleton dims
    probs = fused_matmul(pooled, params["proj_w"], params["proj_b"],
                         act="softmax", out_dtype=jnp.float32)
    return probs                                                   # (B, classes)


if __name__ == "__main__":
    key = jax.random.PRNGKey(0)
    pkey, xkey = jax.random.split(key)
    num_classes = 10
    params, meta = init_params(pkey, num_classes)
    # Smallest input consistent with the module: 112x112 spatial (final 7x7
    # pooling window after /16 downsampling) and NUM_FRAMES=8 (T/8 = 1).
    x = jax.random.normal(xkey, (1, 3, 8, 112, 112), jnp.float32)
    out = mgma_shufflenet_forward(params, meta, x)
    out = jax.block_until_ready(out)
    assert out.shape == (1, num_classes)
    assert bool(jnp.all(jnp.isfinite(out)))
    print("KERNEL_OK")
</pallas_src>

<mosaic_0001>
module attributes {stable_mosaic.version = 11 : i64} {
  func.func @_matmul_bias_act_kernel(%arg0: i32, %arg1: i32, %arg2: memref<3584x81xbf16, #tpu.memory_space<vmem>>, %arg3: memref<81x24xbf16, #tpu.memory_space<vmem>>, %arg4: memref<1x24xf32, #tpu.memory_space<vmem>>, %arg5: memref<3584x24xbf16, #tpu.memory_space<vmem>>) attributes {dimension_semantics = [#tpu.dimension_semantics<parallel>, #tpu.dimension_semantics<parallel>], iteration_bounds = array<i64: 7, 1>, scalar_prefetch = 0 : i64, scratch_operands = 0 : i64, tpu.core_type = #tpu.core_type<tc>, window_params = [{transform_indices = @transform_0, window_bounds = array<i64: 3584, 81>}, {transform_indices = @transform_1, window_bounds = array<i64: 81, 24>}, {transform_indices = @transform_2, window_bounds = array<i64: 1, 24>}, {transform_indices = @transform_3, window_bounds = array<i64: 3584, 24>}]} {
    %c0 = arith.constant 0 : index
    %c0_0 = arith.constant 0 : index
    %0 = vector.load %arg2[%c0, %c0_0] : memref<3584x81xbf16, #tpu.memory_space<vmem>>, vector<3584x81xbf16>
    %c0_1 = arith.constant 0 : index
    %c0_2 = arith.constant 0 : index
    %1 = vector.load %arg3[%c0_1, %c0_2] : memref<81x24xbf16, #tpu.memory_space<vmem>>, vector<81x24xbf16>
    %cst = arith.constant dense<0.000000e+00> : vector<3584x24xf32>
    %2 = tpu.matmul %0, %1, %cst {dimension_numbers = #tpu.dot_dimension_numbers<[1], [0], [0], [1], [0, 0, 1, 1], [], []>} : vector<3584x81xbf16>, vector<81x24xbf16>, vector<3584x24xf32> -> vector<3584x24xf32>
    %c0_3 = arith.constant 0 : index
    %c0_4 = arith.constant 0 : index
    %3 = vector.load %arg4[%c0_3, %c0_4] : memref<1x24xf32, #tpu.memory_space<vmem>>, vector<1x24xf32>
    %4 = vector.broadcast %3 : vector<1x24xf32> to vector<3584x24xf32>
    %5 = arith.addf %2, %4 : vector<3584x24xf32>
    %cst_5 = arith.constant 0.000000e+00 : f32
    %6 = vector.broadcast %cst_5 : f32 to vector<3584x24xf32>
    %7 = arith.maximumf %5, %6 : vector<3584x24xf32>
    %8 = arith.truncf %7 : vector<3584x24xf32> to vector<3584x24xbf16>
    %c0_6 = arith.constant 0 : index
    %c0_7 = arith.constant 0 : index
    %9 = vector.load %arg5[%c0_6, %c0_7] : memref<3584x24xbf16, #tpu.memory_space<vmem>>, vector<3584x24xbf16>
    tpu.vector_store %arg5[%c0_6, %c0_7], %8 {strides = array<i32>} : memref<3584x24xbf16, #tpu.memory_space<vmem>>, vector<3584x24xbf16>,
    return
  }
  func.func @transform_0(%arg0: i32, %arg1: i32) -> (i32, i32) {
    %c0_i32 = arith.constant 0 : i32
    %c0_i32_0 = arith.constant 0 : i32
    return %arg0, %c0_i32 : i32, i32
  }
  func.func @transform_1(%arg0: i32, %arg1: i32) -> (i32, i32) {
    %c0_i32 = arith.constant 0 : i32
    %c0_i32_0 = arith.constant 0 : i32
    return %c0_i32, %arg1 : i32, i32
  }
  func.func @transform_2(%arg0: i32, %arg1: i32) -> (i32, i32) {
    %c0_i32 = arith.constant 0 : i32
    %c0_i32_0 = arith.constant 0 : i32
    return %c0_i32, %arg1 : i32, i32
  }
  func.func @transform_3(%arg0: i32, %arg1: i32) -> (i32, i32) {
    %c0_i32 = arith.constant 0 : i32
    return %arg0, %arg1 : i32, i32
  }
}

</mosaic_0001>

<llo_original>
// kernel: fused_matmul.1
$region0: #{fused_matmul.1}
  #allocation0 [shape = 'u32[]', space=smem, size = 0x4, offset = 0x4, fixed_abs, tag = 'smem constant byte address 0x4 - core index']
  #allocation1 [shape = 'u32[144,128]{1,0:T(1,128)}', space=vmem, size = 0x12000, scoped, tag = 'internal scratch']
  %s0 = inlined_call_operand.vmem [shape: bf16[25088,81], index: 0, kind: input, shape index: {}]
  %s1 = inlined_call_operand.vmem [shape: bf16[81,24], index: 1, kind: input, shape index: {}]
  %s2 = inlined_call_operand.vmem [shape: f32[1,24], index: 2, kind: input, shape index: {}]
  %s3 = inlined_call_operand.vmem [shape: bf16[25088,24], index: 3, kind: output, shape index: {}]
  %s4 = sld [smem:[#allocation0]]
  $region45: #{fused_matmul.1} parent=0
    _
  %s6 = ssub.s32 1, %s4
  %s7 = scalar_select 0, %s6, %s4
  loop: start=0, step=1, limit=9
  $region2: #{fused_matmul.1} parent=0 // loop_pre_header
    _
  $region3: #{fused_matmul.1} parent=0 // loop_header
    %s9 = sphi 0, %s13
    %p10 = scmp.ge.s32.totalorder %s9, 9
    %s16 = sphi 0, %s28
    %s17 = sphi 0, %s24
    %s18 = sphi 0, %s16
    %s19 = sphi 0, %s17
    %s20 = sphi 0, %s18
    %s21 = sphi 0, %s19
    %s31 = sphi 0, %s33
    %s34 = sphi 0, %s31
    %s35 = sphi 0, %s34
    %s51 = sphi 0, %s35
    %s57 = sphi 0, %s59
    %s60 = sphi 0, %s57
    %s61 = sphi 0, %s60
    %s77 = sphi 0, %s61
    %s83 = sphi 0, %s85
    %s86 = sphi 0, %s83
    %s87 = sphi 0, %s86
    %s103 = sphi 0, %s87
    %s111 = sphi 0, %s113
    %s114 = sphi 0, %s111
    %s115 = sphi 0, %s114
    %s131 = sphi 0, %s115
  $region4: #{fused_matmul.1} parent=0 // loop_header_branch
    %12 = sbr.rel (%p10) target = $region8
  $region5: #{fused_matmul.1} parent=0 // loop_body
    %s14 = ssub.s32 %s9, 1
    %s15 = ssub.s32 %s9, 2
    %s22 = sadd.s32 1, %s17
    %p23 = scmp.ge.s32.totalorder %s22, 1
    %s24 = scalar_select %p23, 0, %s22
    %s25 = sadd.s32 1, %s16
    %s26 = scalar_select %p23, %s25, %s16
    %p27 = scmp.ge.s32.totalorder %s26, 7
    %s28 = scalar_select %p27, 0, %s26
    %s29 = ssub.s32 %s16, %s28
    %p30 = scmp.eq.s32.totalorder %s29, 0
    %s32 = sadd.s32 %s31, 1
    %s33 = scalar_select %p30, %s31, %s32
    %p36 = pneg %p30
    %p37 = scmp.eq.s32.totalorder %s9, 6
    %p38 = por %p36, %p37
    %p39 = scmp.ne.s32.totalorder %s31, %s34
    %p40 = scmp.eq.s32.totalorder %s9, 0
    %p41 = por %p39, %p40
    %p42 = scmp.ne.s32.totalorder %s31, %s34
    %p43 = scmp.eq.s32.totalorder %s14, 6
    %p44 = por %p42, %p43
    %p45 = scmp.ne.s32.totalorder %s34, %s35
    %p46 = scmp.eq.s32.totalorder %s14, 0
    %p47 = por %p45, %p46
    %p48 = scmp.ne.s32.totalorder %s34, %s35
    %p49 = scmp.eq.s32.totalorder %s15, 6
    %p50 = por %p48, %p49
    %p52 = scmp.ne.s32.totalorder %s35, %s51
    %p53 = scmp.eq.s32.totalorder %s15, 0
    %p54 = por %p52, %p53
    %s55 = ssub.s32 %s17, %s24
    %p56 = scmp.eq.s32.totalorder %s55, 0
    %s58 = sadd.s32 %s57, 1
    %s59 = scalar_select %p56, %s57, %s58
    %p62 = pneg %p56
    %p63 = scmp.eq.s32.totalorder %s9, 6
    %p64 = por %p62, %p63
    %p65 = scmp.ne.s32.totalorder %s57, %s60
    %p66 = scmp.eq.s32.totalorder %s9, 0
    %p67 = por %p65, %p66
    %p68 = scmp.ne.s32.totalorder %s57, %s60
    %p69 = scmp.eq.s32.totalorder %s14, 6
    %p70 = por %p68, %p69
    %p71 = scmp.ne.s32.totalorder %s60, %s61
    %p72 = scmp.eq.s32.totalorder %s14, 0
    %p73 = por %p71, %p72
    %p74 = scmp.ne.s32.totalorder %s60, %s61
    %p75 = scmp.eq.s32.totalorder %s15, 6
    %p76 = por %p74, %p75
    %p78 = scmp.ne.s32.totalorder %s61, %s77
    %p79 = scmp.eq.s32.totalorder %s15, 0
    %p80 = por %p78, %p79
    %s81 = ssub.s32 %s17, %s24
    %p82 = scmp.eq.s32.totalorder %s81, 0
    %s84 = sadd.s32 %s83, 1
    %s85 = scalar_select %p82, %s83, %s84
    %p88 = pneg %p82
    %p89 = scmp.eq.s32.totalorder %s9, 6
    %p90 = por %p88, %p89
    %p91 = scmp.ne.s32.totalorder %s83, %s86
    %p92 = scmp.eq.s32.totalorder %s9, 0
    %p93 = por %p91, %p92
    %p94 = scmp.ne.s32.totalorder %s83, %s86
    %p95 = scmp.eq.s32.totalorder %s14, 6
    %p96 = por %p94, %p95
    %p97 = scmp.ne.s32.totalorder %s86, %s87
    %p98 = scmp.eq.s32.totalorder %s14, 0
    %p99 = por %p97, %p98
    %p100 = scmp.ne.s32.totalorder %s86, %s87
    %p101 = scmp.eq.s32.totalorder %s15, 6
    %p102 = por %p100, %p101
    %p104 = scmp.ne.s32.totalorder %s87, %s103
    %p105 = scmp.eq.s32.totalorder %s15, 0
    %p106 = por %p104, %p105
    %s107 = ssub.s32 %s16, %s28
    %s108 = ssub.s32 %s17, %s24
    %s109 = sor.u32 %s107, %s108
    %p110 = scmp.eq.s32.totalorder %s109, 0
    %s112 = sadd.s32 %s111, 1
    %s113 = scalar_select %p110, %s111, %s112
    %p116 = pneg %p110
    %p117 = scmp.eq.s32.totalorder %s9, 6
    %p118 = por %p116, %p117
    %p119 = scmp.ne.s32.totalorder %s111, %s114
    %p120 = scmp.eq.s32.totalorder %s9, 0
    %p121 = por %p119, %p120
    %p122 = scmp.ne.s32.totalorder %s111, %s114
    %p123 = scmp.eq.s32.totalorder %s14, 6
    %p124 = por %p122, %p123
    %p125 = scmp.ne.s32.totalorder %s114, %s115
    %p126 = scmp.eq.s32.totalorder %s14, 0
    %p127 = por %p125, %p126
    %p128 = scmp.ne.s32.totalorder %s114, %s115
    %p129 = scmp.eq.s32.totalorder %s15, 6
    %p130 = por %p128, %p129
    %p132 = scmp.ne.s32.totalorder %s115, %s131
    %p133 = scmp.eq.s32.totalorder %s15, 0
    %p134 = por %p132, %p133
    %p135 = scmp.le.s32.totalorder 1, %s9
    %p136 = scmp.lt.s32.totalorder %s9, 8
    %p137 = pnand %p135, %p136
    %p138 = pneg %p137
    // Predicated region
    $region9: #{fused_matmul.1} parent=5 // pred_check
      _
    $region10: #{fused_matmul.1} parent=5 // pred_check_branch
      %140 = sbr.rel (%p137) target = $region12
    $region11: #{fused_matmul.1} parent=5 // pred_region
      %s141 = ssub.s32 %s9, 1
      // Predicated region
      $region13: #{fused_matmul.1} parent=11 // pred_check
        %p142 = pneg %p73
      $region14: #{fused_matmul.1} parent=11 // pred_check_branch
        %144 = sbr.rel (%p142) target = $region16
      $region15: #{fused_matmul.1} parent=11 // pred_region
        %p145 = scmp.lt.s32.totalorder %s19, 0
        %s146 = scalar_select %p145, %s19, 0
        %s147 = smul.addr %s146, 4
        %s148 = scalar_lea.vmem %s1, %s147
      $region16: #{fused_matmul.1} parent=11 // pred_fallthru
        _
      // Predicated region
      $region17: #{fused_matmul.1} parent=11 // pred_check
        %p149 = pneg %p99
      $region18: #{fused_matmul.1} parent=11 // pred_check_branch
        %151 = sbr.rel (%p149) target = $region20
      $region19: #{fused_matmul.1} parent=11 // pred_region
        %p152 = scmp.lt.s32.totalorder %s19, 0
        %s153 = scalar_select %p152, %s19, 0
        %s154 = scalar_lea.vmem %s2, %s153
      $region20: #{fused_matmul.1} parent=11 // pred_fallthru
        _
    $region12: #{fused_matmul.1} parent=5 // pred_fallthru
      _
    %p155 = scmp.lt.s32.totalorder %s9, 7
    // Predicated region
    $region21: #{fused_matmul.1} parent=5 // pred_check
      %p156 = pneg %p155
    $region22: #{fused_matmul.1} parent=5 // pred_check_branch
      %158 = sbr.rel (%p156) target = $region24
    $region23: #{fused_matmul.1} parent=5 // pred_region
      // Predicated region
      $region25: #{fused_matmul.1} parent=23 // pred_check
        %p159 = pneg %p41
      $region26: #{fused_matmul.1} parent=23 // pred_check_branch
        %161 = sbr.rel (%p159) target = $region28
      $region27: #{fused_matmul.1} parent=23 // pred_region
        %s162 = smul.u32 448, %s16
        %p163 = scmp.lt.s32.totalorder %s162, 3135
        %s164 = scalar_select %p163, %s162, 3135
        %s165 = smul.addr %s164, 4
        %s166 = scalar_lea.vmem %s0, %s165
        %s167 = smul.u32 448, %s16
      $region28: #{fused_matmul.1} parent=23 // pred_fallthru
        _
    $region24: #{fused_matmul.1} parent=5 // pred_fallthru
      _
    %p168 = scmp.le.s32.totalorder 1, %s9
    %p169 = scmp.lt.s32.totalorder %s9, 8
    %p170 = pnand %p168, %p169
    %p171 = pneg %p170
    // Predicated region
    $region29: #{fused_matmul.1} parent=5 // pred_check
      _
    $region30: #{fused_matmul.1} parent=5 // pred_check_branch
      %173 = sbr.rel (%p170) target = $region32
    $region31: #{fused_matmul.1} parent=5 // pred_region
      %s174 = ssub.s32 %s9, 1
      %s175 = smul.u32 448, %s18
      %p176 = scmp.lt.s32.totalorder %s175, 3135
      %s177 = scalar_select %p176, %s175, 3135
      %s178 = smul.addr %s177, 4
      %s179 = scalar_lea.vmem %s0, %s178
      %p180 = pneg %p47
      %p181 = pneg %p44
      %p182 = scmp.lt.s32.totalorder %s19, 0
      %s183 = scalar_select %p182, %s19, 0
      %s184 = smul.addr %s183, 4
      %s185 = scalar_lea.vmem %s1, %s184
      %p186 = pneg %p73
      %p187 = pneg %p70
      %p188 = scmp.lt.s32.totalorder %s19, 0
      %s189 = scalar_select %p188, %s19, 0
      %s190 = scalar_lea.vmem %s2, %s189
      %p191 = pneg %p99
      %p192 = pneg %p96
      %p193 = pneg %p127
      %p194 = pneg %p124
      %s195 = smul.u32 448, %s18
      %p196 = scmp.lt.s32.totalorder %s195, 3135
      %s197 = scalar_select %p196, %s195, 3135
      %p198 = scmp.lt.s32.totalorder %s19, 0
      %s199 = scalar_select %p198, %s19, 0
      %s200 = sadd.s32 %s199, %s197
      %s201 = smul.addr %s200, 4
      %s202 = scalar_lea.vmem %s3, %s201
      %s203 = smul.u32 448, %s18
      %p204 = scmp.lt.s32.totalorder %s203, 3135
      %s205 = scalar_select %p204, %s203, 3135
      %s206 = smul.addr %s205, 4
      %s207 = scalar_lea.vmem %s0, %s206
      %s208 = smul.u32 448, %s18
      %p209 = scmp.lt.s32.totalorder %s19, 0
      %s210 = scalar_select %p209, %s19, 0
      %s211 = smul.addr %s210, 4
      %s212 = scalar_lea.vmem %s1, %s211
      %p213 = scmp.lt.s32.totalorder %s19, 0
      %s214 = scalar_select %p213, %s19, 0
      %s215 = scalar_lea.vmem %s2, %s214
      %s216 = smul.u32 448, %s18
      %p217 = scmp.lt.s32.totalorder %s216, 3135
      %s218 = scalar_select %p217, %s216, 3135
      %p219 = scmp.lt.s32.totalorder %s19, 0
      %s220 = scalar_select %p219, %s19, 0
      %s221 = sadd.s32 %s220, %s218
      %s222 = smul.addr %s221, 4
      %s223 = scalar_lea.vmem %s3, %s222
      %s224 = smul.u32 448, %s18
      %v226 = vld [vmem:[%s207] sm:$0xf]
      %v227 = vld [vmem:[%s207 + $0x4] sm:$0xf]
      %v228 = vld [vmem:[%s207 + $0x8] sm:$0xf]
      %v229 = vld [vmem:[%s207 + $0xc] sm:$0xf]
      %v230 = vld [vmem:[%s207 + $0x10] sm:$0xf]
      %v231 = vld [vmem:[%s207 + $0x14] sm:$0xf]
      %v232 = vld [vmem:[%s207 + $0x18] sm:$0xf]
      %v233 = vld [vmem:[%s207 + $0x1c] sm:$0xf]
      %v234 = vld [vmem:[%s207 + $0x20] sm:$0xf]
      %v235 = vld [vmem:[%s207 + $0x24] sm:$0xf]
      %v236 = vld [vmem:[%s207 + $0x28] sm:$0xf]
      %v237 = vld [vmem:[%s207 + $0x2c] sm:$0xf]
      %v238 = vld [vmem:[%s207 + $0x30] sm:$0xf]
      %v239 = vld [vmem:[%s207 + $0x34] sm:$0xf]
      %v240 = vld [vmem:[%s207 + $0x38] sm:$0xf]
      %v241 = vld [vmem:[%s207 + $0x3c] sm:$0xf]
      %v242 = vld [vmem:[%s207 + $0x40] sm:$0xf]
      %v243 = vld [vmem:[%s207 + $0x44] sm:$0xf]
      %v244 = vld [vmem:[%s207 + $0x48] sm:$0xf]
      %v245 = vld [vmem:[%s207 + $0x4c] sm:$0xf]
      %v246 = vld [vmem:[%s207 + $0x50] sm:$0xf]
      %v247 = vld [vmem:[%s207 + $0x54] sm:$0xf]
      %v248 = vld [vmem:[%s207 + $0x58] sm:$0xf]
      %v249 = vld [vmem:[%s207 + $0x5c] sm:$0xf]
      %v250 = vld [vmem:[%s207 + $0x60] sm:$0xf]
      %v251 = vld [vmem:[%s207 + $0x64] sm:$0xf]
      %v252 = vld [vmem:[%s207 + $0x68] sm:$0xf]
      %v253 = vld [vmem:[%s207 + $0x6c] sm:$0xf]
      %v254 = vld [vmem:[%s207 + $0x70] sm:$0xf]
      %v255 = vld [vmem:[%s207 + $0x74] sm:$0xf]
      %v256 = vld [vmem:[%s207 + $0x78] sm:$0xf]
      %v257 = vld [vmem:[%s207 + $0x7c] sm:$0xf]
      %v258 = vld [vmem:[%s207 + $0x80] sm:$0xf]
      %v259 = vld [vmem:[%s207 + $0x84] sm:$0xf]
      %v260 = vld [vmem:[%s207 + $0x88] sm:$0xf]
      %v261 = vld [vmem:[%s207 + $0x8c] sm:$0xf]
      %v262 = vld [vmem:[%s207 + $0x90] sm:$0xf]
      %v263 = vld [vmem:[%s207 + $0x94] sm:$0xf]
      %v264 = vld [vmem:[%s207 + $0x98] sm:$0xf]
      %v265 = vld [vmem:[%s207 + $0x9c] sm:$0xf]
      %v266 = vld [vmem:[%s207 + $0xa0] sm:$0xf]
      %v267 = vld [vmem:[%s207 + $0xa4] sm:$0xf]
      %v268 = vld [vmem:[%s207 + $0xa8] sm:$0xf]
      %v269 = vld [vmem:[%s207 + $0xac] sm:$0xf]
      %v270 = vld [vmem:[%s207 + $0xb0] sm:$0xf]
      %v271 = vld [vmem:[%s207 + $0xb4] sm:$0xf]
      %v272 = vld [vmem:[%s207 + $0xb8] sm:$0xf]
      %v273 = vld [vmem:[%s207 + $0xbc] sm:$0xf]
      %v274 = vld [vmem:[%s207 + $0xc0] sm:$0xf]
      %v275 = vld [vmem:[%s207 + $0xc4] sm:$0xf]
      %v276 = vld [vmem:[%s207 + $0xc8] sm:$0xf]
      %v277 = vld [vmem:[%s207 + $0xcc] sm:$0xf]
      %v278 = vld [vmem:[%s207 + $0xd0] sm:$0xf]
      %v279 = vld [vmem:[%s207 + $0xd4] sm:$0xf]
      %v280 = vld [vmem:[%s207 + $0xd8] sm:$0xf]
      %v281 = vld [vmem:[%s207 + $0xdc] sm:$0xf]
      %v282 = vld [vmem:[%s207 + $0xe0] sm:$0xf]
      %v283 = vld [vmem:[%s207 + $0xe4] sm:$0xf]
      %v284 = vld [vmem:[%s207 + $0xe8] sm:$0xf]
      %v285 = vld [vmem:[%s207 + $0xec] sm:$0xf]
      %v286 = vld [vmem:[%s207 + $0xf0] sm:$0xf]
      %v287 = vld [vmem:[%s207 + $0xf4] sm:$0xf]
      %v288 = vld [vmem:[%s207 + $0xf8] sm:$0xf]
      %v289 = vld [vmem:[%s207 + $0xfc] sm:$0xf]
      %v290 = vld [vmem:[%s207 + $0x100] sm:$0xf]
      %v291 = vld [vmem:[%s207 + $0x104] sm:$0xf]
      %v292 = vld [vmem:[%s207 + $0x108] sm:$0xf]
      %v293 = vld [vmem:[%s207 + $0x10c] sm:$0xf]
      %v294 = vld [vmem:[%s207 + $0x110] sm:$0xf]
      %v295 = vld [vmem:[%s207 + $0x114] sm:$0xf]
      %v296 = vld [vmem:[%s207 + $0x118] sm:$0xf]
      %v297 = vld [vmem:[%s207 + $0x11c] sm:$0xf]
      %v298 = vld [vmem:[%s207 + $0x120] sm:$0xf]
      %v299 = vld [vmem:[%s207 + $0x124] sm:$0xf]
      %v300 = vld [vmem:[%s207 + $0x128] sm:$0xf]
      %v301 = vld [vmem:[%s207 + $0x12c] sm:$0xf]
      %v302 = vld [vmem:[%s207 + $0x130] sm:$0xf]
      %v303 = vld [vmem:[%s207 + $0x134] sm:$0xf]
      %v304 = vld [vmem:[%s207 + $0x138] sm:$0xf]
      %v305 = vld [vmem:[%s207 + $0x13c] sm:$0xf]
      %v306 = vld [vmem:[%s207 + $0x140] sm:$0xf]
      %v307 = vld [vmem:[%s207 + $0x144] sm:$0xf]
      %v308 = vld [vmem:[%s207 + $0x148] sm:$0xf]
      %v309 = vld [vmem:[%s207 + $0x14c] sm:$0xf]
      %v310 = vld [vmem:[%s207 + $0x150] sm:$0xf]
      %v311 = vld [vmem:[%s207 + $0x154] sm:$0xf]
      %v312 = vld [vmem:[%s207 + $0x158] sm:$0xf]
      %v313 = vld [vmem:[%s207 + $0x15c] sm:$0xf]
      %v314 = vld [vmem:[%s207 + $0x160] sm:$0xf]
      %v315 = vld [vmem:[%s207 + $0x164] sm:$0xf]
      %v316 = vld [vmem:[%s207 + $0x168] sm:$0xf]
      %v317 = vld [vmem:[%s207 + $0x16c] sm:$0xf]
      %v318 = vld [vmem:[%s207 + $0x170] sm:$0xf]
      %v319 = vld [vmem:[%s207 + $0x174] sm:$0xf]
      %v320 = vld [vmem:[%s207 + $0x178] sm:$0xf]
      %v321 = vld [vmem:[%s207 + $0x17c] sm:$0xf]
      %v322 = vld [vmem:[%s207 + $0x180] sm:$0xf]
      %v323 = vld [vmem:[%s207 + $0x184] sm:$0xf]
      %v324 = vld [vmem:[%s207 + $0x188] sm:$0xf]
      %v325 = vld [vmem:[%s207 + $0x18c] sm:$0xf]
      %v326 = vld [vmem:[%s207 + $0x190] sm:$0xf]
      %v327 = vld [vmem:[%s207 + $0x194] sm:$0xf]
      %v328 = vld [vmem:[%s207 + $0x198] sm:$0xf]
      %v329 = vld [vmem:[%s207 + $0x19c] sm:$0xf]
      %v330 = vld [vmem:[%s207 + $0x1a0] sm:$0xf]
      %v331 = vld [vmem:[%s207 + $0x1a4] sm:$0xf]
      %v332 = vld [vmem:[%s207 + $0x1a8] sm:$0xf]
      %v333 = vld [vmem:[%s207 + $0x1ac] sm:$0xf]
      %v334 = vld [vmem:[%s207 + $0x1b0] sm:$0xf]
      %v335 = vld [vmem:[%s207 + $0x1b4] sm:$0xf]
      %v336 = vld [vmem:[%s207 + $0x1b8] sm:$0xf]
      %v337 = vld [vmem:[%s207 + $0x1bc] sm:$0xf]
      %v338 = vld [vmem:[%s207 + $0x1c0] sm:$0xf]
      %v339 = vld [vmem:[%s207 + $0x1c4] sm:$0xf]
      %v340 = vld [vmem:[%s207 + $0x1c8] sm:$0xf]
      %v341 = vld [vmem:[%s207 + $0x1cc] sm:$0xf]
      %v342 = vld [vmem:[%s207 + $0x1d0] sm:$0xf]
      %v343 = vld [vmem:[%s207 + $0x1d4] sm:$0xf]
      %v344 = vld [vmem:[%s207 + $0x1d8] sm:$0xf]
      %v345 = vld [vmem:[%s207 + $0x1dc] sm:$0xf]
      %v346 = vld [vmem:[%s207 + $0x1e0] sm:$0xf]
      %v347 = vld [vmem:[%s207 + $0x1e4] sm:$0xf]
      %v348 = vld [vmem:[%s207 + $0x1e8] sm:$0xf]
      %v349 = vld [vmem:[%s207 + $0x1ec] sm:$0xf]
      %v350 = vld [vmem:[%s207 + $0x1f0] sm:$0xf]
      %v351 = vld [vmem:[%s207 + $0x1f4] sm:$0xf]
      %v352 = vld [vmem:[%s207 + $0x1f8] sm:$0xf]
      %v353 = vld [vmem:[%s207 + $0x1fc] sm:$0xf]
      %v354 = vld [vmem:[%s207 + $0x200] sm:$0xf]
      %v355 = vld [vmem:[%s207 + $0x204] sm:$0xf]
      %v356 = vld [vmem:[%s207 + $0x208] sm:$0xf]
      %v357 = vld [vmem:[%s207 + $0x20c] sm:$0xf]
      %v358 = vld [vmem:[%s207 + $0x210] sm:$0xf]
      %v359 = vld [vmem:[%s207 + $0x214] sm:$0xf]
      %v360 = vld [vmem:[%s207 + $0x218] sm:$0xf]
      %v361 = vld [vmem:[%s207 + $0x21c] sm:$0xf]
      %v362 = vld [vmem:[%s207 + $0x220] sm:$0xf]
      %v363 = vld [vmem:[%s207 + $0x224] sm:$0xf]
      %v364 = vld [vmem:[%s207 + $0x228] sm:$0xf]
      %v365 = vld [vmem:[%s207 + $0x22c] sm:$0xf]
      %v366 = vld [vmem:[%s207 + $0x230] sm:$0xf]
      %v367 = vld [vmem:[%s207 + $0x234] sm:$0xf]
      %v368 = vld [vmem:[%s207 + $0x238] sm:$0xf]
      %v369 = vld [vmem:[%s207 + $0x23c] sm:$0xf]
      %v370 = vld [vmem:[%s207 + $0x240] sm:$0xf]
      %v371 = vld [vmem:[%s207 + $0x244] sm:$0xf]
      %v372 = vld [vmem:[%s207 + $0x248] sm:$0xf]
      %v373 = vld [vmem:[%s207 + $0x24c] sm:$0xf]
      %v374 = vld [vmem:[%s207 + $0x250] sm:$0xf]
      %v375 = vld [vmem:[%s207 + $0x254] sm:$0xf]
      %v376 = vld [vmem:[%s207 + $0x258] sm:$0xf]
      %v377 = vld [vmem:[%s207 + $0x25c] sm:$0xf]
      %v378 = vld [vmem:[%s207 + $0x260] sm:$0xf]
      %v379 = vld [vmem:[%s207 + $0x264] sm:$0xf]
      %v380 = vld [vmem:[%s207 + $0x268] sm:$0xf]
      %v381 = vld [vmem:[%s207 + $0x26c] sm:$0xf]
      %v382 = vld [vmem:[%s207 + $0x270] sm:$0xf]
      %v383 = vld [vmem:[%s207 + $0x274] sm:$0xf]
      %v384 = vld [vmem:[%s207 + $0x278] sm:$0xf]
      %v385 = vld [vmem:[%s207 + $0x27c] sm:$0xf]
      %v386 = vld [vmem:[%s207 + $0x280] sm:$0xf]
      %v387 = vld [vmem:[%s207 + $0x284] sm:$0xf]
      %v388 = vld [vmem:[%s207 + $0x288] sm:$0xf]
      %v389 = vld [vmem:[%s207 + $0x28c] sm:$0xf]
      %v390 = vld [vmem:[%s207 + $0x290] sm:$0xf]
      %v391 = vld [vmem:[%s207 + $0x294] sm:$0xf]
      %v392 = vld [vmem:[%s207 + $0x298] sm:$0xf]
      %v393 = vld [vmem:[%s207 + $0x29c] sm:$0xf]
      %v394 = vld [vmem:[%s207 + $0x2a0] sm:$0xf]
      %v395 = vld [vmem:[%s207 + $0x2a4] sm:$0xf]
      %v396 = vld [vmem:[%s207 + $0x2a8] sm:$0xf]
      %v397 = vld [vmem:[%s207 + $0x2ac] sm:$0xf]
      %v398 = vld [vmem:[%s207 + $0x2b0] sm:$0xf]
      %v399 = vld [vmem:[%s207 + $0x2b4] sm:$0xf]
      %v400 = vld [vmem:[%s207 + $0x2b8] sm:$0xf]
      %v401 = vld [vmem:[%s207 + $0x2bc] sm:$0xf]
      %v402 = vld [vmem:[%s207 + $0x2c0] sm:$0xf]
      %v403 = vld [vmem:[%s207 + $0x2c4] sm:$0xf]
      %v404 = vld [vmem:[%s207 + $0x2c8] sm:$0xf]
      %v405 = vld [vmem:[%s207 + $0x2cc] sm:$0xf]
      %v406 = vld [vmem:[%s207 + $0x2d0] sm:$0xf]
      %v407 = vld [vmem:[%s207 + $0x2d4] sm:$0xf]
      %v408 = vld [vmem:[%s207 + $0x2d8] sm:$0xf]
      %v409 = vld [vmem:[%s207 + $0x2dc] sm:$0xf]
      %v410 = vld [vmem:[%s207 + $0x2e0] sm:$0xf]
      %v411 = vld [vmem:[%s207 + $0x2e4] sm:$0xf]
      %v412 = vld [vmem:[%s207 + $0x2e8] sm:$0xf]
      %v413 = vld [vmem:[%s207 + $0x2ec] sm:$0xf]
      %v414 = vld [vmem:[%s207 + $0x2f0] sm:$0xf]
      %v415 = vld [vmem:[%s207 + $0x2f4] sm:$0xf]
      %v416 = vld [vmem:[%s207 + $0x2f8] sm:$0xf]
      %v417 = vld [vmem:[%s207 + $0x2fc] sm:$0xf]
      %v418 = vld [vmem:[%s207 + $0x300] sm:$0xf]
      %v419 = vld [vmem:[%s207 + $0x304] sm:$0xf]
      %v420 = vld [vmem:[%s207 + $0x308] sm:$0xf]
      %v421 = vld [vmem:[%s207 + $0x30c] sm:$0xf]
      %v422 = vld [vmem:[%s207 + $0x310] sm:$0xf]
      %v423 = vld [vmem:[%s207 + $0x314] sm:$0xf]
      %v424 = vld [vmem:[%s207 + $0x318] sm:$0xf]
      %v425 = vld [vmem:[%s207 + $0x31c] sm:$0xf]
      %v426 = vld [vmem:[%s207 + $0x320] sm:$0xf]
      %v427 = vld [vmem:[%s207 + $0x324] sm:$0xf]
      %v428 = vld [vmem:[%s207 + $0x328] sm:$0xf]
      %v429 = vld [vmem:[%s207 + $0x32c] sm:$0xf]
      %v430 = vld [vmem:[%s207 + $0x330] sm:$0xf]
      %v431 = vld [vmem:[%s207 + $0x334] sm:$0xf]
      %v432 = vld [vmem:[%s207 + $0x338] sm:$0xf]
      %v433 = vld [vmem:[%s207 + $0x33c] sm:$0xf]
      %v434 = vld [vmem:[%s207 + $0x340] sm:$0xf]
      %v435 = vld [vmem:[%s207 + $0x344] sm:$0xf]
      %v436 = vld [vmem:[%s207 + $0x348] sm:$0xf]
      %v437 = vld [vmem:[%s207 + $0x34c] sm:$0xf]
      %v438 = vld [vmem:[%s207 + $0x350] sm:$0xf]
      %v439 = vld [vmem:[%s207 + $0x354] sm:$0xf]
      %v440 = vld [vmem:[%s207 + $0x358] sm:$0xf]
      %v441 = vld [vmem:[%s207 + $0x35c] sm:$0xf]
      %v442 = vld [vmem:[%s207 + $0x360] sm:$0xf]
      %v443 = vld [vmem:[%s207 + $0x364] sm:$0xf]
      %v444 = vld [vmem:[%s207 + $0x368] sm:$0xf]
      %v445 = vld [vmem:[%s207 + $0x36c] sm:$0xf]
      %v446 = vld [vmem:[%s207 + $0x370] sm:$0xf]
      %v447 = vld [vmem:[%s207 + $0x374] sm:$0xf]
      %v448 = vld [vmem:[%s207 + $0x378] sm:$0xf]
      %v449 = vld [vmem:[%s207 + $0x37c] sm:$0xf]
      %v450 = vld [vmem:[%s207 + $0x380] sm:$0xf]
      %v451 = vld [vmem:[%s207 + $0x384] sm:$0xf]
      %v452 = vld [vmem:[%s207 + $0x388] sm:$0xf]
      %v453 = vld [vmem:[%s207 + $0x38c] sm:$0xf]
      %v454 = vld [vmem:[%s207 + $0x390] sm:$0xf]
      %v455 = vld [vmem:[%s207 + $0x394] sm:$0xf]
      %v456 = vld [vmem:[%s207 + $0x398] sm:$0xf]
      %v457 = vld [vmem:[%s207 + $0x39c] sm:$0xf]
      %v458 = vld [vmem:[%s207 + $0x3a0] sm:$0xf]
      %v459 = vld [vmem:[%s207 + $0x3a4] sm:$0xf]
      %v460 = vld [vmem:[%s207 + $0x3a8] sm:$0xf]
      %v461 = vld [vmem:[%s207 + $0x3ac] sm:$0xf]
      %v462 = vld [vmem:[%s207 + $0x3b0] sm:$0xf]
      %v463 = vld [vmem:[%s207 + $0x3b4] sm:$0xf]
      %v464 = vld [vmem:[%s207 + $0x3b8] sm:$0xf]
      %v465 = vld [vmem:[%s207 + $0x3bc] sm:$0xf]
      %v466 = vld [vmem:[%s207 + $0x3c0] sm:$0xf]
      %v467 = vld [vmem:[%s207 + $0x3c4] sm:$0xf]
      %v468 = vld [vmem:[%s207 + $0x3c8] sm:$0xf]
      %v469 = vld [vmem:[%s207 + $0x3cc] sm:$0xf]
      %v470 = vld [vmem:[%s207 + $0x3d0] sm:$0xf]
      %v471 = vld [vmem:[%s207 + $0x3d4] sm:$0xf]
      %v472 = vld [vmem:[%s207 + $0x3d8] sm:$0xf]
      %v473 = vld [vmem:[%s207 + $0x3dc] sm:$0xf]
      %v474 = vld [vmem:[%s207 + $0x3e0] sm:$0xf]
      %v475 = vld [vmem:[%s207 + $0x3e4] sm:$0xf]
      %v476 = vld [vmem:[%s207 + $0x3e8] sm:$0xf]
      %v477 = vld [vmem:[%s207 + $0x3ec] sm:$0xf]
      %v478 = vld [vmem:[%s207 + $0x3f0] sm:$0xf]
      %v479 = vld [vmem:[%s207 + $0x3f4] sm:$0xf]
      %v480 = vld [vmem:[%s207 + $0x3f8] sm:$0xf]
      %v481 = vld [vmem:[%s207 + $0x3fc] sm:$0xf]
      %v482 = vld [vmem:[%s207 + $0x400] sm:$0xf]
      %v483 = vld [vmem:[%s207 + $0x404] sm:$0xf]
      %v484 = vld [vmem:[%s207 + $0x408] sm:$0xf]
      %v485 = vld [vmem:[%s207 + $0x40c] sm:$0xf]
      %v486 = vld [vmem:[%s207 + $0x410] sm:$0xf]
      %v487 = vld [vmem:[%s207 + $0x414] sm:$0xf]
      %v488 = vld [vmem:[%s207 + $0x418] sm:$0xf]
      %v489 = vld [vmem:[%s207 + $0x41c] sm:$0xf]
      %v490 = vld [vmem:[%s207 + $0x420] sm:$0xf]
      %v491 = vld [vmem:[%s207 + $0x424] sm:$0xf]
      %v492 = vld [vmem:[%s207 + $0x428] sm:$0xf]
      %v493 = vld [vmem:[%s207 + $0x42c] sm:$0xf]
      %v494 = vld [vmem:[%s207 + $0x430] sm:$0xf]
      %v495 = vld [vmem:[%s207 + $0x434] sm:$0xf]
      %v496 = vld [vmem:[%s207 + $0x438] sm:$0xf]
      %v497 = vld [vmem:[%s207 + $0x43c] sm:$0xf]
      %v498 = vld [vmem:[%s207 + $0x440] sm:$0xf]
      %v499 = vld [vmem:[%s207 + $0x444] sm:$0xf]
      %v500 = vld [vmem:[%s207 + $0x448] sm:$0xf]
      %v501 = vld [vmem:[%s207 + $0x44c] sm:$0xf]
      %v502 = vld [vmem:[%s207 + $0x450] sm:$0xf]
      %v503 = vld [vmem:[%s207 + $0x454] sm:$0xf]
      %v504 = vld [vmem:[%s207 + $0x458] sm:$0xf]
      %v505 = vld [vmem:[%s207 + $0x45c] sm:$0xf]
      %v506 = vld [vmem:[%s207 + $0x460] sm:$0xf]
      %v507 = vld [vmem:[%s207 + $0x464] sm:$0xf]
      %v508 = vld [vmem:[%s207 + $0x468] sm:$0xf]
      %v509 = vld [vmem:[%s207 + $0x46c] sm:$0xf]
      %v510 = vld [vmem:[%s207 + $0x470] sm:$0xf]
      %v511 = vld [vmem:[%s207 + $0x474] sm:$0xf]
      %v512 = vld [vmem:[%s207 + $0x478] sm:$0xf]
      %v513 = vld [vmem:[%s207 + $0x47c] sm:$0xf]
      %v514 = vld [vmem:[%s207 + $0x480] sm:$0xf]
      %v515 = vld [vmem:[%s207 + $0x484] sm:$0xf]
      %v516 = vld [vmem:[%s207 + $0x488] sm:$0xf]
      %v517 = vld [vmem:[%s207 + $0x48c] sm:$0xf]
      %v518 = vld [vmem:[%s207 + $0x490] sm:$0xf]
      %v519 = vld [vmem:[%s207 + $0x494] sm:$0xf]
      %v520 = vld [vmem:[%s207 + $0x498] sm:$0xf]
      %v521 = vld [vmem:[%s207 + $0x49c] sm:$0xf]
      %v522 = vld [vmem:[%s207 + $0x4a0] sm:$0xf]
      %v523 = vld [vmem:[%s207 + $0x4a4] sm:$0xf]
      %v524 = vld [vmem:[%s207 + $0x4a8] sm:$0xf]
      %v525 = vld [vmem:[%s207 + $0x4ac] sm:$0xf]
      %v526 = vld [vmem:[%s207 + $0x4b0] sm:$0xf]
      %v527 = vld [vmem:[%s207 + $0x4b4] sm:$0xf]
      %v528 = vld [vmem:[%s207 + $0x4b8] sm:$0xf]
      %v529 = vld [vmem:[%s207 + $0x4bc] sm:$0xf]
      %v530 = vld [vmem:[%s207 + $0x4c0] sm:$0xf]
      %v531 = vld [vmem:[%s207 + $0x4c4] sm:$0xf]
      %v532 = vld [vmem:[%s207 + $0x4c8] sm:$0xf]
      %v533 = vld [vmem:[%s207 + $0x4cc] sm:$0xf]
      %v534 = vld [vmem:[%s207 + $0x4d0] sm:$0xf]
      %v535 = vld [vmem:[%s207 + $0x4d4] sm:$0xf]
      %v536 = vld [vmem:[%s207 + $0x4d8] sm:$0xf]
      %v537 = vld [vmem:[%s207 + $0x4dc] sm:$0xf]
      %v538 = vld [vmem:[%s207 + $0x4e0] sm:$0xf]
      %v539 = vld [vmem:[%s207 + $0x4e4] sm:$0xf]
      %v540 = vld [vmem:[%s207 + $0x4e8] sm:$0xf]
      %v541 = vld [vmem:[%s207 + $0x4ec] sm:$0xf]
      %v542 = vld [vmem:[%s207 + $0x4f0] sm:$0xf]
      %v543 = vld [vmem:[%s207 + $0x4f4] sm:$0xf]
      %v544 = vld [vmem:[%s207 + $0x4f8] sm:$0xf]
      %v545 = vld [vmem:[%s207 + $0x4fc] sm:$0xf]
      %v546 = vld [vmem:[%s207 + $0x500] sm:$0xf]
      %v547 = vld [vmem:[%s207 + $0x504] sm:$0xf]
      %v548 = vld [vmem:[%s207 + $0x508] sm:$0xf]
      %v549 = vld [vmem:[%s207 + $0x50c] sm:$0xf]
      %v550 = vld [vmem:[%s207 + $0x510] sm:$0xf]
      %v551 = vld [vmem:[%s207 + $0x514] sm:$0xf]
      %v552 = vld [vmem:[%s207 + $0x518] sm:$0xf]
      %v553 = vld [vmem:[%s207 + $0x51c] sm:$0xf]
      %v554 = vld [vmem:[%s207 + $0x520] sm:$0xf]
      %v555 = vld [vmem:[%s207 + $0x524] sm:$0xf]
      %v556 = vld [vmem:[%s207 + $0x528] sm:$0xf]
      %v557 = vld [vmem:[%s207 + $0x52c] sm:$0xf]
      %v558 = vld [vmem:[%s207 + $0x530] sm:$0xf]
      %v559 = vld [vmem:[%s207 + $0x534] sm:$0xf]
      %v560 = vld [vmem:[%s207 + $0x538] sm:$0xf]
      %v561 = vld [vmem:[%s207 + $0x53c] sm:$0xf]
      %v562 = vld [vmem:[%s207 + $0x540] sm:$0xf]
      %v563 = vld [vmem:[%s207 + $0x544] sm:$0xf]
      %v564 = vld [vmem:[%s207 + $0x548] sm:$0xf]
      %v565 = vld [vmem:[%s207 + $0x54c] sm:$0xf]
      %v566 = vld [vmem:[%s207 + $0x550] sm:$0xf]
      %v567 = vld [vmem:[%s207 + $0x554] sm:$0xf]
      %v568 = vld [vmem:[%s207 + $0x558] sm:$0xf]
      %v569 = vld [vmem:[%s207 + $0x55c] sm:$0xf]
      %v570 = vld [vmem:[%s207 + $0x560] sm:$0xf]
      %v571 = vld [vmem:[%s207 + $0x564] sm:$0xf]
      %v572 = vld [vmem:[%s207 + $0x568] sm:$0xf]
      %v573 = vld [vmem:[%s207 + $0x56c] sm:$0xf]
      %v574 = vld [vmem:[%s207 + $0x570] sm:$0xf]
      %v575 = vld [vmem:[%s207 + $0x574] sm:$0xf]
      %v576 = vld [vmem:[%s207 + $0x578] sm:$0xf]
      %v577 = vld [vmem:[%s207 + $0x57c] sm:$0xf]
      %v578 = vld [vmem:[%s207 + $0x580] sm:$0xf]
      %v579 = vld [vmem:[%s207 + $0x584] sm:$0xf]
      %v580 = vld [vmem:[%s207 + $0x588] sm:$0xf]
      %v581 = vld [vmem:[%s207 + $0x58c] sm:$0xf]
      %v582 = vld [vmem:[%s207 + $0x590] sm:$0xf]
      %v583 = vld [vmem:[%s207 + $0x594] sm:$0xf]
      %v584 = vld [vmem:[%s207 + $0x598] sm:$0xf]
      %v585 = vld [vmem:[%s207 + $0x59c] sm:$0xf]
      %v586 = vld [vmem:[%s207 + $0x5a0] sm:$0xf]
      %v587 = vld [vmem:[%s207 + $0x5a4] sm:$0xf]
      %v588 = vld [vmem:[%s207 + $0x5a8] sm:$0xf]
      %v589 = vld [vmem:[%s207 + $0x5ac] sm:$0xf]
      %v590 = vld [vmem:[%s207 + $0x5b0] sm:$0xf]
      %v591 = vld [vmem:[%s207 + $0x5b4] sm:$0xf]
      %v592 = vld [vmem:[%s207 + $0x5b8] sm:$0xf]
      %v593 = vld [vmem:[%s207 + $0x5bc] sm:$0xf]
      %v594 = vld [vmem:[%s207 + $0x5c0] sm:$0xf]
      %v595 = vld [vmem:[%s207 + $0x5c4] sm:$0xf]
      %v596 = vld [vmem:[%s207 + $0x5c8] sm:$0xf]
      %v597 = vld [vmem:[%s207 + $0x5cc] sm:$0xf]
      %v598 = vld [vmem:[%s207 + $0x5d0] sm:$0xf]
      %v599 = vld [vmem:[%s207 + $0x5d4] sm:$0xf]
      %v600 = vld [vmem:[%s207 + $0x5d8] sm:$0xf]
      %v601 = vld [vmem:[%s207 + $0x5dc] sm:$0xf]
      %v602 = vld [vmem:[%s207 + $0x5e0] sm:$0xf]
      %v603 = vld [vmem:[%s207 + $0x5e4] sm:$0xf]
      %v604 = vld [vmem:[%s207 + $0x5e8] sm:$0xf]
      %v605 = vld [vmem:[%s207 + $0x5ec] sm:$0xf]
      %v606 = vld [vmem:[%s207 + $0x5f0] sm:$0xf]
      %v607 = vld [vmem:[%s207 + $0x5f4] sm:$0xf]
      %v608 = vld [vmem:[%s207 + $0x5f8] sm:$0xf]
      %v609 = vld [vmem:[%s207 + $0x5fc] sm:$0xf]
      %v610 = vld [vmem:[%s207 + $0x600] sm:$0xf]
      %v611 = vld [vmem:[%s207 + $0x604] sm:$0xf]
      %v612 = vld [vmem:[%s207 + $0x608] sm:$0xf]
      %v613 = vld [vmem:[%s207 + $0x60c] sm:$0xf]
      %v614 = vld [vmem:[%s207 + $0x610] sm:$0xf]
      %v615 = vld [vmem:[%s207 + $0x614] sm:$0xf]
      %v616 = vld [vmem:[%s207 + $0x618] sm:$0xf]
      %v617 = vld [vmem:[%s207 + $0x61c] sm:$0xf]
      %v618 = vld [vmem:[%s207 + $0x620] sm:$0xf]
      %v619 = vld [vmem:[%s207 + $0x624] sm:$0xf]
      %v620 = vld [vmem:[%s207 + $0x628] sm:$0xf]
      %v621 = vld [vmem:[%s207 + $0x62c] sm:$0xf]
      %v622 = vld [vmem:[%s207 + $0x630] sm:$0xf]
      %v623 = vld [vmem:[%s207 + $0x634] sm:$0xf]
      %v624 = vld [vmem:[%s207 + $0x638] sm:$0xf]
      %v625 = vld [vmem:[%s207 + $0x63c] sm:$0xf]
      %v626 = vld [vmem:[%s207 + $0x640] sm:$0xf]
      %v627 = vld [vmem:[%s207 + $0x644] sm:$0xf]
      %v628 = vld [vmem:[%s207 + $0x648] sm:$0xf]
      %v629 = vld [vmem:[%s207 + $0x64c] sm:$0xf]
      %v630 = vld [vmem:[%s207 + $0x650] sm:$0xf]
      %v631 = vld [vmem:[%s207 + $0x654] sm:$0xf]
      %v632 = vld [vmem:[%s207 + $0x658] sm:$0xf]
      %v633 = vld [vmem:[%s207 + $0x65c] sm:$0xf]
      %v634 = vld [vmem:[%s207 + $0x660] sm:$0xf]
      %v635 = vld [vmem:[%s207 + $0x664] sm:$0xf]
      %v636 = vld [vmem:[%s207 + $0x668] sm:$0xf]
      %v637 = vld [vmem:[%s207 + $0x66c] sm:$0xf]
      %v638 = vld [vmem:[%s207 + $0x670] sm:$0xf]
      %v639 = vld [vmem:[%s207 + $0x674] sm:$0xf]
      %v640 = vld [vmem:[%s207 + $0x678] sm:$0xf]
      %v641 = vld [vmem:[%s207 + $0x67c] sm:$0xf]
      %v642 = vld [vmem:[%s207 + $0x680] sm:$0xf]
      %v643 = vld [vmem:[%s207 + $0x684] sm:$0xf]
      %v644 = vld [vmem:[%s207 + $0x688] sm:$0xf]
      %v645 = vld [vmem:[%s207 + $0x68c] sm:$0xf]
      %v646 = vld [vmem:[%s207 + $0x690] sm:$0xf]
      %v647 = vld [vmem:[%s207 + $0x694] sm:$0xf]
      %v648 = vld [vmem:[%s207 + $0x698] sm:$0xf]
      %v649 = vld [vmem:[%s207 + $0x69c] sm:$0xf]
      %v650 = vld [vmem:[%s207 + $0x6a0] sm:$0xf]
      %v651 = vld [vmem:[%s207 + $0x6a4] sm:$0xf]
      %v652 = vld [vmem:[%s207 + $0x6a8] sm:$0xf]
      %v653 = vld [vmem:[%s207 + $0x6ac] sm:$0xf]
      %v654 = vld [vmem:[%s207 + $0x6b0] sm:$0xf]
      %v655 = vld [vmem:[%s207 + $0x6b4] sm:$0xf]
      %v656 = vld [vmem:[%s207 + $0x6b8] sm:$0xf]
      %v657 = vld [vmem:[%s207 + $0x6bc] sm:$0xf]
      %v658 = vld [vmem:[%s207 + $0x6c0] sm:$0xf]
      %v659 = vld [vmem:[%s207 + $0x6c4] sm:$0xf]
      %v660 = vld [vmem:[%s207 + $0x6c8] sm:$0xf]
      %v661 = vld [vmem:[%s207 + $0x6cc] sm:$0xf]
      %v662 = vld [vmem:[%s207 + $0x6d0] sm:$0xf]
      %v663 = vld [vmem:[%s207 + $0x6d4] sm:$0xf]
      %v664 = vld [vmem:[%s207 + $0x6d8] sm:$0xf]
      %v665 = vld [vmem:[%s207 + $0x6dc] sm:$0xf]
      %v666 = vld [vmem:[%s207 + $0x6e0] sm:$0xf]
      %v667 = vld [vmem:[%s207 + $0x6e4] sm:$0xf]
      %v668 = vld [vmem:[%s207 + $0x6e8] sm:$0xf]
      %v669 = vld [vmem:[%s207 + $0x6ec] sm:$0xf]
      %v670 = vld [vmem:[%s207 + $0x6f0] sm:$0xf]
      %v671 = vld [vmem:[%s207 + $0x6f4] sm:$0xf]
      %v672 = vld [vmem:[%s207 + $0x6f8] sm:$0xf]
      %v673 = vld [vmem:[%s207 + $0x6fc] sm:$0xf]
      %v674 = vld [vmem:[%s212] sm:$0xf]
      %v675 = vld [vmem:[%s212 + $0x4] sm:$0xf]
      %v676 = vld [vmem:[%s212 + $0x8] sm:$0xf]
      %v677 = vld [vmem:[%s212 + $0xc] sm:$0xf]
      %v678 = vld [vmem:[%s212 + $0x10] sm:$0xf]
      %v679 = vld [vmem:[%s212 + $0x14] sm:$0xf]
      %v680 = vld [vmem:[%s212 + $0x18] sm:$0xf]
      %v681 = vld [vmem:[%s212 + $0x1c] sm:$0xf]
      %v682 = vld [vmem:[%s212 + $0x20] sm:$0xf]
      %v683 = vld [vmem:[%s212 + $0x24] sm:$0xf]
      %v684 = vld [vmem:[%s212 + $0x28] sm:$0x1]
      %v685 = vld [vmem:[%s215] sm:$0x1]
      %v687 = vlaneseq
      %v688 = vshrl.u32 %v687, 7
      %v689 = vsub.s32 0, %v688
      %v690 = vrot.slane %v685, %v689
      %v1140 = vunpack.c.l.b16 %v226
      %v1141 = vunpack.c.l.b16 %v227
      %v1142 = vunpack.c.l.b16 %v228
      %v1143 = vunpack.c.l.b16 %v229
      %v1144 = vunpack.c.l.b16 %v230
      %v1145 = vunpack.c.l.b16 %v231
      %v1146 = vunpack.c.l.b16 %v232
      %v1147 = vunpack.c.l.b16 %v233
      %v1148 = vunpack.c.l.b16 %v234
      %v1149 = vunpack.c.l.b16 %v235
      %v1150 = vunpack.c.l.b16 %v236
      %v1151 = vunpack.c.l.b16 %v237
      %v1152 = vunpack.c.l.b16 %v238
      %v1153 = vunpack.c.l.b16 %v239
      %v1154 = vunpack.c.l.b16 %v240
      %v1155 = vunpack.c.l.b16 %v241
      %v1156 = vunpack.c.l.b16 %v242
      %v1157 = vunpack.c.l.b16 %v243
      %v1158 = vunpack.c.l.b16 %v244
      %v1159 = vunpack.c.l.b16 %v245
      %v1160 = vunpack.c.l.b16 %v246
      %v1161 = vunpack.c.l.b16 %v247
      %v1162 = vunpack.c.l.b16 %v248
      %v1163 = vunpack.c.l.b16 %v249
      %v1164 = vunpack.c.l.b16 %v250
      %v1165 = vunpack.c.l.b16 %v251
      %v1166 = vunpack.c.l.b16 %v252
      %v1167 = vunpack.c.l.b16 %v253
      %v1168 = vunpack.c.l.b16 %v254
      %v1169 = vunpack.c.l.b16 %v255
      %v1170 = vunpack.c.l.b16 %v256
      %v1171 = vunpack.c.l.b16 %v257
      %v1172 = vunpack.c.l.b16 %v258
      %v1173 = vunpack.c.l.b16 %v259
      %v1174 = vunpack.c.l.b16 %v260
      %v1175 = vunpack.c.l.b16 %v261
      %v1176 = vunpack.c.l.b16 %v262
      %v1177 = vunpack.c.l.b16 %v263
      %v1178 = vunpack.c.l.b16 %v264
      %v1179 = vunpack.c.l.b16 %v265
      %v1180 = vunpack.c.l.b16 %v266
      %v1181 = vunpack.c.l.b16 %v267
      %v1182 = vunpack.c.l.b16 %v268
      %v1183 = vunpack.c.l.b16 %v269
      %v1184 = vunpack.c.l.b16 %v270
      %v1185 = vunpack.c.l.b16 %v271
      %v1186 = vunpack.c.l.b16 %v272
      %v1187 = vunpack.c.l.b16 %v273
      %v1188 = vunpack.c.l.b16 %v274
      %v1189 = vunpack.c.l.b16 %v275
      %v1190 = vunpack.c.l.b16 %v276
      %v1191 = vunpack.c.l.b16 %v277
      %v1192 = vunpack.c.l.b16 %v278
      %v1193 = vunpack.c.l.b16 %v279
      %v1194 = vunpack.c.l.b16 %v280
      %v1195 = vunpack.c.l.b16 %v281
      %v1196 = vunpack.c.l.b16 %v282
      %v1197 = vunpack.c.l.b16 %v283
      %v1198 = vunpack.c.l.b16 %v284
      %v1199 = vunpack.c.l.b16 %v285
      %v1200 = vunpack.c.l.b16 %v286
      %v1201 = vunpack.c.l.b16 %v287
      %v1202 = vunpack.c.l.b16 %v288
      %v1203 = vunpack.c.l.b16 %v289
      %v1204 = vunpack.c.l.b16 %v290
      %v1205 = vunpack.c.l.b16 %v291
      %v1206 = vunpack.c.l.b16 %v292
      %v1207 = vunpack.c.l.b16 %v293
      %v1208 = vunpack.c.l.b16 %v294
      %v1209 = vunpack.c.l.b16 %v295
      %v1210 = vunpack.c.l.b16 %v296
      %v1211 = vunpack.c.l.b16 %v297
      %v1212 = vunpack.c.l.b16 %v298
      %v1213 = vunpack.c.l.b16 %v299
      %v1214 = vunpack.c.l.b16 %v300
      %v1215 = vunpack.c.l.b16 %v301
      %v1216 = vunpack.c.l.b16 %v302
      %v1217 = vunpack.c.l.b16 %v303
      %v1218 = vunpack.c.l.b16 %v304
      %v1219 = vunpack.c.l.b16 %v305
      %v1220 = vunpack.c.l.b16 %v306
      %v1221 = vunpack.c.l.b16 %v307
      %v1222 = vunpack.c.l.b16 %v308
      %v1223 = vunpack.c.l.b16 %v309
      %v1224 = vunpack.c.l.b16 %v310
      %v1225 = vunpack.c.l.b16 %v311
      %v1226 = vunpack.c.l.b16 %v312
      %v1227 = vunpack.c.l.b16 %v313
      %v1228 = vunpack.c.l.b16 %v314
      %v1229 = vunpack.c.l.b16 %v315
      %v1230 = vunpack.c.l.b16 %v316
      %v1231 = vunpack.c.l.b16 %v317
      %v1232 = vunpack.c.l.b16 %v318
      %v1233 = vunpack.c.l.b16 %v319
      %v1234 = vunpack.c.l.b16 %v320
      %v1235 = vunpack.c.l.b16 %v321
      %v1236 = vunpack.c.l.b16 %v322
      %v1237 = vunpack.c.l.b16 %v323
      %v1238 = vunpack.c.l.b16 %v324
      %v1239 = vunpack.c.l.b16 %v325
      %v1240 = vunpack.c.l.b16 %v326
      %v1241 = vunpack.c.l.b16 %v327
      %v1242 = vunpack.c.l.b16 %v328
      %v1243 = vunpack.c.l.b16 %v329
      %v1244 = vunpack.c.l.b16 %v330
      %v1245 = vunpack.c.l.b16 %v331
      %v1246 = vunpack.c.l.b16 %v332
      %v1247 = vunpack.c.l.b16 %v333
      %v1248 = vunpack.c.l.b16 %v334
      %v1249 = vunpack.c.l.b16 %v335
      %v1250 = vunpack.c.l.b16 %v336
      %v1251 = vunpack.c.l.b16 %v337
      %v1252 = vunpack.c.l.b16 %v338
      %v1253 = vunpack.c.l.b16 %v339
      %v1254 = vunpack.c.l.b16 %v340
      %v1255 = vunpack.c.l.b16 %v341
      %v1256 = vunpack.c.l.b16 %v342
      %v1257 = vunpack.c.l.b16 %v343
      %v1258 = vunpack.c.l.b16 %v344
      %v1259 = vunpack.c.l.b16 %v345
      %v1260 = vunpack.c.l.b16 %v346
      %v1261 = vunpack.c.l.b16 %v347
      %v1262 = vunpack.c.l.b16 %v348
      %v1263 = vunpack.c.l.b16 %v349
      %v1264 = vunpack.c.l.b16 %v350
      %v1265 = vunpack.c.l.b16 %v351
      %v1266 = vunpack.c.l.b16 %v352
      %v1267 = vunpack.c.l.b16 %v353
      %v1268 = vunpack.c.l.b16 %v354
      %v1269 = vunpack.c.l.b16 %v355
      %v1270 = vunpack.c.l.b16 %v356
      %v1271 = vunpack.c.l.b16 %v357
      %v1272 = vunpack.c.l.b16 %v358
      %v1273 = vunpack.c.l.b16 %v359
      %v1274 = vunpack.c.l.b16 %v360
      %v1275 = vunpack.c.l.b16 %v361
      %v1276 = vunpack.c.l.b16 %v362
      %v1277 = vunpack.c.l.b16 %v363
      %v1278 = vunpack.c.l.b16 %v364
      %v1279 = vunpack.c.l.b16 %v365
      %v1280 = vunpack.c.l.b16 %v366
      %v1281 = vunpack.c.l.b16 %v367
      %v1282 = vunpack.c.l.b16 %v368
      %v1283 = vunpack.c.l.b16 %v369
      %v1284 = vunpack.c.l.b16 %v370
      %v1285 = vunpack.c.l.b16 %v371
      %v1286 = vunpack.c.l.b16 %v372
      %v1287 = vunpack.c.l.b16 %v373
      %v1288 = vunpack.c.l.b16 %v374
      %v1289 = vunpack.c.l.b16 %v375
      %v1290 = vunpack.c.l.b16 %v376
      %v1291 = vunpack.c.l.b16 %v377
      %v1292 = vunpack.c.l.b16 %v378
      %v1293 = vunpack.c.l.b16 %v379
      %v1294 = vunpack.c.l.b16 %v380
      %v1295 = vunpack.c.l.b16 %v381
      %v1296 = vunpack.c.l.b16 %v382
      %v1297 = vunpack.c.l.b16 %v383
      %v1298 = vunpack.c.l.b16 %v384
      %v1299 = vunpack.c.l.b16 %v385
      %v1300 = vunpack.c.l.b16 %v386
      %v1301 = vunpack.c.l.b16 %v387
      %v1302 = vunpack.c.l.b16 %v388
      %v1303 = vunpack.c.l.b16 %v389
      %v1304 = vunpack.c.l.b16 %v390
      %v1305 = vunpack.c.l.b16 %v391
      %v1306 = vunpack.c.l.b16 %v392
      %v1307 = vunpack.c.l.b16 %v393
      %v1308 = vunpack.c.l.b16 %v394
      %v1309 = vunpack.c.l.b16 %v395
      %v1310 = vunpack.c.l.b16 %v396
      %v1311 = vunpack.c.l.b16 %v397
      %v1312 = vunpack.c.l.b16 %v398
      %v1313 = vunpack.c.l.b16 %v399
      %v1314 = vunpack.c.l.b16 %v400
      %v1315 = vunpack.c.l.b16 %v401
      %v1316 = vunpack.c.l.b16 %v402
      %v1317 = vunpack.c.l.b16 %v403
      %v1318 = vunpack.c.l.b16 %v404
      %v1319 = vunpack.c.l.b16 %v405
      %v1320 = vunpack.c.l.b16 %v406
      %v1321 = vunpack.c.l.b16 %v407
      %v1322 = vunpack.c.l.b16 %v408
      %v1323 = vunpack.c.l.b16 %v409
      %v1324 = vunpack.c.l.b16 %v410
      %v1325 = vunpack.c.l.b16 %v411
      %v1326 = vunpack.c.l.b16 %v412
      %v1327 = vunpack.c.l.b16 %v413
      %v1328 = vunpack.c.l.b16 %v414
      %v1329 = vunpack.c.l.b16 %v415
      %v1330 = vunpack.c.l.b16 %v416
      %v1331 = vunpack.c.l.b16 %v417
      %v1332 = vunpack.c.l.b16 %v418
      %v1333 = vunpack.c.l.b16 %v419
      %v1334 = vunpack.c.l.b16 %v420
      %v1335 = vunpack.c.l.b16 %v421
      %v1336 = vunpack.c.l.b16 %v422
      %v1337 = vunpack.c.l.b16 %v423
      %v1338 = vunpack.c.l.b16 %v424
      %v1339 = vunpack.c.l.b16 %v425
      %v1340 = vunpack.c.l.b16 %v426
      %v1341 = vunpack.c.l.b16 %v427
      %v1342 = vunpack.c.l.b16 %v428
      %v1343 = vunpack.c.l.b16 %v429
      %v1344 = vunpack.c.l.b16 %v430
      %v1345 = vunpack.c.l.b16 %v431
      %v1346 = vunpack.c.l.b16 %v432
      %v1347 = vunpack.c.l.b16 %v433
      %v1348 = vunpack.c.l.b16 %v434
      %v1349 = vunpack.c.l.b16 %v435
      %v1350 = vunpack.c.l.b16 %v436
      %v1351 = vunpack.c.l.b16 %v437
      %v1352 = vunpack.c.l.b16 %v438
      %v1353 = vunpack.c.l.b16 %v439
      %v1354 = vunpack.c.l.b16 %v440
      %v1355 = vunpack.c.l.b16 %v441
      %v1356 = vunpack.c.l.b16 %v442
      %v1357 = vunpack.c.l.b16 %v443
      %v1358 = vunpack.c.l.b16 %v444
      %v1359 = vunpack.c.l.b16 %v445
      %v1360 = vunpack.c.l.b16 %v446
      %v1361 = vunpack.c.l.b16 %v447
      %v1362 = vunpack.c.l.b16 %v448
      %v1363 = vunpack.c.l.b16 %v449
      %v1364 = vunpack.c.l.b16 %v450
      %v1365 = vunpack.c.l.b16 %v451
      %v1366 = vunpack.c.l.b16 %v452
      %v1367 = vunpack.c.l.b16 %v453
      %v1368 = vunpack.c.l.b16 %v454
      %v1369 = vunpack.c.l.b16 %v455
      %v1370 = vunpack.c.l.b16 %v456
      %v1371 = vunpack.c.l.b16 %v457
      %v1372 = vunpack.c.l.b16 %v458
      %v1373 = vunpack.c.l.b16 %v459
      %v1374 = vunpack.c.l.b16 %v460
      %v1375 = vunpack.c.l.b16 %v461
      %v1376 = vunpack.c.l.b16 %v462
      %v1377 = vunpack.c.l.b16 %v463
      %v1378 = vunpack.c.l.b16 %v464
      %v1379 = vunpack.c.l.b16 %v465
      %v1380 = vunpack.c.l.b16 %v466
      %v1381 = vunpack.c.l.b16 %v467
      %v1382 = vunpack.c.l.b16 %v468
      %v1383 = vunpack.c.l.b16 %v469
      %v1384 = vunpack.c.l.b16 %v470
      %v1385 = vunpack.c.l.b16 %v471
      %v1386 = vunpack.c.l.b16 %v472
      %v1387 = vunpack.c.l.b16 %v473
      %v1388 = vunpack.c.l.b16 %v474
      %v1389 = vunpack.c.l.b16 %v475
      %v1390 = vunpack.c.l.b16 %v476
      %v1391 = vunpack.c.l.b16 %v477
      %v1392 = vunpack.c.l.b16 %v478
      %v1393 = vunpack.c.l.b16 %v479
      %v1394 = vunpack.c.l.b16 %v480
      %v1395 = vunpack.c.l.b16 %v481
      %v1396 = vunpack.c.l.b16 %v482
      %v1397 = vunpack.c.l.b16 %v483
      %v1398 = vunpack.c.l.b16 %v484
      %v1399 = vunpack.c.l.b16 %v485
      %v1400 = vunpack.c.l.b16 %v486
      %v1401 = vunpack.c.l.b16 %v487
      %v1402 = vunpack.c.l.b16 %v488
      %v1403 = vunpack.c.l.b16 %v489
      %v1404 = vunpack.c.l.b16 %v490
      %v1405 = vunpack.c.l.b16 %v491
      %v1406 = vunpack.c.l.b16 %v492
      %v1407 = vunpack.c.l.b16 %v493
      %v1408 = vunpack.c.l.b16 %v494
      %v1409 = vunpack.c.l.b16 %v495
      %v1410 = vunpack.c.l.b16 %v496
      %v1411 = vunpack.c.l.b16 %v497
      %v1412 = vunpack.c.l.b16 %v498
      %v1413 = vunpack.c.l.b16 %v499
      %v1414 = vunpack.c.l.b16 %v500
      %v1415 = vunpack.c.l.b16 %v501
      %v1416 = vunpack.c.l.b16 %v502
      %v1417 = vunpack.c.l.b16 %v503
      %v1418 = vunpack.c.l.b16 %v504
      %v1419 = vunpack.c.l.b16 %v505
      %v1420 = vunpack.c.l.b16 %v506
      %v1421 = vunpack.c.l.b16 %v507
      %v1422 = vunpack.c.l.b16 %v508
      %v1423 = vunpack.c.l.b16 %v509
      %v1424 = vunpack.c.l.b16 %v510
      %v1425 = vunpack.c.l.b16 %v511
      %v1426 = vunpack.c.l.b16 %v512
      %v1427 = vunpack.c.l.b16 %v513
      %v1428 = vunpack.c.l.b16 %v514
      %v1429 = vunpack.c.l.b16 %v515
      %v1430 = vunpack.c.l.b16 %v516
      %v1431 = vunpack.c.l.b16 %v517
      %v1432 = vunpack.c.l.b16 %v518
      %v1433 = vunpack.c.l.b16 %v519
      %v1434 = vunpack.c.l.b16 %v520
      %v1435 = vunpack.c.l.b16 %v521
      %v1436 = vunpack.c.l.b16 %v522
      %v1437 = vunpack.c.l.b16 %v523
      %v1438 = vunpack.c.l.b16 %v524
      %v1439 = vunpack.c.l.b16 %v525
      %v1440 = vunpack.c.l.b16 %v526
      %v1441 = vunpack.c.l.b16 %v527
      %v1442 = vunpack.c.l.b16 %v528
      %v1443 = vunpack.c.l.b16 %v529
      %v1444 = vunpack.c.l.b16 %v530
      %v1445 = vunpack.c.l.b16 %v531
      %v1446 = vunpack.c.l.b16 %v532
      %v1447 = vunpack.c.l.b16 %v533
      %v1448 = vunpack.c.l.b16 %v534
      %v1449 = vunpack.c.l.b16 %v535
      %v1450 = vunpack.c.l.b16 %v536
      %v1451 = vunpack.c.l.b16 %v537
      %v1452 = vunpack.c.l.b16 %v538
      %v1453 = vunpack.c.l.b16 %v539
      %v1454 = vunpack.c.l.b16 %v540
      %v1455 = vunpack.c.l.b16 %v541
      %v1456 = vunpack.c.l.b16 %v542
      %v1457 = vunpack.c.l.b16 %v543
      %v1458 = vunpack.c.l.b16 %v544
      %v1459 = vunpack.c.l.b16 %v545
      %v1460 = vunpack.c.l.b16 %v546
      %v1461 = vunpack.c.l.b16 %v547
      %v1462 = vunpack.c.l.b16 %v548
      %v1463 = vunpack.c.l.b16 %v549
      %v1464 = vunpack.c.l.b16 %v550
      %v1465 = vunpack.c.l.b16 %v551
      %v1466 = vunpack.c.l.b16 %v552
      %v1467 = vunpack.c.l.b16 %v553
      %v1468 = vunpack.c.l.b16 %v554
      %v1469 = vunpack.c.l.b16 %v555
      %v1470 = vunpack.c.l.b16 %v556
      %v1471 = vunpack.c.l.b16 %v557
      %v1472 = vunpack.c.l.b16 %v558
      %v1473 = vunpack.c.l.b16 %v559
      %v1474 = vunpack.c.l.b16 %v560
      %v1475 = vunpack.c.l.b16 %v561
      %v1476 = vunpack.c.l.b16 %v562
      %v1477 = vunpack.c.l.b16 %v563
      %v1478 = vunpack.c.l.b16 %v564
      %v1479 = vunpack.c.l.b16 %v565
      %v1480 = vunpack.c.l.b16 %v566
      %v1481 = vunpack.c.l.b16 %v567
      %v1482 = vunpack.c.l.b16 %v568
      %v1483 = vunpack.c.l.b16 %v569
      %v1484 = vunpack.c.l.b16 %v570
      %v1485 = vunpack.c.l.b16 %v571
      %v1486 = vunpack.c.l.b16 %v572
      %v1487 = vunpack.c.l.b16 %v573
      %v1488 = vunpack.c.l.b16 %v574
      %v1489 = vunpack.c.l.b16 %v575
      %v1490 = vunpack.c.l.b16 %v576
      %v1491 = vunpack.c.l.b16 %v577
      %v1492 = vunpack.c.l.b16 %v578
      %v1493 = vunpack.c.l.b16 %v579
      %v1494 = vunpack.c.l.b16 %v580
      %v1495 = vunpack.c.l.b16 %v581
      %v1496 = vunpack.c.l.b16 %v582
      %v1497 = vunpack.c.l.b16 %v583
      %v1498 = vunpack.c.l.b16 %v584
      %v1499 = vunpack.c.l.b16 %v585
      %v1500 = vunpack.c.l.b16 %v586
      %v1501 = vunpack.c.l.b16 %v587
      %v1502 = vunpack.c.l.b16 %v588
      %v1503 = vunpack.c.l.b16 %v589
      %v1504 = vunpack.c.l.b16 %v590
      %v1505 = vunpack.c.l.b16 %v591
      %v1506 = vunpack.c.l.b16 %v592
      %v1507 = vunpack.c.l.b16 %v593
      %v1508 = vunpack.c.l.b16 %v594
      %v1509 = vunpack.c.l.b16 %v595
      %v1510 = vunpack.c.l.b16 %v596
      %v1511 = vunpack.c.l.b16 %v597
      %v1512 = vunpack.c.l.b16 %v598
      %v1513 = vunpack.c.l.b16 %v599
      %v1514 = vunpack.c.l.b16 %v600
      %v1515 = vunpack.c.l.b16 %v601
      %v1516 = vunpack.c.l.b16 %v602
      %v1517 = vunpack.c.l.b16 %v603
      %v1518 = vunpack.c.l.b16 %v604
      %v1519 = vunpack.c.l.b16 %v605
      %v1520 = vunpack.c.l.b16 %v606
      %v1521 = vunpack.c.l.b16 %v607
      %v1522 = vunpack.c.l.b16 %v608
      %v1523 = vunpack.c.l.b16 %v609
      %v1524 = vunpack.c.l.b16 %v610
      %v1525 = vunpack.c.l.b16 %v611
      %v1526 = vunpack.c.l.b16 %v612
      %v1527 = vunpack.c.l.b16 %v613
      %v1528 = vunpack.c.l.b16 %v614
      %v1529 = vunpack.c.l.b16 %v615
      %v1530 = vunpack.c.l.b16 %v616
      %v1531 = vunpack.c.l.b16 %v617
      %v1532 = vunpack.c.l.b16 %v618
      %v1533 = vunpack.c.l.b16 %v619
      %v1534 = vunpack.c.l.b16 %v620
      %v1535 = vunpack.c.l.b16 %v621
      %v1536 = vunpack.c.l.b16 %v622
      %v1537 = vunpack.c.l.b16 %v623
      %v1538 = vunpack.c.l.b16 %v624
      %v1539 = vunpack.c.l.b16 %v625
      %v1540 = vunpack.c.l.b16 %v626
      %v1541 = vunpack.c.l.b16 %v627
      %v1542 = vunpack.c.l.b16 %v628
      %v1543 = vunpack.c.l.b16 %v629
      %v1544 = vunpack.c.l.b16 %v630
      %v1545 = vunpack.c.l.b16 %v631
      %v1546 = vunpack.c.l.b16 %v632
      %v1547 = vunpack.c.l.b16 %v633
      %v1548 = vunpack.c.l.b16 %v634
      %v1549 = vunpack.c.l.b16 %v635
      %v1550 = vunpack.c.l.b16 %v636
      %v1551 = vunpack.c.l.b16 %v637
      %v1552 = vunpack.c.l.b16 %v638
      %v1553 = vunpack.c.l.b16 %v639
      %v1554 = vunpack.c.l.b16 %v640
      %v1555 = vunpack.c.l.b16 %v641
      %v1556 = vunpack.c.l.b16 %v642
      %v1557 = vunpack.c.l.b16 %v643
      %v1558 = vunpack.c.l.b16 %v644
      %v1559 = vunpack.c.l.b16 %v645
      %v1560 = vunpack.c.l.b16 %v646
      %v1561 = vunpack.c.l.b16 %v647
      %v1562 = vunpack.c.l.b16 %v648
      %v1563 = vunpack.c.l.b16 %v649
      %v1564 = vunpack.c.l.b16 %v650
      %v1565 = vunpack.c.l.b16 %v651
      %v1566 = vunpack.c.l.b16 %v652
      %v1567 = vunpack.c.l.b16 %v653
      %v1568 = vunpack.c.l.b16 %v654
      %v1569 = vunpack.c.l.b16 %v655
      %v1570 = vunpack.c.l.b16 %v656
      %v1571 = vunpack.c.l.b16 %v657
      %v1572 = vunpack.c.l.b16 %v658
      %v1573 = vunpack.c.l.b16 %v659
      %v1574 = vunpack.c.l.b16 %v660
      %v1575 = vunpack.c.l.b16 %v661
      %v1576 = vunpack.c.l.b16 %v662
      %v1577 = vunpack.c.l.b16 %v663
      %v1578 = vunpack.c.l.b16 %v664
      %v1579 = vunpack.c.l.b16 %v665
      %v1580 = vunpack.c.l.b16 %v666
      %v1581 = vunpack.c.l.b16 %v667
      %v1582 = vunpack.c.l.b16 %v668
      %v1583 = vunpack.c.l.b16 %v669
      %v1584 = vunpack.c.l.b16 %v670
      %v1585 = vunpack.c.l.b16 %v671
      %v1586 = vunpack.c.l.b16 %v672
      %v1587 = vunpack.c.l.b16 %v673
      %v1588 = vpack.c.b16 %v1141, %v1140
      %v1589 = vpack.c.b16 %v1143, %v1142
      %v1590 = vpack.c.b16 %v1145, %v1144
      %v1591 = vpack.c.b16 %v1147, %v1146
      %v1592 = vpack.c.b16 %v1149, %v1148
      %v1593 = vpack.c.b16 %v1151, %v1150
      %v1594 = vpack.c.b16 %v1153, %v1152
      %v1595 = vpack.c.b16 %v1155, %v1154
      %v1596 = vpack.c.b16 %v1157, %v1156
      %v1597 = vpack.c.b16 %v1159, %v1158
      %v1598 = vpack.c.b16 %v1161, %v1160
      %v1599 = vpack.c.b16 %v1163, %v1162
      %v1600 = vpack.c.b16 %v1165, %v1164
      %v1601 = vpack.c.b16 %v1167, %v1166
      %v1602 = vpack.c.b16 %v1169, %v1168
      %v1603 = vpack.c.b16 %v1171, %v1170
      %v1604 = vpack.c.b16 %v1173, %v1172
      %v1605 = vpack.c.b16 %v1175, %v1174
      %v1606 = vpack.c.b16 %v1177, %v1176
      %v1607 = vpack.c.b16 %v1179, %v1178
      %v1608 = vpack.c.b16 %v1181, %v1180
      %v1609 = vpack.c.b16 %v1183, %v1182
      %v1610 = vpack.c.b16 %v1185, %v1184
      %v1611 = vpack.c.b16 %v1187, %v1186
      %v1612 = vpack.c.b16 %v1189, %v1188
      %v1613 = vpack.c.b16 %v1191, %v1190
      %v1614 = vpack.c.b16 %v1193, %v1192
      %v1615 = vpack.c.b16 %v1195, %v1194
      %v1616 = vpack.c.b16 %v1197, %v1196
      %v1617 = vpack.c.b16 %v1199, %v1198
      %v1618 = vpack.c.b16 %v1201, %v1200
      %v1619 = vpack.c.b16 %v1203, %v1202
      %v1620 = vpack.c.b16 %v1205, %v1204
      %v1621 = vpack.c.b16 %v1207, %v1206
      %v1622 = vpack.c.b16 %v1209, %v1208
      %v1623 = vpack.c.b16 %v1211, %v1210
      %v1624 = vpack.c.b16 %v1213, %v1212
      %v1625 = vpack.c.b16 %v1215, %v1214
      %v1626 = vpack.c.b16 %v1217, %v1216
      %v1627 = vpack.c.b16 %v1219, %v1218
      %v1628 = vpack.c.b16 %v1221, %v1220
      %v1629 = vpack.c.b16 %v1223, %v1222
      %v1630 = vpack.c.b16 %v1225, %v1224
      %v1631 = vpack.c.b16 %v1227, %v1226
      %v1632 = vpack.c.b16 %v1229, %v1228
      %v1633 = vpack.c.b16 %v1231, %v1230
      %v1634 = vpack.c.b16 %v1233, %v1232
      %v1635 = vpack.c.b16 %v1235, %v1234
      %v1636 = vpack.c.b16 %v1237, %v1236
      %v1637 = vpack.c.b16 %v1239, %v1238
      %v1638 = vpack.c.b16 %v1241, %v1240
      %v1639 = vpack.c.b16 %v1243, %v1242
      %v1640 = vpack.c.b16 %v1245, %v1244
      %v1641 = vpack.c.b16 %v1247, %v1246
      %v1642 = vpack.c.b16 %v1249, %v1248
      %v1643 = vpack.c.b16 %v1251, %v1250
      %v1644 = vpack.c.b16 %v1253, %v1252
      %v1645 = vpack.c.b16 %v1255, %v1254
      %v1646 = vpack.c.b16 %v1257, %v1256
      %v1647 = vpack.c.b16 %v1259, %v1258
      %v1648 = vpack.c.b16 %v1261, %v1260
      %v1649 = vpack.c.b16 %v1263, %v1262
      %v1650 = vpack.c.b16 %v1265, %v1264
      %v1651 = vpack.c.b16 %v1267, %v1266
      %v1652 = vpack.c.b16 %v1269, %v1268
      %v1653 = vpack.c.b16 %v1271, %v1270
      %v1654 = vpack.c.b16 %v1273, %v1272
      %v1655 = vpack.c.b16 %v1275, %v1274
      %v1656 = vpack.c.b16 %v1277, %v1276
      %v1657 = vpack.c.b16 %v1279, %v1278
      %v1658 = vpack.c.b16 %v1281, %v1280
      %v1659 = vpack.c.b16 %v1283, %v1282
      %v1660 = vpack.c.b16 %v1285, %v1284
      %v1661 = vpack.c.b16 %v1287, %v1286
      %v1662 = vpack.c.b16 %v1289, %v1288
      %v1663 = vpack.c.b16 %v1291, %v1290
      %v1664 = vpack.c.b16 %v1293, %v1292
      %v1665 = vpack.c.b16 %v1295, %v1294
      %v1666 = vpack.c.b16 %v1297, %v1296
      %v1667 = vpack.c.b16 %v1299, %v1298
      %v1668 = vpack.c.b16 %v1301, %v1300
      %v1669 = vpack.c.b16 %v1303, %v1302
      %v1670 = vpack.c.b16 %v1305, %v1304
      %v1671 = vpack.c.b16 %v1307, %v1306
      %v1672 = vpack.c.b16 %v1309, %v1308
      %v1673 = vpack.c.b16 %v1311, %v1310
      %v1674 = vpack.c.b16 %v1313, %v1312
      %v1675 = vpack.c.b16 %v1315, %v1314
      %v1676 = vpack.c.b16 %v1317, %v1316
      %v1677 = vpack.c.b16 %v1319, %v1318
      %v1678 = vpack.c.b16 %v1321, %v1320
      %v1679 = vpack.c.b16 %v1323, %v1322
      %v1680 = vpack.c.b16 %v1325, %v1324
      %v1681 = vpack.c.b16 %v1327, %v1326
      %v1682 = vpack.c.b16 %v1329, %v1328
      %v1683 = vpack.c.b16 %v1331, %v1330
      %v1684 = vpack.c.b16 %v1333, %v1332
      %v1685 = vpack.c.b16 %v1335, %v1334
      %v1686 = vpack.c.b16 %v1337, %v1336
      %v1687 = vpack.c.b16 %v1339, %v1338
      %v1688 = vpack.c.b16 %v1341, %v1340
      %v1689 = vpack.c.b16 %v1343, %v1342
      %v1690 = vpack.c.b16 %v1345, %v1344
      %v1691 = vpack.c.b16 %v1347, %v1346
      %v1692 = vpack.c.b16 %v1349, %v1348
      %v1693 = vpack.c.b16 %v1351, %v1350
      %v1694 = vpack.c.b16 %v1353, %v1352
      %v1695 = vpack.c.b16 %v1355, %v1354
      %v1696 = vpack.c.b16 %v1357, %v1356
      %v1697 = vpack.c.b16 %v1359, %v1358
      %v1698 = vpack.c.b16 %v1361, %v1360
      %v1699 = vpack.c.b16 %v1363, %v1362
      %v1700 = vpack.c.b16 %v1365, %v1364
      %v1701 = vpack.c.b16 %v1367, %v1366
      %v1702 = vpack.c.b16 %v1369, %v1368
      %v1703 = vpack.c.b16 %v1371, %v1370
      %v1704 = vpack.c.b16 %v1373, %v1372
      %v1705 = vpack.c.b16 %v1375, %v1374
      %v1706 = vpack.c.b16 %v1377, %v1376
      %v1707 = vpack.c.b16 %v1379, %v1378
      %v1708 = vpack.c.b16 %v1381, %v1380
      %v1709 = vpack.c.b16 %v1383, %v1382
      %v1710 = vpack.c.b16 %v1385, %v1384
      %v1711 = vpack.c.b16 %v1387, %v1386
      %v1712 = vpack.c.b16 %v1389, %v1388
      %v1713 = vpack.c.b16 %v1391, %v1390
      %v1714 = vpack.c.b16 %v1393, %v1392
      %v1715 = vpack.c.b16 %v1395, %v1394
      %v1716 = vpack.c.b16 %v1397, %v1396
      %v1717 = vpack.c.b16 %v1399, %v1398
      %v1718 = vpack.c.b16 %v1401, %v1400
      %v1719 = vpack.c.b16 %v1403, %v1402
      %v1720 = vpack.c.b16 %v1405, %v1404
      %v1721 = vpack.c.b16 %v1407, %v1406
      %v1722 = vpack.c.b16 %v1409, %v1408
      %v1723 = vpack.c.b16 %v1411, %v1410
      %v1724 = vpack.c.b16 %v1413, %v1412
      %v1725 = vpack.c.b16 %v1415, %v1414
      %v1726 = vpack.c.b16 %v1417, %v1416
      %v1727 = vpack.c.b16 %v1419, %v1418
      %v1728 = vpack.c.b16 %v1421, %v1420
      %v1729 = vpack.c.b16 %v1423, %v1422
      %v1730 = vpack.c.b16 %v1425, %v1424
      %v1731 = vpack.c.b16 %v1427, %v1426
      %v1732 = vpack.c.b16 %v1429, %v1428
      %v1733 = vpack.c.b16 %v1431, %v1430
      %v1734 = vpack.c.b16 %v1433, %v1432
      %v1735 = vpack.c.b16 %v1435, %v1434
      %v1736 = vpack.c.b16 %v1437, %v1436
      %v1737 = vpack.c.b16 %v1439, %v1438
      %v1738 = vpack.c.b16 %v1441, %v1440
      %v1739 = vpack.c.b16 %v1443, %v1442
      %v1740 = vpack.c.b16 %v1445, %v1444
      %v1741 = vpack.c.b16 %v1447, %v1446
      %v1742 = vpack.c.b16 %v1449, %v1448
      %v1743 = vpack.c.b16 %v1451, %v1450
      %v1744 = vpack.c.b16 %v1453, %v1452
      %v1745 = vpack.c.b16 %v1455, %v1454
      %v1746 = vpack.c.b16 %v1457, %v1456
      %v1747 = vpack.c.b16 %v1459, %v1458
      %v1748 = vpack.c.b16 %v1461, %v1460
      %v1749 = vpack.c.b16 %v1463, %v1462
      %v1750 = vpack.c.b16 %v1465, %v1464
      %v1751 = vpack.c.b16 %v1467, %v1466
      %v1752 = vpack.c.b16 %v1469, %v1468
      %v1753 = vpack.c.b16 %v1471, %v1470
      %v1754 = vpack.c.b16 %v1473, %v1472
      %v1755 = vpack.c.b16 %v1475, %v1474
      %v1756 = vpack.c.b16 %v1477, %v1476
      %v1757 = vpack.c.b16 %v1479, %v1478
      %v1758 = vpack.c.b16 %v1481, %v1480
      %v1759 = vpack.c.b16 %v1483, %v1482
      %v1760 = vpack.c.b16 %v1485, %v1484
      %v1761 = vpack.c.b16 %v1487, %v1486
      %v1762 = vpack.c.b16 %v1489, %v1488
      %v1763 = vpack.c.b16 %v1491, %v1490
      %v1764 = vpack.c.b16 %v1493, %v1492
      %v1765 = vpack.c.b16 %v1495, %v1494
      %v1766 = vpack.c.b16 %v1497, %v1496
      %v1767 = vpack.c.b16 %v1499, %v1498
      %v1768 = vpack.c.b16 %v1501, %v1500
      %v1769 = vpack.c.b16 %v1503, %v1502
      %v1770 = vpack.c.b16 %v1505, %v1504
      %v1771 = vpack.c.b16 %v1507, %v1506
      %v1772 = vpack.c.b16 %v1509, %v1508
      %v1773 = vpack.c.b16 %v1511, %v1510
      %v1774 = vpack.c.b16 %v1513, %v1512
      %v1775 = vpack.c.b16 %v1515, %v1514
      %v1776 = vpack.c.b16 %v1517, %v1516
      %v1777 = vpack.c.b16 %v1519, %v1518
      %v1778 = vpack.c.b16 %v1521, %v1520
      %v1779 = vpack.c.b16 %v1523, %v1522
      %v1780 = vpack.c.b16 %v1525, %v1524
      %v1781 = vpack.c.b16 %v1527, %v1526
      %v1782 = vpack.c.b16 %v1529, %v1528
      %v1783 = vpack.c.b16 %v1531, %v1530
      %v1784 = vpack.c.b16 %v1533, %v1532
      %v1785 = vpack.c.b16 %v1535, %v1534
      %v1786 = vpack.c.b16 %v1537, %v1536
      %v1787 = vpack.c.b16 %v1539, %v1538
      %v1788 = vpack.c.b16 %v1541, %v1540
      %v1789 = vpack.c.b16 %v1543, %v1542
      %v1790 = vpack.c.b16 %v1545, %v1544
      %v1791 = vpack.c.b16 %v1547, %v1546
      %v1792 = vpack.c.b16 %v1549, %v1548
      %v1793 = vpack.c.b16 %v1551, %v1550
      %v1794 = vpack.c.b16 %v1553, %v1552
      %v1795 = vpack.c.b16 %v1555, %v1554
      %v1796 = vpack.c.b16 %v1557, %v1556
      %v1797 = vpack.c.b16 %v1559, %v1558
      %v1798 = vpack.c.b16 %v1561, %v1560
      %v1799 = vpack.c.b16 %v1563, %v1562
      %v1800 = vpack.c.b16 %v1565, %v1564
      %v1801 = vpack.c.b16 %v1567, %v1566
      %v1802 = vpack.c.b16 %v1569, %v1568
      %v1803 = vpack.c.b16 %v1571, %v1570
      %v1804 = vpack.c.b16 %v1573, %v1572
      %v1805 = vpack.c.b16 %v1575, %v1574
      %v1806 = vpack.c.b16 %v1577, %v1576
      %v1807 = vpack.c.b16 %v1579, %v1578
      %v1808 = vpack.c.b16 %v1581, %v1580
      %v1809 = vpack.c.b16 %v1583, %v1582
      %v1810 = vpack.c.b16 %v1585, %v1584
      %v1811 = vpack.c.b16 %v1587, %v1586
      %v1823 = vunpack.c.l.b16 %v674
      %v1824 = vunpack.c.l.b16 %v675
      %v1825 = vunpack.c.l.b16 %v676
      %v1826 = vunpack.c.l.b16 %v677
      %v1827 = vunpack.c.l.b16 %v678
      %v1828 = vunpack.c.l.b16 %v679
      %v1829 = vunpack.c.l.b16 %v680
      %v1830 = vunpack.c.l.b16 %v681
      %v1831 = vunpack.c.l.b16 %v682
      %v1832 = vunpack.c.l.b16 %v683
      %v1833 = vunpack.c.l.b16 %v684
      %v1834 = vpack.c.b16 %v1824, %v1823
      %v1835 = vpack.c.b16 %v1826, %v1825
      %v1836 = vpack.c.b16 %v1828, %v1827
      %v1837 = vpack.c.b16 %v1830, %v1829
      %v1838 = vpack.c.b16 %v1832, %v1831
      %v1839 = vpack.c.b16 %v1833, %v1833
      %vm1845 = vcmask 662528
      %v1847 = vsel %vm1845, %v1588, 0
      %v1850 = vsel %vm1845, %v1589, 0
      %v1853 = vsel %vm1845, %v1590, 0
      %v1856 = vsel %vm1845, %v1591, 0
      %v1859 = vsel %vm1845, %v1592, 0
      %v1862 = vsel %vm1845, %v1593, 0
      %v1865 = vsel %vm1845, %v1594, 0
      %v1868 = vsel %vm1845, %v1595, 0
      %v1871 = vsel %vm1845, %v1596, 0
      %v1874 = vsel %vm1845, %v1597, 0
      %v1877 = vsel %vm1845, %v1598, 0
      %v1880 = vsel %vm1845, %v1599, 0
      %v1883 = vsel %vm1845, %v1600, 0
      %v1886 = vsel %vm1845, %v1601, 0
      %v1889 = vsel %vm1845, %v1602, 0
      %v1892 = vsel %vm1845, %v1603, 0
      %v1895 = vsel %vm1845, %v1604, 0
      %v1898 = vsel %vm1845, %v1605, 0
      %v1901 = vsel %vm1845, %v1606, 0
      %v1904 = vsel %vm1845, %v1607, 0
      %v1907 = vsel %vm1845, %v1608, 0
      %v1910 = vsel %vm1845, %v1609, 0
      %v1913 = vsel %vm1845, %v1610, 0
      %v1916 = vsel %vm1845, %v1611, 0
      %v1919 = vsel %vm1845, %v1612, 0
      %v1922 = vsel %vm1845, %v1613, 0
      %v1925 = vsel %vm1845, %v1614, 0
      %v1928 = vsel %vm1845, %v1615, 0
      %v1931 = vsel %vm1845, %v1616, 0
      %v1934 = vsel %vm1845, %v1617, 0
      %v1937 = vsel %vm1845, %v1618, 0
      %v1940 = vsel %vm1845, %v1619, 0
      %v1943 = vsel %vm1845, %v1620, 0
      %v1946 = vsel %vm1845, %v1621, 0
      %v1949 = vsel %vm1845, %v1622, 0
      %v1952 = vsel %vm1845, %v1623, 0
      %v1955 = vsel %vm1845, %v1624, 0
      %v1958 = vsel %vm1845, %v1625, 0
      %v1961 = vsel %vm1845, %v1626, 0
      %v1964 = vsel %vm1845, %v1627, 0
      %v1967 = vsel %vm1845, %v1628, 0
      %v1970 = vsel %vm1845, %v1629, 0
      %v1973 = vsel %vm1845, %v1630, 0
      %v1976 = vsel %vm1845, %v1631, 0
      %v1979 = vsel %vm1845, %v1632, 0
      %v1982 = vsel %vm1845, %v1633, 0
      %v1985 = vsel %vm1845, %v1634, 0
      %v1988 = vsel %vm1845, %v1635, 0
      %v1991 = vsel %vm1845, %v1636, 0
      %v1994 = vsel %vm1845, %v1637, 0
      %v1997 = vsel %vm1845, %v1638, 0
      %v2000 = vsel %vm1845, %v1639, 0
      %v2003 = vsel %vm1845, %v1640, 0
      %v2006 = vsel %vm1845, %v1641, 0
      %v2009 = vsel %vm1845, %v1642, 0
      %v2012 = vsel %vm1845, %v1643, 0
      %v2015 = vsel %vm1845, %v1644, 0
      %v2018 = vsel %vm1845, %v1645, 0
      %v2021 = vsel %vm1845, %v1646, 0
      %v2024 = vsel %vm1845, %v1647, 0
      %v2027 = vsel %vm1845, %v1648, 0
      %v2030 = vsel %vm1845, %v1649, 0
      %v2033 = vsel %vm1845, %v1650, 0
      %v2036 = vsel %vm1845, %v1651, 0
      %v2039 = vsel %vm1845, %v1652, 0
      %v2042 = vsel %vm1845, %v1653, 0
      %v2045 = vsel %vm1845, %v1654, 0
      %v2048 = vsel %vm1845, %v1655, 0
      %v2051 = vsel %vm1845, %v1656, 0
      %v2054 = vsel %vm1845, %v1657, 0
      %v2057 = vsel %vm1845, %v1658, 0
      %v2060 = vsel %vm1845, %v1659, 0
      %v2063 = vsel %vm1845, %v1660, 0
      %v2066 = vsel %vm1845, %v1661, 0
      %v2069 = vsel %vm1845, %v1662, 0
      %v2072 = vsel %vm1845, %v1663, 0
      %v2075 = vsel %vm1845, %v1664, 0
      %v2078 = vsel %vm1845, %v1665, 0
      %v2081 = vsel %vm1845, %v1666, 0
      %v2084 = vsel %vm1845, %v1667, 0
      %v2087 = vsel %vm1845, %v1668, 0
      %v2090 = vsel %vm1845, %v1669, 0
      %v2093 = vsel %vm1845, %v1670, 0
      %v2096 = vsel %vm1845, %v1671, 0
      %v2099 = vsel %vm1845, %v1672, 0
      %v2102 = vsel %vm1845, %v1673, 0
      %v2105 = vsel %vm1845, %v1674, 0
      %v2108 = vsel %vm1845, %v1675, 0
      %v2111 = vsel %vm1845, %v1676, 0
      %v2114 = vsel %vm1845, %v1677, 0
      %v2117 = vsel %vm1845, %v1678, 0
      %v2120 = vsel %vm1845, %v1679, 0
      %v2123 = vsel %vm1845, %v1680, 0
      %v2126 = vsel %vm1845, %v1681, 0
      %v2129 = vsel %vm1845, %v1682, 0
      %v2132 = vsel %vm1845, %v1683, 0
      %v2135 = vsel %vm1845, %v1684, 0
      %v2138 = vsel %vm1845, %v1685, 0
      %v2141 = vsel %vm1845, %v1686, 0
      %v2144 = vsel %vm1845, %v1687, 0
      %v2147 = vsel %vm1845, %v1688, 0
      %v2150 = vsel %vm1845, %v1689, 0
      %v2153 = vsel %vm1845, %v1690, 0
      %v2156 = vsel %vm1845, %v1691, 0
      %v2159 = vsel %vm1845, %v1692, 0
      %v2162 = vsel %vm1845, %v1693, 0
      %v2165 = vsel %vm1845, %v1694, 0
      %v2168 = vsel %vm1845, %v1695, 0
      %v2171 = vsel %vm1845, %v1696, 0
      %v2174 = vsel %vm1845, %v1697, 0
      %v2177 = vsel %vm1845, %v1698, 0
      %v2180 = vsel %vm1845, %v1699, 0
      %v2183 = vsel %vm1845, %v1700, 0
      %v2186 = vsel %vm1845, %v1701, 0
      %v2189 = vsel %vm1845, %v1702, 0
      %v2192 = vsel %vm1845, %v1703, 0
      %v2195 = vsel %vm1845, %v1704, 0
      %v2198 = vsel %vm1845, %v1705, 0
      %v2201 = vsel %vm1845, %v1706, 0
      %v2204 = vsel %vm1845, %v1707, 0
      %v2207 = vsel %vm1845, %v1708, 0
      %v2210 = vsel %vm1845, %v1709, 0
      %v2213 = vsel %vm1845, %v1710, 0
      %v2216 = vsel %vm1845, %v1711, 0
      %v2219 = vsel %vm1845, %v1712, 0
      %v2222 = vsel %vm1845, %v1713, 0
      %v2225 = vsel %vm1845, %v1714, 0
      %v2228 = vsel %vm1845, %v1715, 0
      %v2231 = vsel %vm1845, %v1716, 0
      %v2234 = vsel %vm1845, %v1717, 0
      %v2237 = vsel %vm1845, %v1718, 0
      %v2240 = vsel %vm1845, %v1719, 0
      %v2243 = vsel %vm1845, %v1720, 0
      %v2246 = vsel %vm1845, %v1721, 0
      %v2249 = vsel %vm1845, %v1722, 0
      %v2252 = vsel %vm1845, %v1723, 0
      %v2255 = vsel %vm1845, %v1724, 0
      %v2258 = vsel %vm1845, %v1725, 0
      %v2261 = vsel %vm1845, %v1726, 0
      %v2264 = vsel %vm1845, %v1727, 0
      %v2267 = vsel %vm1845, %v1728, 0
      %v2270 = vsel %vm1845, %v1729, 0
      %v2273 = vsel %vm1845, %v1730, 0
      %v2276 = vsel %vm1845, %v1731, 0
      %v2279 = vsel %vm1845, %v1732, 0
      %v2282 = vsel %vm1845, %v1733, 0
      %v2285 = vsel %vm1845, %v1734, 0
      %v2288 = vsel %vm1845, %v1735, 0
      %v2291 = vsel %vm1845, %v1736, 0
      %v2294 = vsel %vm1845, %v1737, 0
      %v2297 = vsel %vm1845, %v1738, 0
      %v2300 = vsel %vm1845, %v1739, 0
      %v2303 = vsel %vm1845, %v1740, 0
      %v2306 = vsel %vm1845, %v1741, 0
      %v2309 = vsel %vm1845, %v1742, 0
      %v2312 = vsel %vm1845, %v1743, 0
      %v2315 = vsel %vm1845, %v1744, 0
      %v2318 = vsel %vm1845, %v1745, 0
      %v2321 = vsel %vm1845, %v1746, 0
      %v2324 = vsel %vm1845, %v1747, 0
      %v2327 = vsel %vm1845, %v1748, 0
      %v2330 = vsel %vm1845, %v1749, 0
      %v2333 = vsel %vm1845, %v1750, 0
      %v2336 = vsel %vm1845, %v1751, 0
      %v2339 = vsel %vm1845, %v1752, 0
      %v2342 = vsel %vm1845, %v1753, 0
      %v2345 = vsel %vm1845, %v1754, 0
      %v2348 = vsel %vm1845, %v1755, 0
      %v2351 = vsel %vm1845, %v1756, 0
      %v2354 = vsel %vm1845, %v1757, 0
      %v2357 = vsel %vm1845, %v1758, 0
      %v2360 = vsel %vm1845, %v1759, 0
      %v2363 = vsel %vm1845, %v1760, 0
      %v2366 = vsel %vm1845, %v1761, 0
      %v2369 = vsel %vm1845, %v1762, 0
      %v2372 = vsel %vm1845, %v1763, 0
      %v2375 = vsel %vm1845, %v1764, 0
      %v2378 = vsel %vm1845, %v1765, 0
      %v2381 = vsel %vm1845, %v1766, 0
      %v2384 = vsel %vm1845, %v1767, 0
      %v2387 = vsel %vm1845, %v1768, 0
      %v2390 = vsel %vm1845, %v1769, 0
      %v2393 = vsel %vm1845, %v1770, 0
      %v2396 = vsel %vm1845, %v1771, 0
      %v2399 = vsel %vm1845, %v1772, 0
      %v2402 = vsel %vm1845, %v1773, 0
      %v2405 = vsel %vm1845, %v1774, 0
      %v2408 = vsel %vm1845, %v1775, 0
      %v2411 = vsel %vm1845, %v1776, 0
      %v2414 = vsel %vm1845, %v1777, 0
      %v2417 = vsel %vm1845, %v1778, 0
      %v2420 = vsel %vm1845, %v1779, 0
      %v2423 = vsel %vm1845, %v1780, 0
      %v2426 = vsel %vm1845, %v1781, 0
      %v2429 = vsel %vm1845, %v1782, 0
      %v2432 = vsel %vm1845, %v1783, 0
      %v2435 = vsel %vm1845, %v1784, 0
      %v2438 = vsel %vm1845, %v1785, 0
      %v2441 = vsel %vm1845, %v1786, 0
      %v2444 = vsel %vm1845, %v1787, 0
      %v2447 = vsel %vm1845, %v1788, 0
      %v2450 = vsel %vm1845, %v1789, 0
      %v2453 = vsel %vm1845, %v1790, 0
      %v2456 = vsel %vm1845, %v1791, 0
      %v2459 = vsel %vm1845, %v1792, 0
      %v2462 = vsel %vm1845, %v1793, 0
      %v2465 = vsel %vm1845, %v1794, 0
      %v2468 = vsel %vm1845, %v1795, 0
      %v2471 = vsel %vm1845, %v1796, 0
      %v2474 = vsel %vm1845, %v1797, 0
      %v2477 = vsel %vm1845, %v1798, 0
      %v2480 = vsel %vm1845, %v1799, 0
      %v2483 = vsel %vm1845, %v1800, 0
      %v2486 = vsel %vm1845, %v1801, 0
      %v2489 = vsel %vm1845, %v1802, 0
      %v2492 = vsel %vm1845, %v1803, 0
      %v2495 = vsel %vm1845, %v1804, 0
      %v2498 = vsel %vm1845, %v1805, 0
      %v2501 = vsel %vm1845, %v1806, 0
      %v2504 = vsel %vm1845, %v1807, 0
      %v2507 = vsel %vm1845, %v1808, 0
      %v2510 = vsel %vm1845, %v1809, 0
      %v2513 = vsel %vm1845, %v1810, 0
      %v2516 = vsel %vm1845, %v1811, 0
      %vm2518 = vcmask 1040384
      %v2519 = vsel 0, 4294967295, 65535
      %v2520 = vsel %vm2518, %v2519, 0
      %v2522 = vand.u32 %v1839, %v2520
      %2524 = vmatprep.subr.bf16.mxu0 0
      %2525 = vmatpush1.bf16.msra.mxu0 0
      %2526 = vmatprep.subr.bf16.mxu0 0
      %2527 = vmatpush1.bf16.msra.mxu0 0
      %2528 = vmatprep.subr.bf16.mxu0 0
      %2529 = vmatpush1.bf16.msra.mxu0 %v2522
      %2530 = vmatprep.subr.bf16.mxu0 0
      %2531 = vmatpush1.bf16.msra.mxu0 %v1838
      %2532 = vmatprep.subr.bf16.mxu0 0
      %2533 = vmatpush1.bf16.msra.mxu0 %v1837
      %2534 = vmatprep.subr.bf16.mxu0 0
      %2535 = vmatpush1.bf16.msra.mxu0 %v1836
      %2536 = vmatprep.subr.bf16.mxu0 0
      %2537 = vmatpush1.bf16.msra.mxu0 %v1835
      %2538 = vmatprep.subr.bf16.mxu0 0
      %2539 = vmatpush1.bf16.msra.mxu0 %v1834
      %2540 = vmatprep.subr.bf16.mxu0 0
      %2541 = vmatpush2.bf16.msra.mxu0 0
      %2542 = vmatprep.subr.bf16.mxu0 0
      %2543 = vmatpush2.bf16.msra.mxu0 0
      %2544 = vmatprep.subr.bf16.mxu0 0
      %2545 = vmatpush2.bf16.msra.mxu0 0
      %2546 = vmatprep.subr.bf16.mxu0 0
      %2547 = vmatpush2.bf16.msra.mxu0 0
      %2548 = vmatprep.subr.bf16.mxu0 0
      %2549 = vmatpush2.bf16.msra.mxu0 0
      %2550 = vmatprep.subr.bf16.mxu0 0
      %2551 = vmatpush2.bf16.msra.mxu0 0
      %2552 = vmatprep.subr.bf16.mxu0 0
      %2553 = vmatpush2.bf16.msra.mxu0 0
      %2554 = vmatprep.subr.bf16.mxu0 0
      %2555 = vmatpush2.bf16.msra.mxu0 0
      %2556 = vmatprep.mubr.bf16.mxu0 0
      %2557 = vmatmul.mubr.bf16.gmra.mxu0 %v1847
      %v2558 = vpop.f32.mrf.mxu0
      %v2559 = vadd.f32 %v690, %v2558
      %v2560 = vpop.f32.mrf.mxu0
      %v2561 = vpop.f32.mrf.mxu0
      %v2562 = vadd.f32 %v690, %v2561
      %v2563 = vpop.f32.mrf.mxu0
      %2564 = vmatprep.mubr.bf16.mxu0 0
      %2565 = vmatmul.mubr.bf16.gmra.mxu0 %v1850
      %v2566 = vpop.f32.mrf.mxu0
      %v2567 = vadd.f32 %v690, %v2566
      %v2568 = vpop.f32.mrf.mxu0
      %v2569 = vpop.f32.mrf.mxu0
      %v2570 = vadd.f32 %v690, %v2569
      %v2571 = vpop.f32.mrf.mxu0
      %2572 = vmatprep.mubr.bf16.mxu0 0
      %2573 = vmatmul.mubr.bf16.gmra.mxu0 %v1853
      %v2574 = vpop.f32.mrf.mxu0
      %v2575 = vadd.f32 %v690, %v2574
      %v2576 = vpop.f32.mrf.mxu0
      %v2577 = vpop.f32.mrf.mxu0
      %v2578 = vadd.f32 %v690, %v2577
      %v2579 = vpop.f32.mrf.mxu0
      %2580 = vmatprep.mubr.bf16.mxu0 0
      %2581 = vmatmul.mubr.bf16.gmra.mxu0 %v1856
      %v2582 = vpop.f32.mrf.mxu0
      %v2583 = vadd.f32 %v690, %v2582
      %v2584 = vpop.f32.mrf.mxu0
      %v2585 = vpop.f32.mrf.mxu0
      %v2586 = vadd.f32 %v690, %v2585
      %v2587 = vpop.f32.mrf.mxu0
      %2588 = vmatprep.mubr.bf16.mxu0 0
      %2589 = vmatmul.mubr.bf16.gmra.mxu0 %v1859
      %v2590 = vpop.f32.mrf.mxu0
      %v2591 = vadd.f32 %v690, %v2590
      %v2592 = vpop.f32.mrf.mxu0
      %v2593 = vpop.f32.mrf.mxu0
      %v2594 = vadd.f32 %v690, %v2593
      %v2595 = vpop.f32.mrf.mxu0
      %2596 = vmatprep.mubr.bf16.mxu0 0
      %2597 = vmatmul.mubr.bf16.gmra.mxu0 %v1862
      %v2598 = vpop.f32.mrf.mxu0
      %v2599 = vadd.f32 %v690, %v2598
      %v2600 = vpop.f32.mrf.mxu0
      %v2601 = vpop.f32.mrf.mxu0
      %v2602 = vadd.f32 %v690, %v2601
      %v2603 = vpop.f32.mrf.mxu0
      %2604 = vmatprep.mubr.bf16.mxu0 0
      %2605 = vmatmul.mubr.bf16.gmra.mxu0 %v1865
      %v2606 = vpop.f32.mrf.mxu0
      %v2607 = vadd.f32 %v690, %v2606
      %v2608 = vpop.f32.mrf.mxu0
      %v2609 = vpop.f32.mrf.mxu0
      %v2610 = vadd.f32 %v690, %v2609
      %v2611 = vpop.f32.mrf.mxu0
      %2612 = vmatprep.mubr.bf16.mxu0 0
      %2613 = vmatmul.mubr.bf16.gmra.mxu0 %v1868
      %v2614 = vpop.f32.mrf.mxu0
      %v2615 = vadd.f32 %v690, %v2614
      %v2616 = vpop.f32.mrf.mxu0
      %v2617 = vpop.f32.mrf.mxu0
      %v2618 = vadd.f32 %v690, %v2617
      %v2619 = vpop.f32.mrf.mxu0
      %2620 = vmatprep.mubr.bf16.mxu0 0
      %2621 = vmatmul.mubr.bf16.gmra.mxu0 %v1871
      %v2622 = vpop.f32.mrf.mxu0
      %v2623 = vadd.f32 %v690, %v2622
      %v2624 = vpop.f32.mrf.mxu0
      %v2625 = vpop.f32.mrf.mxu0
      %v2626 = vadd.f32 %v690, %v2625
      %v2627 = vpop.f32.mrf.mxu0
      %2628 = vmatprep.mubr.bf16.mxu0 0
      %2629 = vmatmul.mubr.bf16.gmra.mxu0 %v1874
      %v2630 = vpop.f32.mrf.mxu0
      %v2631 = vadd.f32 %v690, %v2630
      %v2632 = vpop.f32.mrf.mxu0
      %v2633 = vpop.f32.mrf.mxu0
      %v2634 = vadd.f32 %v690, %v2633
      %v2635 = vpop.f32.mrf.mxu0
      %2636 = vmatprep.mubr.bf16.mxu0 0
      %2637 = vmatmul.mubr.bf16.gmra.mxu0 %v1877
      %v2638 = vpop.f32.mrf.mxu0
      %v2639 = vadd.f32 %v690, %v2638
      %v2640 = vpop.f32.mrf.mxu0
      %v2641 = vpop.f32.mrf.mxu0
      %v2642 = vadd.f32 %v690, %v2641
      %v2643 = vpop.f32.mrf.mxu0
      %2644 = vmatprep.mubr.bf16.mxu0 0
      %2645 = vmatmul.mubr.bf16.gmra.mxu0 %v1880
      %v2646 = vpop.f32.mrf.mxu0
      %v2647 = vadd.f32 %v690, %v2646
      %v2648 = vpop.f32.mrf.mxu0
      %v2649 = vpop.f32.mrf.mxu0
      %v2650 = vadd.f32 %v690, %v2649
      %v2651 = vpop.f32.mrf.mxu0
      %2652 = vmatprep.mubr.bf16.mxu0 0
      %2653 = vmatmul.mubr.bf16.gmra.mxu0 %v1883
      %v2654 = vpop.f32.mrf.mxu0
      %v2655 = vadd.f32 %v690, %v2654
      %v2656 = vpop.f32.mrf.mxu0
      %v2657 = vpop.f32.mrf.mxu0
      %v2658 = vadd.f32 %v690, %v2657
      %v2659 = vpop.f32.mrf.mxu0
      %2660 = vmatprep.mubr.bf16.mxu0 0
      %2661 = vmatmul.mubr.bf16.gmra.mxu0 %v1886
      %v2662 = vpop.f32.mrf.mxu0
      %v2663 = vadd.f32 %v690, %v2662
      %v2664 = vpop.f32.mrf.mxu0
      %v2665 = vpop.f32.mrf.mxu0
      %v2666 = vadd.f32 %v690, %v2665
      %v2667 = vpop.f32.mrf.mxu0
      %2668 = vmatprep.mubr.bf16.mxu0 0
      %2669 = vmatmul.mubr.bf16.gmra.mxu0 %v1889
      %v2670 = vpop.f32.mrf.mxu0
      %v2671 = vadd.f32 %v690, %v2670
      %v2672 = vpop.f32.mrf.mxu0
      %v2673 = vpop.f32.mrf.mxu0
      %v2674 = vadd.f32 %v690, %v2673
      %v2675 = vpop.f32.mrf.mxu0
      %2676 = vmatprep.mubr.bf16.mxu0 0
      %2677 = vmatmul.mubr.bf16.gmra.mxu0 %v1892
      %v2678 = vpop.f32.mrf.mxu0
      %v2679 = vadd.f32 %v690, %v2678
      %v2680 = vpop.f32.mrf.mxu0
      %v2681 = vpop.f32.mrf.mxu0
      %v2682 = vadd.f32 %v690, %v2681
      %v2683 = vpop.f32.mrf.mxu0
      %2684 = vmatprep.mubr.bf16.mxu0 0
      %2685 = vmatmul.mubr.bf16.gmra.mxu0 %v1895
      %v2686 = vpop.f32.mrf.mxu0
      %v2687 = vadd.f32 %v690, %v2686
      %v2688 = vpop.f32.mrf.mxu0
      %v2689 = vpop.f32.mrf.mxu0
      %v2690 = vadd.f32 %v690, %v2689
      %v2691 = vpop.f32.mrf.mxu0
      %2692 = vmatprep.mubr.bf16.mxu0 0
      %2693 = vmatmul.mubr.bf16.gmra.mxu0 %v1898
      %v2694 = vpop.f32.mrf.mxu0
      %v2695 = vadd.f32 %v690, %v2694
      %v2696 = vpop.f32.mrf.mxu0
      %v2697 = vpop.f32.mrf.mxu0
      %v2698 = vadd.f32 %v690, %v2697
      %v2699 = vpop.f32.mrf.mxu0
      %2700 = vmatprep.mubr.bf16.mxu0 0
      %2701 = vmatmul.mubr.bf16.gmra.mxu0 %v1901
      %v2702 = vpop.f32.mrf.mxu0
      %v2703 = vadd.f32 %v690, %v2702
      %v2704 = vpop.f32.mrf.mxu0
      %v2705 = vpop.f32.mrf.mxu0
      %v2706 = vadd.f32 %v690, %v2705
      %v2707 = vpop.f32.mrf.mxu0
      %2708 = vmatprep.mubr.bf16.mxu0 0
      %2709 = vmatmul.mubr.bf16.gmra.mxu0 %v1904
      %v2710 = vpop.f32.mrf.mxu0
      %v2711 = vadd.f32 %v690, %v2710
      %v2712 = vpop.f32.mrf.mxu0
      %v2713 = vpop.f32.mrf.mxu0
      %v2714 = vadd.f32 %v690, %v2713
      %v2715 = vpop.f32.mrf.mxu0
      %2716 = vmatprep.mubr.bf16.mxu0 0
      %2717 = vmatmul.mubr.bf16.gmra.mxu0 %v1907
      %v2718 = vpop.f32.mrf.mxu0
      %v2719 = vadd.f32 %v690, %v2718
      %v2720 = vpop.f32.mrf.mxu0
      %v2721 = vpop.f32.mrf.mxu0
      %v2722 = vadd.f32 %v690, %v2721
      %v2723 = vpop.f32.mrf.mxu0
      %2724 = vmatprep.mubr.bf16.mxu0 0
      %2725 = vmatmul.mubr.bf16.gmra.mxu0 %v1910
      %v2726 = vpop.f32.mrf.mxu0
      %v2727 = vadd.f32 %v690, %v2726
      %v2728 = vpop.f32.mrf.mxu0
      %v2729 = vpop.f32.mrf.mxu0
      %v2730 = vadd.f32 %v690, %v2729
      %v2731 = vpop.f32.mrf.mxu0
      %2732 = vmatprep.mubr.bf16.mxu0 0
      %2733 = vmatmul.mubr.bf16.gmra.mxu0 %v1913
      %v2734 = vpop.f32.mrf.mxu0
      %v2735 = vadd.f32 %v690, %v2734
      %v2736 = vpop.f32.mrf.mxu0
      %v2737 = vpop.f32.mrf.mxu0
      %v2738 = vadd.f32 %v690, %v2737
      %v2739 = vpop.f32.mrf.mxu0
      %2740 = vmatprep.mubr.bf16.mxu0 0
      %2741 = vmatmul.mubr.bf16.gmra.mxu0 %v1916
      %v2742 = vpop.f32.mrf.mxu0
      %v2743 = vadd.f32 %v690, %v2742
      %v2744 = vpop.f32.mrf.mxu0
      %v2745 = vpop.f32.mrf.mxu0
      %v2746 = vadd.f32 %v690, %v2745
      %v2747 = vpop.f32.mrf.mxu0
      %2748 = vmatprep.mubr.bf16.mxu0 0
      %2749 = vmatmul.mubr.bf16.gmra.mxu0 %v1919
      %v2750 = vpop.f32.mrf.mxu0
      %v2751 = vadd.f32 %v690, %v2750
      %v2752 = vpop.f32.mrf.mxu0
      %v2753 = vpop.f32.mrf.mxu0
      %v2754 = vadd.f32 %v690, %v2753
      %v2755 = vpop.f32.mrf.mxu0
      %2756 = vmatprep.mubr.bf16.mxu0 0
      %2757 = vmatmul.mubr.bf16.gmra.mxu0 %v1922
      %v2758 = vpop.f32.mrf.mxu0
      %v2759 = vadd.f32 %v690, %v2758
      %v2760 = vpop.f32.mrf.mxu0
      %v2761 = vpop.f32.mrf.mxu0
      %v2762 = vadd.f32 %v690, %v2761
      %v2763 = vpop.f32.mrf.mxu0
      %2764 = vmatprep.mubr.bf16.mxu0 0
      %2765 = vmatmul.mubr.bf16.gmra.mxu0 %v1925
      %v2766 = vpop.f32.mrf.mxu0
      %v2767 = vadd.f32 %v690, %v2766
      %v2768 = vpop.f32.mrf.mxu0
      %v2769 = vpop.f32.mrf.mxu0
      %v2770 = vadd.f32 %v690, %v2769
      %v2771 = vpop.f32.mrf.mxu0
      %2772 = vmatprep.mubr.bf16.mxu0 0
      %2773 = vmatmul.mubr.bf16.gmra.mxu0 %v1928
      %v2774 = vpop.f32.mrf.mxu0
      %v2775 = vadd.f32 %v690, %v2774
      %v2776 = vpop.f32.mrf.mxu0
      %v2777 = vpop.f32.mrf.mxu0
      %v2778 = vadd.f32 %v690, %v2777
      %v2779 = vpop.f32.mrf.mxu0
      %2780 = vmatprep.mubr.bf16.mxu0 0
      %2781 = vmatmul.mubr.bf16.gmra.mxu0 %v1931
      %v2782 = vpop.f32.mrf.mxu0
      %v2783 = vadd.f32 %v690, %v2782
      %v2784 = vpop.f32.mrf.mxu0
      %v2785 = vpop.f32.mrf.mxu0
      %v2786 = vadd.f32 %v690, %v2785
      %v2787 = vpop.f32.mrf.mxu0
      %2788 = vmatprep.mubr.bf16.mxu0 0
      %2789 = vmatmul.mubr.bf16.gmra.mxu0 %v1934
      %v2790 = vpop.f32.mrf.mxu0
      %v2791 = vadd.f32 %v690, %v2790
      %v2792 = vpop.f32.mrf.mxu0
      %v2793 = vpop.f32.mrf.mxu0
      %v2794 = vadd.f32 %v690, %v2793
      %v2795 = vpop.f32.mrf.mxu0
      %2796 = vmatprep.mubr.bf16.mxu0 0
      %2797 = vmatmul.mubr.bf16.gmra.mxu0 %v1937
      %v2798 = vpop.f32.mrf.mxu0
      %v2799 = vadd.f32 %v690, %v2798
      %v2800 = vpop.f32.mrf.mxu0
      %v2801 = vpop.f32.mrf.mxu0
      %v2802 = vadd.f32 %v690, %v2801
      %v2803 = vpop.f32.mrf.mxu0
      %2804 = vmatprep.mubr.bf16.mxu0 0
      %2805 = vmatmul.mubr.bf16.gmra.mxu0 %v1940
      %v2806 = vpop.f32.mrf.mxu0
      %v2807 = vadd.f32 %v690, %v2806
      %v2808 = vpop.f32.mrf.mxu0
      %v2809 = vpop.f32.mrf.mxu0
      %v2810 = vadd.f32 %v690, %v2809
      %v2811 = vpop.f32.mrf.mxu0
      %2812 = vmatprep.mubr.bf16.mxu0 0
      %2813 = vmatmul.mubr.bf16.gmra.mxu0 %v1943
      %v2814 = vpop.f32.mrf.mxu0
      %v2815 = vadd.f32 %v690, %v2814
      %v2816 = vpop.f32.mrf.mxu0
      %v2817 = vpop.f32.mrf.mxu0
      %v2818 = vadd.f32 %v690, %v2817
      %v2819 = vpop.f32.mrf.mxu0
      %2820 = vmatprep.mubr.bf16.mxu0 0
      %2821 = vmatmul.mubr.bf16.gmra.mxu0 %v1946
      %v2822 = vpop.f32.mrf.mxu0
      %v2823 = vadd.f32 %v690, %v2822
      %v2824 = vpop.f32.mrf.mxu0
      %v2825 = vpop.f32.mrf.mxu0
      %v2826 = vadd.f32 %v690, %v2825
      %v2827 = vpop.f32.mrf.mxu0
      %2828 = vmatprep.mubr.bf16.mxu0 0
      %2829 = vmatmul.mubr.bf16.gmra.mxu0 %v1949
      %v2830 = vpop.f32.mrf.mxu0
      %v2831 = vadd.f32 %v690, %v2830
      %v2832 = vpop.f32.mrf.mxu0
      %v2833 = vpop.f32.mrf.mxu0
      %v2834 = vadd.f32 %v690, %v2833
      %v2835 = vpop.f32.mrf.mxu0
      %2836 = vmatprep.mubr.bf16.mxu0 0
      %2837 = vmatmul.mubr.bf16.gmra.mxu0 %v1952
      %v2838 = vpop.f32.mrf.mxu0
      %v2839 = vadd.f32 %v690, %v2838
      %v2840 = vpop.f32.mrf.mxu0
      %v2841 = vpop.f32.mrf.mxu0
      %v2842 = vadd.f32 %v690, %v2841
      %v2843 = vpop.f32.mrf.mxu0
      %2844 = vmatprep.mubr.bf16.mxu0 0
      %2845 = vmatmul.mubr.bf16.gmra.mxu0 %v1955
      %v2846 = vpop.f32.mrf.mxu0
      %v2847 = vadd.f32 %v690, %v2846
      %v2848 = vpop.f32.mrf.mxu0
      %v2849 = vpop.f32.mrf.mxu0
      %v2850 = vadd.f32 %v690, %v2849
      %v2851 = vpop.f32.mrf.mxu0
      %2852 = vmatprep.mubr.bf16.mxu0 0
      %2853 = vmatmul.mubr.bf16.gmra.mxu0 %v1958
      %v2854 = vpop.f32.mrf.mxu0
      %v2855 = vadd.f32 %v690, %v2854
      %v2856 = vpop.f32.mrf.mxu0
      %v2857 = vpop.f32.mrf.mxu0
      %v2858 = vadd.f32 %v690, %v2857
      %v2859 = vpop.f32.mrf.mxu0
      %2860 = vmatprep.mubr.bf16.mxu0 0
      %2861 = vmatmul.mubr.bf16.gmra.mxu0 %v1961
      %v2862 = vpop.f32.mrf.mxu0
      %v2863 = vadd.f32 %v690, %v2862
      %v2864 = vpop.f32.mrf.mxu0
      %v2865 = vpop.f32.mrf.mxu0
      %v2866 = vadd.f32 %v690, %v2865
      %v2867 = vpop.f32.mrf.mxu0
      %2868 = vmatprep.mubr.bf16.mxu0 0
      %2869 = vmatmul.mubr.bf16.gmra.mxu0 %v1964
      %v2870 = vpop.f32.mrf.mxu0
      %v2871 = vadd.f32 %v690, %v2870
      %v2872 = vpop.f32.mrf.mxu0
      %v2873 = vpop.f32.mrf.mxu0
      %v2874 = vadd.f32 %v690, %v2873
      %v2875 = vpop.f32.mrf.mxu0
      %2876 = vmatprep.mubr.bf16.mxu0 0
      %2877 = vmatmul.mubr.bf16.gmra.mxu0 %v1967
      %v2878 = vpop.f32.mrf.mxu0
      %v2879 = vadd.f32 %v690, %v2878
      %v2880 = vpop.f32.mrf.mxu0
      %v2881 = vpop.f32.mrf.mxu0
      %v2882 = vadd.f32 %v690, %v2881
      %v2883 = vpop.f32.mrf.mxu0
      %2884 = vmatprep.mubr.bf16.mxu0 0
      %2885 = vmatmul.mubr.bf16.gmra.mxu0 %v1970
      %v2886 = vpop.f32.mrf.mxu0
      %v2887 = vadd.f32 %v690, %v2886
      %v2888 = vpop.f32.mrf.mxu0
      %v2889 = vpop.f32.mrf.mxu0
      %v2890 = vadd.f32 %v690, %v2889
      %v2891 = vpop.f32.mrf.mxu0
      %2892 = vmatprep.mubr.bf16.mxu0 0
      %2893 = vmatmul.mubr.bf16.gmra.mxu0 %v1973
      %v2894 = vpop.f32.mrf.mxu0
      %v2895 = vadd.f32 %v690, %v2894
      %v2896 = vpop.f32.mrf.mxu0
      %v2897 = vpop.f32.mrf.mxu0
      %v2898 = vadd.f32 %v690, %v2897
      %v2899 = vpop.f32.mrf.mxu0
      %2900 = vmatprep.mubr.bf16.mxu0 0
      %2901 = vmatmul.mubr.bf16.gmra.mxu0 %v1976
      %v2902 = vpop.f32.mrf.mxu0
      %v2903 = vadd.f32 %v690, %v2902
      %v2904 = vpop.f32.mrf.mxu0
      %v2905 = vpop.f32.mrf.mxu0
      %v2906 = vadd.f32 %v690, %v2905
      %v2907 = vpop.f32.mrf.mxu0
      %2908 = vmatprep.mubr.bf16.mxu0 0
      %2909 = vmatmul.mubr.bf16.gmra.mxu0 %v1979
      %v2910 = vpop.f32.mrf.mxu0
      %v2911 = vadd.f32 %v690, %v2910
      %v2912 = vpop.f32.mrf.mxu0
      %v2913 = vpop.f32.mrf.mxu0
      %v2914 = vadd.f32 %v690, %v2913
      %v2915 = vpop.f32.mrf.mxu0
      %2916 = vmatprep.mubr.bf16.mxu0 0
      %2917 = vmatmul.mubr.bf16.gmra.mxu0 %v1982
      %v2918 = vpop.f32.mrf.mxu0
      %v2919 = vadd.f32 %v690, %v2918
      %v2920 = vpop.f32.mrf.mxu0
      %v2921 = vpop.f32.mrf.mxu0
      %v2922 = vadd.f32 %v690, %v2921
      %v2923 = vpop.f32.mrf.mxu0
      %2924 = vmatprep.mubr.bf16.mxu0 0
      %2925 = vmatmul.mubr.bf16.gmra.mxu0 %v1985
      %v2926 = vpop.f32.mrf.mxu0
      %v2927 = vadd.f32 %v690, %v2926
      %v2928 = vpop.f32.mrf.mxu0
      %v2929 = vpop.f32.mrf.mxu0
      %v2930 = vadd.f32 %v690, %v2929
      %v2931 = vpop.f32.mrf.mxu0
      %2932 = vmatprep.mubr.bf16.mxu0 0
      %2933 = vmatmul.mubr.bf16.gmra.mxu0 %v1988
      %v2934 = vpop.f32.mrf.mxu0
      %v2935 = vadd.f32 %v690, %v2934
      %v2936 = vpop.f32.mrf.mxu0
      %v2937 = vpop.f32.mrf.mxu0
      %v2938 = vadd.f32 %v690, %v2937
      %v2939 = vpop.f32.mrf.mxu0
      %2940 = vmatprep.mubr.bf16.mxu0 0
      %2941 = vmatmul.mubr.bf16.gmra.mxu0 %v1991
      %v2942 = vpop.f32.mrf.mxu0
      %v2943 = vadd.f32 %v690, %v2942
      %v2944 = vpop.f32.mrf.mxu0
      %v2945 = vpop.f32.mrf.mxu0
      %v2946 = vadd.f32 %v690, %v2945
      %v2947 = vpop.f32.mrf.mxu0
      %2948 = vmatprep.mubr.bf16.mxu0 0
      %2949 = vmatmul.mubr.bf16.gmra.mxu0 %v1994
      %v2950 = vpop.f32.mrf.mxu0
      %v2951 = vadd.f32 %v690, %v2950
      %v2952 = vpop.f32.mrf.mxu0
      %v2953 = vpop.f32.mrf.mxu0
      %v2954 = vadd.f32 %v690, %v2953
      %v2955 = vpop.f32.mrf.mxu0
      %2956 = vmatprep.mubr.bf16.mxu0 0
      %2957 = vmatmul.mubr.bf16.gmra.mxu0 %v1997
      %v2958 = vpop.f32.mrf.mxu0
      %v2959 = vadd.f32 %v690, %v2958
      %v2960 = vpop.f32.mrf.mxu0
      %v2961 = vpop.f32.mrf.mxu0
      %v2962 = vadd.f32 %v690, %v2961
      %v2963 = vpop.f32.mrf.mxu0
      %2964 = vmatprep.mubr.bf16.mxu0 0
      %2965 = vmatmul.mubr.bf16.gmra.mxu0 %v2000
      %v2966 = vpop.f32.mrf.mxu0
      %v2967 = vadd.f32 %v690, %v2966
      %v2968 = vpop.f32.mrf.mxu0
      %v2969 = vpop.f32.mrf.mxu0
      %v2970 = vadd.f32 %v690, %v2969
      %v2971 = vpop.f32.mrf.mxu0
      %2972 = vmatprep.mubr.bf16.mxu0 0
      %2973 = vmatmul.mubr.bf16.gmra.mxu0 %v2003
      %v2974 = vpop.f32.mrf.mxu0
      %v2975 = vadd.f32 %v690, %v2974
      %v2976 = vpop.f32.mrf.mxu0
      %v2977 = vpop.f32.mrf.mxu0
      %v2978 = vadd.f32 %v690, %v2977
      %v2979 = vpop.f32.mrf.mxu0
      %2980 = vmatprep.mubr.bf16.mxu0 0
      %2981 = vmatmul.mubr.bf16.gmra.mxu0 %v2006
      %v2982 = vpop.f32.mrf.mxu0
      %v2983 = vadd.f32 %v690, %v2982
      %v2984 = vpop.f32.mrf.mxu0
      %v2985 = vpop.f32.mrf.mxu0
      %v2986 = vadd.f32 %v690, %v2985
      %v2987 = vpop.f32.mrf.mxu0
      %2988 = vmatprep.mubr.bf16.mxu0 0
      %2989 = vmatmul.mubr.bf16.gmra.mxu0 %v2009
      %v2990 = vpop.f32.mrf.mxu0
      %v2991 = vadd.f32 %v690, %v2990
      %v2992 = vpop.f32.mrf.mxu0
      %v2993 = vpop.f32.mrf.mxu0
      %v2994 = vadd.f32 %v690, %v2993
      %v2995 = vpop.f32.mrf.mxu0
      %2996 = vmatprep.mubr.bf16.mxu0 0
      %2997 = vmatmul.mubr.bf16.gmra.mxu0 %v2012
      %v2998 = vpop.f32.mrf.mxu0
      %v2999 = vadd.f32 %v690, %v2998
      %v3000 = vpop.f32.mrf.mxu0
      %v3001 = vpop.f32.mrf.mxu0
      %v3002 = vadd.f32 %v690, %v3001
      %v3003 = vpop.f32.mrf.mxu0
      %3004 = vmatprep.mubr.bf16.mxu0 0
      %3005 = vmatmul.mubr.bf16.gmra.mxu0 %v2015
      %v3006 = vpop.f32.mrf.mxu0
      %v3007 = vadd.f32 %v690, %v3006
      %v3008 = vpop.f32.mrf.mxu0
      %v3009 = vpop.f32.mrf.mxu0
      %v3010 = vadd.f32 %v690, %v3009
      %v3011 = vpop.f32.mrf.mxu0
      %3012 = vmatprep.mubr.bf16.mxu0 0
      %3013 = vmatmul.mubr.bf16.gmra.mxu0 %v2018
      %v3014 = vpop.f32.mrf.mxu0
      %v3015 = vadd.f32 %v690, %v3014
      %v3016 = vpop.f32.mrf.mxu0
      %v3017 = vpop.f32.mrf.mxu0
      %v3018 = vadd.f32 %v690, %v3017
      %v3019 = vpop.f32.mrf.mxu0
      %3020 = vmatprep.mubr.bf16.mxu0 0
      %3021 = vmatmul.mubr.bf16.gmra.mxu0 %v2021
      %v3022 = vpop.f32.mrf.mxu0
      %v3023 = vadd.f32 %v690, %v3022
      %v3024 = vpop.f32.mrf.mxu0
      %v3025 = vpop.f32.mrf.mxu0
      %v3026 = vadd.f32 %v690, %v3025
      %v3027 = vpop.f32.mrf.mxu0
      %3028 = vmatprep.mubr.bf16.mxu0 0
      %3029 = vmatmul.mubr.bf16.gmra.mxu0 %v2024
      %v3030 = vpop.f32.mrf.mxu0
      %v3031 = vadd.f32 %v690, %v3030
      %v3032 = vpop.f32.mrf.mxu0
      %v3033 = vpop.f32.mrf.mxu0
      %v3034 = vadd.f32 %v690, %v3033
      %v3035 = vpop.f32.mrf.mxu0
      %3036 = vmatprep.mubr.bf16.mxu0 0
      %3037 = vmatmul.mubr.bf16.gmra.mxu0 %v2027
      %v3038 = vpop.f32.mrf.mxu0
      %v3039 = vadd.f32 %v690, %v3038
      %v3040 = vpop.f32.mrf.mxu0
      %v3041 = vpop.f32.mrf.mxu0
      %v3042 = vadd.f32 %v690, %v3041
      %v3043 = vpop.f32.mrf.mxu0
      %3044 = vmatprep.mubr.bf16.mxu0 0
      %3045 = vmatmul.mubr.bf16.gmra.mxu0 %v2030
      %v3046 = vpop.f32.mrf.mxu0
      %v3047 = vadd.f32 %v690, %v3046
      %v3048 = vpop.f32.mrf.mxu0
      %v3049 = vpop.f32.mrf.mxu0
      %v3050 = vadd.f32 %v690, %v3049
      %v3051 = vpop.f32.mrf.mxu0
      %3052 = vmatprep.mubr.bf16.mxu0 0
      %3053 = vmatmul.mubr.bf16.gmra.mxu0 %v2033
      %v3054 = vpop.f32.mrf.mxu0
      %v3055 = vadd.f32 %v690, %v3054
      %v3056 = vpop.f32.mrf.mxu0
      %v3057 = vpop.f32.mrf.mxu0
      %v3058 = vadd.f32 %v690, %v3057
      %v3059 = vpop.f32.mrf.mxu0
      %3060 = vmatprep.mubr.bf16.mxu0 0
      %3061 = vmatmul.mubr.bf16.gmra.mxu0 %v2036
      %v3062 = vpop.f32.mrf.mxu0
      %v3063 = vadd.f32 %v690, %v3062
      %v3064 = vpop.f32.mrf.mxu0
      %v3065 = vpop.f32.mrf.mxu0
      %v3066 = vadd.f32 %v690, %v3065
      %v3067 = vpop.f32.mrf.mxu0
      %3068 = vmatprep.mubr.bf16.mxu0 0
      %3069 = vmatmul.mubr.bf16.gmra.mxu0 %v2039
      %v3070 = vpop.f32.mrf.mxu0
      %v3071 = vadd.f32 %v690, %v3070
      %v3072 = vpop.f32.mrf.mxu0
      %v3073 = vpop.f32.mrf.mxu0
      %v3074 = vadd.f32 %v690, %v3073
      %v3075 = vpop.f32.mrf.mxu0
      %3076 = vmatprep.mubr.bf16.mxu0 0
      %3077 = vmatmul.mubr.bf16.gmra.mxu0 %v2042
      %v3078 = vpop.f32.mrf.mxu0
      %v3079 = vadd.f32 %v690, %v3078
      %v3080 = vpop.f32.mrf.mxu0
      %v3081 = vpop.f32.mrf.mxu0
      %v3082 = vadd.f32 %v690, %v3081
      %v3083 = vpop.f32.mrf.mxu0
      %3084 = vmatprep.mubr.bf16.mxu0 0
      %3085 = vmatmul.mubr.bf16.gmra.mxu0 %v2045
      %v3086 = vpop.f32.mrf.mxu0
      %v3087 = vadd.f32 %v690, %v3086
      %v3088 = vpop.f32.mrf.mxu0
      %v3089 = vpop.f32.mrf.mxu0
      %v3090 = vadd.f32 %v690, %v3089
      %v3091 = vpop.f32.mrf.mxu0
      %3092 = vmatprep.mubr.bf16.mxu0 0
      %3093 = vmatmul.mubr.bf16.gmra.mxu0 %v2048
      %v3094 = vpop.f32.mrf.mxu0
      %v3095 = vadd.f32 %v690, %v3094
      %v3096 = vpop.f32.mrf.mxu0
      %v3097 = vpop.f32.mrf.mxu0
      %v3098 = vadd.f32 %v690, %v3097
      %v3099 = vpop.f32.mrf.mxu0
      %3100 = vmatprep.mubr.bf16.mxu0 0
      %3101 = vmatmul.mubr.bf16.gmra.mxu0 %v2051
      %v3102 = vpop.f32.mrf.mxu0
      %v3103 = vadd.f32 %v690, %v3102
      %v3104 = vpop.f32.mrf.mxu0
      %v3105 = vpop.f32.mrf.mxu0
      %v3106 = vadd.f32 %v690, %v3105
      %v3107 = vpop.f32.mrf.mxu0
      %3108 = vmatprep.mubr.bf16.mxu0 0
      %3109 = vmatmul.mubr.bf16.gmra.mxu0 %v2054
      %v3110 = vpop.f32.mrf.mxu0
      %v3111 = vadd.f32 %v690, %v3110
      %v3112 = vpop.f32.mrf.mxu0
      %v3113 = vpop.f32.mrf.mxu0
      %v3114 = vadd.f32 %v690, %v3113
      %v3115 = vpop.f32.mrf.mxu0
      %3116 = vmatprep.mubr.bf16.mxu0 0
      %3117 = vmatmul.mubr.bf16.gmra.mxu0 %v2057
      %v3118 = vpop.f32.mrf.mxu0
      %v3119 = vadd.f32 %v690, %v3118
      %v3120 = vpop.f32.mrf.mxu0
      %v3121 = vpop.f32.mrf.mxu0
      %v3122 = vadd.f32 %v690, %v3121
      %v3123 = vpop.f32.mrf.mxu0
      %3124 = vmatprep.mubr.bf16.mxu0 0
      %3125 = vmatmul.mubr.bf16.gmra.mxu0 %v2060
      %v3126 = vpop.f32.mrf.mxu0
      %v3127 = vadd.f32 %v690, %v3126
      %v3128 = vpop.f32.mrf.mxu0
      %v3129 = vpop.f32.mrf.mxu0
      %v3130 = vadd.f32 %v690, %v3129
      %v3131 = vpop.f32.mrf.mxu0
      %3132 = vmatprep.mubr.bf16.mxu0 0
      %3133 = vmatmul.mubr.bf16.gmra.mxu0 %v2063
      %v3134 = vpop.f32.mrf.mxu0
      %v3135 = vadd.f32 %v690, %v3134
      %v3136 = vpop.f32.mrf.mxu0
      %v3137 = vpop.f32.mrf.mxu0
      %v3138 = vadd.f32 %v690, %v3137
      %v3139 = vpop.f32.mrf.mxu0
      %3140 = vmatprep.mubr.bf16.mxu0 0
      %3141 = vmatmul.mubr.bf16.gmra.mxu0 %v2066
      %v3142 = vpop.f32.mrf.mxu0
      %v3143 = vadd.f32 %v690, %v3142
      %v3144 = vpop.f32.mrf.mxu0
      %v3145 = vpop.f32.mrf.mxu0
      %v3146 = vadd.f32 %v690, %v3145
      %v3147 = vpop.f32.mrf.mxu0
      %3148 = vmatprep.mubr.bf16.mxu0 0
      %3149 = vmatmul.mubr.bf16.gmra.mxu0 %v2069
      %v3150 = vpop.f32.mrf.mxu0
      %v3151 = vadd.f32 %v690, %v3150
      %v3152 = vpop.f32.mrf.mxu0
      %v3153 = vpop.f32.mrf.mxu0
      %v3154 = vadd.f32 %v690, %v3153
      %v3155 = vpop.f32.mrf.mxu0
      %3156 = vmatprep.mubr.bf16.mxu0 0
      %3157 = vmatmul.mubr.bf16.gmra.mxu0 %v2072
      %v3158 = vpop.f32.mrf.mxu0
      %v3159 = vadd.f32 %v690, %v3158
      %v3160 = vpop.f32.mrf.mxu0
      %v3161 = vpop.f32.mrf.mxu0
      %v3162 = vadd.f32 %v690, %v3161
      %v3163 = vpop.f32.mrf.mxu0
      %3164 = vmatprep.mubr.bf16.mxu0 0
      %3165 = vmatmul.mubr.bf16.gmra.mxu0 %v2075
      %v3166 = vpop.f32.mrf.mxu0
      %v3167 = vadd.f32 %v690, %v3166
      %v3168 = vpop.f32.mrf.mxu0
      %v3169 = vpop.f32.mrf.mxu0
      %v3170 = vadd.f32 %v690, %v3169
      %v3171 = vpop.f32.mrf.mxu0
      %3172 = vmatprep.mubr.bf16.mxu0 0
      %3173 = vmatmul.mubr.bf16.gmra.mxu0 %v2078
      %v3174 = vpop.f32.mrf.mxu0
      %v3175 = vadd.f32 %v690, %v3174
      %v3176 = vpop.f32.mrf.mxu0
      %v3177 = vpop.f32.mrf.mxu0
      %v3178 = vadd.f32 %v690, %v3177
      %v3179 = vpop.f32.mrf.mxu0
      %3180 = vmatprep.mubr.bf16.mxu0 0
      %3181 = vmatmul.mubr.bf16.gmra.mxu0 %v2081
      %v3182 = vpop.f32.mrf.mxu0
      %v3183 = vadd.f32 %v690, %v3182
      %v3184 = vpop.f32.mrf.mxu0
      %v3185 = vpop.f32.mrf.mxu0
      %v3186 = vadd.f32 %v690, %v3185
      %v3187 = vpop.f32.mrf.mxu0
      %3188 = vmatprep.mubr.bf16.mxu0 0
      %3189 = vmatmul.mubr.bf16.gmra.mxu0 %v2084
      %v3190 = vpop.f32.mrf.mxu0
      %v3191 = vadd.f32 %v690, %v3190
      %v3192 = vpop.f32.mrf.mxu0
      %v3193 = vpop.f32.mrf.mxu0
      %v3194 = vadd.f32 %v690, %v3193
      %v3195 = vpop.f32.mrf.mxu0
      %3196 = vmatprep.mubr.bf16.mxu0 0
      %3197 = vmatmul.mubr.bf16.gmra.mxu0 %v2087
      %v3198 = vpop.f32.mrf.mxu0
      %v3199 = vadd.f32 %v690, %v3198
      %v3200 = vpop.f32.mrf.mxu0
      %v3201 = vpop.f32.mrf.mxu0
      %v3202 = vadd.f32 %v690, %v3201
      %v3203 = vpop.f32.mrf.mxu0
      %3204 = vmatprep.mubr.bf16.mxu0 0
      %3205 = vmatmul.mubr.bf16.gmra.mxu0 %v2090
      %v3206 = vpop.f32.mrf.mxu0
      %v3207 = vadd.f32 %v690, %v3206
      %v3208 = vpop.f32.mrf.mxu0
      %v3209 = vpop.f32.mrf.mxu0
      %v3210 = vadd.f32 %v690, %v3209
      %v3211 = vpop.f32.mrf.mxu0
      %3212 = vmatprep.mubr.bf16.mxu0 0
      %3213 = vmatmul.mubr.bf16.gmra.mxu0 %v2093
      %v3214 = vpop.f32.mrf.mxu0
      %v3215 = vadd.f32 %v690, %v3214
      %v3216 = vpop.f32.mrf.mxu0
      %v3217 = vpop.f32.mrf.mxu0
      %v3218 = vadd.f32 %v690, %v3217
      %v3219 = vpop.f32.mrf.mxu0
      %3220 = vmatprep.mubr.bf16.mxu0 0
      %3221 = vmatmul.mubr.bf16.gmra.mxu0 %v2096
      %v3222 = vpop.f32.mrf.mxu0
      %v3223 = vadd.f32 %v690, %v3222
      %v3224 = vpop.f32.mrf.mxu0
      %v3225 = vpop.f32.mrf.mxu0
      %v3226 = vadd.f32 %v690, %v3225
      %v3227 = vpop.f32.mrf.mxu0
      %3228 = vmatprep.mubr.bf16.mxu0 0
      %3229 = vmatmul.mubr.bf16.gmra.mxu0 %v2099
      %v3230 = vpop.f32.mrf.mxu0
      %v3231 = vadd.f32 %v690, %v3230
      %v3232 = vpop.f32.mrf.mxu0
      %v3233 = vpop.f32.mrf.mxu0
      %v3234 = vadd.f32 %v690, %v3233
      %v3235 = vpop.f32.mrf.mxu0
      %3236 = vmatprep.mubr.bf16.mxu0 0
      %3237 = vmatmul.mubr.bf16.gmra.mxu0 %v2102
      %v3238 = vpop.f32.mrf.mxu0
      %v3239 = vadd.f32 %v690, %v3238
      %v3240 = vpop.f32.mrf.mxu0
      %v3241 = vpop.f32.mrf.mxu0
      %v3242 = vadd.f32 %v690, %v3241
      %v3243 = vpop.f32.mrf.mxu0
      %3244 = vmatprep.mubr.bf16.mxu0 0
      %3245 = vmatmul.mubr.bf16.gmra.mxu0 %v2105
      %v3246 = vpop.f32.mrf.mxu0
      %v3247 = vadd.f32 %v690, %v3246
      %v3248 = vpop.f32.mrf.mxu0
      %v3249 = vpop.f32.mrf.mxu0
      %v3250 = vadd.f32 %v690, %v3249
      %v3251 = vpop.f32.mrf.mxu0
      %3252 = vmatprep.mubr.bf16.mxu0 0
      %3253 = vmatmul.mubr.bf16.gmra.mxu0 %v2108
      %v3254 = vpop.f32.mrf.mxu0
      %v3255 = vadd.f32 %v690, %v3254
      %v3256 = vpop.f32.mrf.mxu0
      %v3257 = vpop.f32.mrf.mxu0
      %v3258 = vadd.f32 %v690, %v3257
      %v3259 = vpop.f32.mrf.mxu0
      %3260 = vmatprep.mubr.bf16.mxu0 0
      %3261 = vmatmul.mubr.bf16.gmra.mxu0 %v2111
      %v3262 = vpop.f32.mrf.mxu0
      %v3263 = vadd.f32 %v690, %v3262
      %v3264 = vpop.f32.mrf.mxu0
      %v3265 = vpop.f32.mrf.mxu0
      %v3266 = vadd.f32 %v690, %v3265
      %v3267 = vpop.f32.mrf.mxu0
      %3268 = vmatprep.mubr.bf16.mxu0 0
      %3269 = vmatmul.mubr.bf16.gmra.mxu0 %v2114
      %v3270 = vpop.f32.mrf.mxu0
      %v3271 = vadd.f32 %v690, %v3270
      %v3272 = vpop.f32.mrf.mxu0
      %v3273 = vpop.f32.mrf.mxu0
      %v3274 = vadd.f32 %v690, %v3273
      %v3275 = vpop.f32.mrf.mxu0
      %3276 = vmatprep.mubr.bf16.mxu0 0
      %3277 = vmatmul.mubr.bf16.gmra.mxu0 %v2117
      %v3278 = vpop.f32.mrf.mxu0
      %v3279 = vadd.f32 %v690, %v3278
      %v3280 = vpop.f32.mrf.mxu0
      %v3281 = vpop.f32.mrf.mxu0
      %v3282 = vadd.f32 %v690, %v3281
      %v3283 = vpop.f32.mrf.mxu0
      %3284 = vmatprep.mubr.bf16.mxu0 0
      %3285 = vmatmul.mubr.bf16.gmra.mxu0 %v2120
      %v3286 = vpop.f32.mrf.mxu0
      %v3287 = vadd.f32 %v690, %v3286
      %v3288 = vpop.f32.mrf.mxu0
      %v3289 = vpop.f32.mrf.mxu0
      %v3290 = vadd.f32 %v690, %v3289
      %v3291 = vpop.f32.mrf.mxu0
      %3292 = vmatprep.mubr.bf16.mxu0 0
      %3293 = vmatmul.mubr.bf16.gmra.mxu0 %v2123
      %v3294 = vpop.f32.mrf.mxu0
      %v3295 = vadd.f32 %v690, %v3294
      %v3296 = vpop.f32.mrf.mxu0
      %v3297 = vpop.f32.mrf.mxu0
      %v3298 = vadd.f32 %v690, %v3297
      %v3299 = vpop.f32.mrf.mxu0
      %3300 = vmatprep.mubr.bf16.mxu0 0
      %3301 = vmatmul.mubr.bf16.gmra.mxu0 %v2126
      %v3302 = vpop.f32.mrf.mxu0
      %v3303 = vadd.f32 %v690, %v3302
      %v3304 = vpop.f32.mrf.mxu0
      %v3305 = vpop.f32.mrf.mxu0
      %v3306 = vadd.f32 %v690, %v3305
      %v3307 = vpop.f32.mrf.mxu0
      %3308 = vmatprep.mubr.bf16.mxu0 0
      %3309 = vmatmul.mubr.bf16.gmra.mxu0 %v2129
      %v3310 = vpop.f32.mrf.mxu0
      %v3311 = vadd.f32 %v690, %v3310
      %v3312 = vpop.f32.mrf.mxu0
      %v3313 = vpop.f32.mrf.mxu0
      %v3314 = vadd.f32 %v690, %v3313
      %v3315 = vpop.f32.mrf.mxu0
      %3316 = vmatprep.mubr.bf16.mxu0 0
      %3317 = vmatmul.mubr.bf16.gmra.mxu0 %v2132
      %v3318 = vpop.f32.mrf.mxu0
      %v3319 = vadd.f32 %v690, %v3318
      %v3320 = vpop.f32.mrf.mxu0
      %v3321 = vpop.f32.mrf.mxu0
      %v3322 = vadd.f32 %v690, %v3321
      %v3323 = vpop.f32.mrf.mxu0
      %3324 = vmatprep.mubr.bf16.mxu0 0
      %3325 = vmatmul.mubr.bf16.gmra.mxu0 %v2135
      %v3326 = vpop.f32.mrf.mxu0
      %v3327 = vadd.f32 %v690, %v3326
      %v3328 = vpop.f32.mrf.mxu0
      %v3329 = vpop.f32.mrf.mxu0
      %v3330 = vadd.f32 %v690, %v3329
      %v3331 = vpop.f32.mrf.mxu0
      %3332 = vmatprep.mubr.bf16.mxu0 0
      %3333 = vmatmul.mubr.bf16.gmra.mxu0 %v2138
      %v3334 = vpop.f32.mrf.mxu0
      %v3335 = vadd.f32 %v690, %v3334
      %v3336 = vpop.f32.mrf.mxu0
      %v3337 = vpop.f32.mrf.mxu0
      %v3338 = vadd.f32 %v690, %v3337
      %v3339 = vpop.f32.mrf.mxu0
      %3340 = vmatprep.mubr.bf16.mxu0 0
      %3341 = vmatmul.mubr.bf16.gmra.mxu0 %v2141
      %v3342 = vpop.f32.mrf.mxu0
      %v3343 = vadd.f32 %v690, %v3342
      %v3344 = vpop.f32.mrf.mxu0
      %v3345 = vpop.f32.mrf.mxu0
      %v3346 = vadd.f32 %v690, %v3345
      %v3347 = vpop.f32.mrf.mxu0
      %3348 = vmatprep.mubr.bf16.mxu0 0
      %3349 = vmatmul.mubr.bf16.gmra.mxu0 %v2144
      %v3350 = vpop.f32.mrf.mxu0
      %v3351 = vadd.f32 %v690, %v3350
      %v3352 = vpop.f32.mrf.mxu0
      %v3353 = vpop.f32.mrf.mxu0
      %v3354 = vadd.f32 %v690, %v3353
      %v3355 = vpop.f32.mrf.mxu0
      %3356 = vmatprep.mubr.bf16.mxu0 0
      %3357 = vmatmul.mubr.bf16.gmra.mxu0 %v2147
      %v3358 = vpop.f32.mrf.mxu0
      %v3359 = vadd.f32 %v690, %v3358
      %v3360 = vpop.f32.mrf.mxu0
      %v3361 = vpop.f32.mrf.mxu0
      %v3362 = vadd.f32 %v690, %v3361
      %v3363 = vpop.f32.mrf.mxu0
      %3364 = vmatprep.mubr.bf16.mxu0 0
      %3365 = vmatmul.mubr.bf16.gmra.mxu0 %v2150
      %v3366 = vpop.f32.mrf.mxu0
      %v3367 = vadd.f32 %v690, %v3366
      %v3368 = vpop.f32.mrf.mxu0
      %v3369 = vpop.f32.mrf.mxu0
      %v3370 = vadd.f32 %v690, %v3369
      %v3371 = vpop.f32.mrf.mxu0
      %3372 = vmatprep.mubr.bf16.mxu0 0
      %3373 = vmatmul.mubr.bf16.gmra.mxu0 %v2153
      %v3374 = vpop.f32.mrf.mxu0
      %v3375 = vadd.f32 %v690, %v3374
      %v3376 = vpop.f32.mrf.mxu0
      %v3377 = vpop.f32.mrf.mxu0
      %v3378 = vadd.f32 %v690, %v3377
      %v3379 = vpop.f32.mrf.mxu0
      %3380 = vmatprep.mubr.bf16.mxu0 0
      %3381 = vmatmul.mubr.bf16.gmra.mxu0 %v2156
      %v3382 = vpop.f32.mrf.mxu0
      %v3383 = vadd.f32 %v690, %v3382
      %v3384 = vpop.f32.mrf.mxu0
      %v3385 = vpop.f32.mrf.mxu0
      %v3386 = vadd.f32 %v690, %v3385
      %v3387 = vpop.f32.mrf.mxu0
      %3388 = vmatprep.mubr.bf16.mxu0 0
      %3389 = vmatmul.mubr.bf16.gmra.mxu0 %v2159
      %v3390 = vpop.f32.mrf.mxu0
      %v3391 = vadd.f32 %v690, %v3390
      %v3392 = vpop.f32.mrf.mxu0
      %v3393 = vpop.f32.mrf.mxu0
      %v3394 = vadd.f32 %v690, %v3393
      %v3395 = vpop.f32.mrf.mxu0
      %3396 = vmatprep.mubr.bf16.mxu0 0
      %3397 = vmatmul.mubr.bf16.gmra.mxu0 %v2162
      %v3398 = vpop.f32.mrf.mxu0
      %v3399 = vadd.f32 %v690, %v3398
      %v3400 = vpop.f32.mrf.mxu0
      %v3401 = vpop.f32.mrf.mxu0
      %v3402 = vadd.f32 %v690, %v3401
      %v3403 = vpop.f32.mrf.mxu0
      %3404 = vmatprep.mubr.bf16.mxu0 0
      %3405 = vmatmul.mubr.bf16.gmra.mxu0 %v2165
      %v3406 = vpop.f32.mrf.mxu0
      %v3407 = vadd.f32 %v690, %v3406
      %v3408 = vpop.f32.mrf.mxu0
      %v3409 = vpop.f32.mrf.mxu0
      %v3410 = vadd.f32 %v690, %v3409
      %v3411 = vpop.f32.mrf.mxu0
      %3412 = vmatprep.mubr.bf16.mxu0 0
      %3413 = vmatmul.mubr.bf16.gmra.mxu0 %v2168
      %v3414 = vpop.f32.mrf.mxu0
      %v3415 = vadd.f32 %v690, %v3414
      %v3416 = vpop.f32.mrf.mxu0
      %v3417 = vpop.f32.mrf.mxu0
      %v3418 = vadd.f32 %v690, %v3417
      %v3419 = vpop.f32.mrf.mxu0
      %3420 = vmatprep.mubr.bf16.mxu0 0
      %3421 = vmatmul.mubr.bf16.gmra.mxu0 %v2171
      %v3422 = vpop.f32.mrf.mxu0
      %v3423 = vadd.f32 %v690, %v3422
      %v3424 = vpop.f32.mrf.mxu0
      %v3425 = vpop.f32.mrf.mxu0
      %v3426 = vadd.f32 %v690, %v3425
      %v3427 = vpop.f32.mrf.mxu0
      %3428 = vmatprep.mubr.bf16.mxu0 0
      %3429 = vmatmul.mubr.bf16.gmra.mxu0 %v2174
      %v3430 = vpop.f32.mrf.mxu0
      %v3431 = vadd.f32 %v690, %v3430
      %v3432 = vpop.f32.mrf.mxu0
      %v3433 = vpop.f32.mrf.mxu0
      %v3434 = vadd.f32 %v690, %v3433
      %v3435 = vpop.f32.mrf.mxu0
      %3436 = vmatprep.mubr.bf16.mxu0 0
      %3437 = vmatmul.mubr.bf16.gmra.mxu0 %v2177
      %v3438 = vpop.f32.mrf.mxu0
      %v3439 = vadd.f32 %v690, %v3438
      %v3440 = vpop.f32.mrf.mxu0
      %v3441 = vpop.f32.mrf.mxu0
      %v3442 = vadd.f32 %v690, %v3441
      %v3443 = vpop.f32.mrf.mxu0
      %3444 = vmatprep.mubr.bf16.mxu0 0
      %3445 = vmatmul.mubr.bf16.gmra.mxu0 %v2180
      %v3446 = vpop.f32.mrf.mxu0
      %v3447 = vadd.f32 %v690, %v3446
      %v3448 = vpop.f32.mrf.mxu0
      %v3449 = vpop.f32.mrf.mxu0
      %v3450 = vadd.f32 %v690, %v3449
      %v3451 = vpop.f32.mrf.mxu0
      %3452 = vmatprep.mubr.bf16.mxu0 0
      %3453 = vmatmul.mubr.bf16.gmra.mxu0 %v2183
      %v3454 = vpop.f32.mrf.mxu0
      %v3455 = vadd.f32 %v690, %v3454
      %v3456 = vpop.f32.mrf.mxu0
      %v3457 = vpop.f32.mrf.mxu0
      %v3458 = vadd.f32 %v690, %v3457
      %v3459 = vpop.f32.mrf.mxu0
      %3460 = vmatprep.mubr.bf16.mxu0 0
      %3461 = vmatmul.mubr.bf16.gmra.mxu0 %v2186
      %v3462 = vpop.f32.mrf.mxu0
      %v3463 = vadd.f32 %v690, %v3462
      %v3464 = vpop.f32.mrf.mxu0
      %v3465 = vpop.f32.mrf.mxu0
      %v3466 = vadd.f32 %v690, %v3465
      %v3467 = vpop.f32.mrf.mxu0
      %3468 = vmatprep.mubr.bf16.mxu0 0
      %3469 = vmatmul.mubr.bf16.gmra.mxu0 %v2189
      %v3470 = vpop.f32.mrf.mxu0
      %v3471 = vadd.f32 %v690, %v3470
      %v3472 = vpop.f32.mrf.mxu0
      %v3473 = vpop.f32.mrf.mxu0
      %v3474 = vadd.f32 %v690, %v3473
      %v3475 = vpop.f32.mrf.mxu0
      %3476 = vmatprep.mubr.bf16.mxu0 0
      %3477 = vmatmul.mubr.bf16.gmra.mxu0 %v2192
      %v3478 = vpop.f32.mrf.mxu0
      %v3479 = vadd.f32 %v690, %v3478
      %v3480 = vpop.f32.mrf.mxu0
      %v3481 = vpop.f32.mrf.mxu0
      %v3482 = vadd.f32 %v690, %v3481
      %v3483 = vpop.f32.mrf.mxu0
      %3484 = vmatprep.mubr.bf16.mxu0 0
      %3485 = vmatmul.mubr.bf16.gmra.mxu0 %v2195
      %v3486 = vpop.f32.mrf.mxu0
      %v3487 = vadd.f32 %v690, %v3486
      %v3488 = vpop.f32.mrf.mxu0
      %v3489 = vpop.f32.mrf.mxu0
      %v3490 = vadd.f32 %v690, %v3489
      %v3491 = vpop.f32.mrf.mxu0
      %3492 = vmatprep.mubr.bf16.mxu0 0
      %3493 = vmatmul.mubr.bf16.gmra.mxu0 %v2198
      %v3494 = vpop.f32.mrf.mxu0
      %v3495 = vadd.f32 %v690, %v3494
      %v3496 = vpop.f32.mrf.mxu0
      %v3497 = vpop.f32.mrf.mxu0
      %v3498 = vadd.f32 %v690, %v3497
      %v3499 = vpop.f32.mrf.mxu0
      %3500 = vmatprep.mubr.bf16.mxu0 0
      %3501 = vmatmul.mubr.bf16.gmra.mxu0 %v2201
      %v3502 = vpop.f32.mrf.mxu0
      %v3503 = vadd.f32 %v690, %v3502
      %v3504 = vpop.f32.mrf.mxu0
      %v3505 = vpop.f32.mrf.mxu0
      %v3506 = vadd.f32 %v690, %v3505
      %v3507 = vpop.f32.mrf.mxu0
      %3508 = vmatprep.mubr.bf16.mxu0 0
      %3509 = vmatmul.mubr.bf16.gmra.mxu0 %v2204
      %v3510 = vpop.f32.mrf.mxu0
      %v3511 = vadd.f32 %v690, %v3510
      %v3512 = vpop.f32.mrf.mxu0
      %v3513 = vpop.f32.mrf.mxu0
      %v3514 = vadd.f32 %v690, %v3513
      %v3515 = vpop.f32.mrf.mxu0
      %3516 = vmatprep.mubr.bf16.mxu0 0
      %3517 = vmatmul.mubr.bf16.gmra.mxu0 %v2207
      %v3518 = vpop.f32.mrf.mxu0
      %v3519 = vadd.f32 %v690, %v3518
      %v3520 = vpop.f32.mrf.mxu0
      %v3521 = vpop.f32.mrf.mxu0
      %v3522 = vadd.f32 %v690, %v3521
      %v3523 = vpop.f32.mrf.mxu0
      %3524 = vmatprep.mubr.bf16.mxu0 0
      %3525 = vmatmul.mubr.bf16.gmra.mxu0 %v2210
      %v3526 = vpop.f32.mrf.mxu0
      %v3527 = vadd.f32 %v690, %v3526
      %v3528 = vpop.f32.mrf.mxu0
      %v3529 = vpop.f32.mrf.mxu0
      %v3530 = vadd.f32 %v690, %v3529
      %v3531 = vpop.f32.mrf.mxu0
      %3532 = vmatprep.mubr.bf16.mxu0 0
      %3533 = vmatmul.mubr.bf16.gmra.mxu0 %v2213
      %v3534 = vpop.f32.mrf.mxu0
      %v3535 = vadd.f32 %v690, %v3534
      %v3536 = vpop.f32.mrf.mxu0
      %v3537 = vpop.f32.mrf.mxu0
      %v3538 = vadd.f32 %v690, %v3537
      %v3539 = vpop.f32.mrf.mxu0
      %3540 = vmatprep.mubr.bf16.mxu0 0
      %3541 = vmatmul.mubr.bf16.gmra.mxu0 %v2216
      %v3542 = vpop.f32.mrf.mxu0
      %v3543 = vadd.f32 %v690, %v3542
      %v3544 = vpop.f32.mrf.mxu0
      %v3545 = vpop.f32.mrf.mxu0
      %v3546 = vadd.f32 %v690, %v3545
      %v3547 = vpop.f32.mrf.mxu0
      %3548 = vmatprep.mubr.bf16.mxu0 0
      %3549 = vmatmul.mubr.bf16.gmra.mxu0 %v2219
      %v3550 = vpop.f32.mrf.mxu0
      %v3551 = vadd.f32 %v690, %v3550
      %v3552 = vpop.f32.mrf.mxu0
      %v3553 = vpop.f32.mrf.mxu0
      %v3554 = vadd.f32 %v690, %v3553
      %v3555 = vpop.f32.mrf.mxu0
      %3556 = vmatprep.mubr.bf16.mxu0 0
      %3557 = vmatmul.mubr.bf16.gmra.mxu0 %v2222
      %v3558 = vpop.f32.mrf.mxu0
      %v3559 = vadd.f32 %v690, %v3558
      %v3560 = vpop.f32.mrf.mxu0
      %v3561 = vpop.f32.mrf.mxu0
      %v3562 = vadd.f32 %v690, %v3561
      %v3563 = vpop.f32.mrf.mxu0
      %3564 = vmatprep.mubr.bf16.mxu0 0
      %3565 = vmatmul.mubr.bf16.gmra.mxu0 %v2225
      %v3566 = vpop.f32.mrf.mxu0
      %v3567 = vadd.f32 %v690, %v3566
      %v3568 = vpop.f32.mrf.mxu0
      %v3569 = vpop.f32.mrf.mxu0
      %v3570 = vadd.f32 %v690, %v3569
      %v3571 = vpop.f32.mrf.mxu0
      %3572 = vmatprep.mubr.bf16.mxu0 0
      %3573 = vmatmul.mubr.bf16.gmra.mxu0 %v2228
      %v3574 = vpop.f32.mrf.mxu0
      %v3575 = vadd.f32 %v690, %v3574
      %v3576 = vpop.f32.mrf.mxu0
      %v3577 = vpop.f32.mrf.mxu0
      %v3578 = vadd.f32 %v690, %v3577
      %v3579 = vpop.f32.mrf.mxu0
      %3580 = vmatprep.mubr.bf16.mxu0 0
      %3581 = vmatmul.mubr.bf16.gmra.mxu0 %v2231
      %v3582 = vpop.f32.mrf.mxu0
      %v3583 = vadd.f32 %v690, %v3582
      %v3584 = vpop.f32.mrf.mxu0
      %v3585 = vpop.f32.mrf.mxu0
      %v3586 = vadd.f32 %v690, %v3585
      %v3587 = vpop.f32.mrf.mxu0
      %3588 = vmatprep.mubr.bf16.mxu0 0
      %3589 = vmatmul.mubr.bf16.gmra.mxu0 %v2234
      %v3590 = vpop.f32.mrf.mxu0
      %v3591 = vadd.f32 %v690, %v3590
      %v3592 = vpop.f32.mrf.mxu0
      %v3593 = vpop.f32.mrf.mxu0
      %v3594 = vadd.f32 %v690, %v3593
      %v3595 = vpop.f32.mrf.mxu0
      %3596 = vmatprep.mubr.bf16.mxu0 0
      %3597 = vmatmul.mubr.bf16.gmra.mxu0 %v2237
      %v3598 = vpop.f32.mrf.mxu0
      %v3599 = vadd.f32 %v690, %v3598
      %v3600 = vpop.f32.mrf.mxu0
      %v3601 = vpop.f32.mrf.mxu0
      %v3602 = vadd.f32 %v690, %v3601
      %v3603 = vpop.f32.mrf.mxu0
      %3604 = vmatprep.mubr.bf16.mxu0 0
      %3605 = vmatmul.mubr.bf16.gmra.mxu0 %v2240
      %v3606 = vpop.f32.mrf.mxu0
      %v3607 = vadd.f32 %v690, %v3606
      %v3608 = vpop.f32.mrf.mxu0
      %v3609 = vpop.f32.mrf.mxu0
      %v3610 = vadd.f32 %v690, %v3609
      %v3611 = vpop.f32.mrf.mxu0
      %3612 = vmatprep.mubr.bf16.mxu0 0
      %3613 = vmatmul.mubr.bf16.gmra.mxu0 %v2243
      %v3614 = vpop.f32.mrf.mxu0
      %v3615 = vadd.f32 %v690, %v3614
      %v3616 = vpop.f32.mrf.mxu0
      %v3617 = vpop.f32.mrf.mxu0
      %v3618 = vadd.f32 %v690, %v3617
      %v3619 = vpop.f32.mrf.mxu0
      %3620 = vmatprep.mubr.bf16.mxu0 0
      %3621 = vmatmul.mubr.bf16.gmra.mxu0 %v2246
      %v3622 = vpop.f32.mrf.mxu0
      %v3623 = vadd.f32 %v690, %v3622
      %v3624 = vpop.f32.mrf.mxu0
      %v3625 = vpop.f32.mrf.mxu0
      %v3626 = vadd.f32 %v690, %v3625
      %v3627 = vpop.f32.mrf.mxu0
      %3628 = vmatprep.mubr.bf16.mxu0 0
      %3629 = vmatmul.mubr.bf16.gmra.mxu0 %v2249
      %v3630 = vpop.f32.mrf.mxu0
      %v3631 = vadd.f32 %v690, %v3630
      %v3632 = vpop.f32.mrf.mxu0
      %v3633 = vpop.f32.mrf.mxu0
      %v3634 = vadd.f32 %v690, %v3633
      %v3635 = vpop.f32.mrf.mxu0
      %3636 = vmatprep.mubr.bf16.mxu0 0
      %3637 = vmatmul.mubr.bf16.gmra.mxu0 %v2252
      %v3638 = vpop.f32.mrf.mxu0
      %v3639 = vadd.f32 %v690, %v3638
      %v3640 = vpop.f32.mrf.mxu0
      %v3641 = vpop.f32.mrf.mxu0
      %v3642 = vadd.f32 %v690, %v3641
      %v3643 = vpop.f32.mrf.mxu0
      %3644 = vmatprep.mubr.bf16.mxu0 0
      %3645 = vmatmul.mubr.bf16.gmra.mxu0 %v2255
      %v3646 = vpop.f32.mrf.mxu0
      %v3647 = vadd.f32 %v690, %v3646
      %v3648 = vpop.f32.mrf.mxu0
      %v3649 = vpop.f32.mrf.mxu0
      %v3650 = vadd.f32 %v690, %v3649
      %v3651 = vpop.f32.mrf.mxu0
      %3652 = vmatprep.mubr.bf16.mxu0 0
      %3653 = vmatmul.mubr.bf16.gmra.mxu0 %v2258
      %v3654 = vpop.f32.mrf.mxu0
      %v3655 = vadd.f32 %v690, %v3654
      %v3656 = vpop.f32.mrf.mxu0
      %v3657 = vpop.f32.mrf.mxu0
      %v3658 = vadd.f32 %v690, %v3657
      %v3659 = vpop.f32.mrf.mxu0
      %3660 = vmatprep.mubr.bf16.mxu0 0
      %3661 = vmatmul.mubr.bf16.gmra.mxu0 %v2261
      %v3662 = vpop.f32.mrf.mxu0
      %v3663 = vadd.f32 %v690, %v3662
      %v3664 = vpop.f32.mrf.mxu0
      %v3665 = vpop.f32.mrf.mxu0
      %v3666 = vadd.f32 %v690, %v3665
      %v3667 = vpop.f32.mrf.mxu0
      %3668 = vmatprep.mubr.bf16.mxu0 0
      %3669 = vmatmul.mubr.bf16.gmra.mxu0 %v2264
      %v3670 = vpop.f32.mrf.mxu0
      %v3671 = vadd.f32 %v690, %v3670
      %v3672 = vpop.f32.mrf.mxu0
      %v3673 = vpop.f32.mrf.mxu0
      %v3674 = vadd.f32 %v690, %v3673
      %v3675 = vpop.f32.mrf.mxu0
      %3676 = vmatprep.mubr.bf16.mxu0 0
      %3677 = vmatmul.mubr.bf16.gmra.mxu0 %v2267
      %v3678 = vpop.f32.mrf.mxu0
      %v3679 = vadd.f32 %v690, %v3678
      %v3680 = vpop.f32.mrf.mxu0
      %v3681 = vpop.f32.mrf.mxu0
      %v3682 = vadd.f32 %v690, %v3681
      %v3683 = vpop.f32.mrf.mxu0
      %3684 = vmatprep.mubr.bf16.mxu0 0
      %3685 = vmatmul.mubr.bf16.gmra.mxu0 %v2270
      %v3686 = vpop.f32.mrf.mxu0
      %v3687 = vadd.f32 %v690, %v3686
      %v3688 = vpop.f32.mrf.mxu0
      %v3689 = vpop.f32.mrf.mxu0
      %v3690 = vadd.f32 %v690, %v3689
      %v3691 = vpop.f32.mrf.mxu0
      %3692 = vmatprep.mubr.bf16.mxu0 0
      %3693 = vmatmul.mubr.bf16.gmra.mxu0 %v2273
      %v3694 = vpop.f32.mrf.mxu0
      %v3695 = vadd.f32 %v690, %v3694
      %v3696 = vpop.f32.mrf.mxu0
      %v3697 = vpop.f32.mrf.mxu0
      %v3698 = vadd.f32 %v690, %v3697
      %v3699 = vpop.f32.mrf.mxu0
      %3700 = vmatprep.mubr.bf16.mxu0 0
      %3701 = vmatmul.mubr.bf16.gmra.mxu0 %v2276
      %v3702 = vpop.f32.mrf.mxu0
      %v3703 = vadd.f32 %v690, %v3702
      %v3704 = vpop.f32.mrf.mxu0
      %v3705 = vpop.f32.mrf.mxu0
      %v3706 = vadd.f32 %v690, %v3705
      %v3707 = vpop.f32.mrf.mxu0
      %3708 = vmatprep.mubr.bf16.mxu0 0
      %3709 = vmatmul.mubr.bf16.gmra.mxu0 %v2279
      %v3710 = vpop.f32.mrf.mxu0
      %v3711 = vadd.f32 %v690, %v3710
      %v3712 = vpop.f32.mrf.mxu0
      %v3713 = vpop.f32.mrf.mxu0
      %v3714 = vadd.f32 %v690, %v3713
      %v3715 = vpop.f32.mrf.mxu0
      %3716 = vmatprep.mubr.bf16.mxu0 0
      %3717 = vmatmul.mubr.bf16.gmra.mxu0 %v2282
      %v3718 = vpop.f32.mrf.mxu0
      %v3719 = vadd.f32 %v690, %v3718
      %v3720 = vpop.f32.mrf.mxu0
      %v3721 = vpop.f32.mrf.mxu0
      %v3722 = vadd.f32 %v690, %v3721
      %v3723 = vpop.f32.mrf.mxu0
      %3724 = vmatprep.mubr.bf16.mxu0 0
      %3725 = vmatmul.mubr.bf16.gmra.mxu0 %v2285
      %v3726 = vpop.f32.mrf.mxu0
      %v3727 = vadd.f32 %v690, %v3726
      %v3728 = vpop.f32.mrf.mxu0
      %v3729 = vpop.f32.mrf.mxu0
      %v3730 = vadd.f32 %v690, %v3729
      %v3731 = vpop.f32.mrf.mxu0
      %3732 = vmatprep.mubr.bf16.mxu0 0
      %3733 = vmatmul.mubr.bf16.gmra.mxu0 %v2288
      %v3734 = vpop.f32.mrf.mxu0
      %v3735 = vadd.f32 %v690, %v3734
      %v3736 = vpop.f32.mrf.mxu0
      %v3737 = vpop.f32.mrf.mxu0
      %v3738 = vadd.f32 %v690, %v3737
      %v3739 = vpop.f32.mrf.mxu0
      %3740 = vmatprep.mubr.bf16.mxu0 0
      %3741 = vmatmul.mubr.bf16.gmra.mxu0 %v2291
      %v3742 = vpop.f32.mrf.mxu0
      %v3743 = vadd.f32 %v690, %v3742
      %v3744 = vpop.f32.mrf.mxu0
      %v3745 = vpop.f32.mrf.mxu0
      %v3746 = vadd.f32 %v690, %v3745
      %v3747 = vpop.f32.mrf.mxu0
      %3748 = vmatprep.mubr.bf16.mxu0 0
      %3749 = vmatmul.mubr.bf16.gmra.mxu0 %v2294
      %v3750 = vpop.f32.mrf.mxu0
      %v3751 = vadd.f32 %v690, %v3750
      %v3752 = vpop.f32.mrf.mxu0
      %v3753 = vpop.f32.mrf.mxu0
      %v3754 = vadd.f32 %v690, %v3753
      %v3755 = vpop.f32.mrf.mxu0
      %3756 = vmatprep.mubr.bf16.mxu0 0
      %3757 = vmatmul.mubr.bf16.gmra.mxu0 %v2297
      %v3758 = vpop.f32.mrf.mxu0
      %v3759 = vadd.f32 %v690, %v3758
      %v3760 = vpop.f32.mrf.mxu0
      %v3761 = vpop.f32.mrf.mxu0
      %v3762 = vadd.f32 %v690, %v3761
      %v3763 = vpop.f32.mrf.mxu0
      %3764 = vmatprep.mubr.bf16.mxu0 0
      %3765 = vmatmul.mubr.bf16.gmra.mxu0 %v2300
      %v3766 = vpop.f32.mrf.mxu0
      %v3767 = vadd.f32 %v690, %v3766
      %v3768 = vpop.f32.mrf.mxu0
      %v3769 = vpop.f32.mrf.mxu0
      %v3770 = vadd.f32 %v690, %v3769
      %v3771 = vpop.f32.mrf.mxu0
      %3772 = vmatprep.mubr.bf16.mxu0 0
      %3773 = vmatmul.mubr.bf16.gmra.mxu0 %v2303
      %v3774 = vpop.f32.mrf.mxu0
      %v3775 = vadd.f32 %v690, %v3774
      %v3776 = vpop.f32.mrf.mxu0
      %v3777 = vpop.f32.mrf.mxu0
      %v3778 = vadd.f32 %v690, %v3777
      %v3779 = vpop.f32.mrf.mxu0
      %3780 = vmatprep.mubr.bf16.mxu0 0
      %3781 = vmatmul.mubr.bf16.gmra.mxu0 %v2306
      %v3782 = vpop.f32.mrf.mxu0
      %v3783 = vadd.f32 %v690, %v3782
      %v3784 = vpop.f32.mrf.mxu0
      %v3785 = vpop.f32.mrf.mxu0
      %v3786 = vadd.f32 %v690, %v3785
      %v3787 = vpop.f32.mrf.mxu0
      %3788 = vmatprep.mubr.bf16.mxu0 0
      %3789 = vmatmul.mubr.bf16.gmra.mxu0 %v2309
      %v3790 = vpop.f32.mrf.mxu0
      %v3791 = vadd.f32 %v690, %v3790
      %v3792 = vpop.f32.mrf.mxu0
      %v3793 = vpop.f32.mrf.mxu0
      %v3794 = vadd.f32 %v690, %v3793
      %v3795 = vpop.f32.mrf.mxu0
      %3796 = vmatprep.mubr.bf16.mxu0 0
      %3797 = vmatmul.mubr.bf16.gmra.mxu0 %v2312
      %v3798 = vpop.f32.mrf.mxu0
      %v3799 = vadd.f32 %v690, %v3798
      %v3800 = vpop.f32.mrf.mxu0
      %v3801 = vpop.f32.mrf.mxu0
      %v3802 = vadd.f32 %v690, %v3801
      %v3803 = vpop.f32.mrf.mxu0
      %3804 = vmatprep.mubr.bf16.mxu0 0
      %3805 = vmatmul.mubr.bf16.gmra.mxu0 %v2315
      %v3806 = vpop.f32.mrf.mxu0
      %v3807 = vadd.f32 %v690, %v3806
      %v3808 = vpop.f32.mrf.mxu0
      %v3809 = vpop.f32.mrf.mxu0
      %v3810 = vadd.f32 %v690, %v3809
      %v3811 = vpop.f32.mrf.mxu0
      %3812 = vmatprep.mubr.bf16.mxu0 0
      %3813 = vmatmul.mubr.bf16.gmra.mxu0 %v2318
      %v3814 = vpop.f32.mrf.mxu0
      %v3815 = vadd.f32 %v690, %v3814
      %v3816 = vpop.f32.mrf.mxu0
      %v3817 = vpop.f32.mrf.mxu0
      %v3818 = vadd.f32 %v690, %v3817
      %v3819 = vpop.f32.mrf.mxu0
      %3820 = vmatprep.mubr.bf16.mxu0 0
      %3821 = vmatmul.mubr.bf16.gmra.mxu0 %v2321
      %v3822 = vpop.f32.mrf.mxu0
      %v3823 = vadd.f32 %v690, %v3822
      %v3824 = vpop.f32.mrf.mxu0
      %v3825 = vpop.f32.mrf.mxu0
      %v3826 = vadd.f32 %v690, %v3825
      %v3827 = vpop.f32.mrf.mxu0
      %3828 = vmatprep.mubr.bf16.mxu0 0
      %3829 = vmatmul.mubr.bf16.gmra.mxu0 %v2324
      %v3830 = vpop.f32.mrf.mxu0
      %v3831 = vadd.f32 %v690, %v3830
      %v3832 = vpop.f32.mrf.mxu0
      %v3833 = vpop.f32.mrf.mxu0
      %v3834 = vadd.f32 %v690, %v3833
      %v3835 = vpop.f32.mrf.mxu0
      %3836 = vmatprep.mubr.bf16.mxu0 0
      %3837 = vmatmul.mubr.bf16.gmra.mxu0 %v2327
      %v3838 = vpop.f32.mrf.mxu0
      %v3839 = vadd.f32 %v690, %v3838
      %v3840 = vpop.f32.mrf.mxu0
      %v3841 = vpop.f32.mrf.mxu0
      %v3842 = vadd.f32 %v690, %v3841
      %v3843 = vpop.f32.mrf.mxu0
      %3844 = vmatprep.mubr.bf16.mxu0 0
      %3845 = vmatmul.mubr.bf16.gmra.mxu0 %v2330
      %v3846 = vpop.f32.mrf.mxu0
      %v3847 = vadd.f32 %v690, %v3846
      %v3848 = vpop.f32.mrf.mxu0
      %v3849 = vpop.f32.mrf.mxu0
      %v3850 = vadd.f32 %v690, %v3849
      %v3851 = vpop.f32.mrf.mxu0
      %3852 = vmatprep.mubr.bf16.mxu0 0
      %3853 = vmatmul.mubr.bf16.gmra.mxu0 %v2333
      %v3854 = vpop.f32.mrf.mxu0
      %v3855 = vadd.f32 %v690, %v3854
      %v3856 = vpop.f32.mrf.mxu0
      %v3857 = vpop.f32.mrf.mxu0
      %v3858 = vadd.f32 %v690, %v3857
      %v3859 = vpop.f32.mrf.mxu0
      %3860 = vmatprep.mubr.bf16.mxu0 0
      %3861 = vmatmul.mubr.bf16.gmra.mxu0 %v2336
      %v3862 = vpop.f32.mrf.mxu0
      %v3863 = vadd.f32 %v690, %v3862
      %v3864 = vpop.f32.mrf.mxu0
      %v3865 = vpop.f32.mrf.mxu0
      %v3866 = vadd.f32 %v690, %v3865
      %v3867 = vpop.f32.mrf.mxu0
      %3868 = vmatprep.mubr.bf16.mxu0 0
      %3869 = vmatmul.mubr.bf16.gmra.mxu0 %v2339
      %v3870 = vpop.f32.mrf.mxu0
      %v3871 = vadd.f32 %v690, %v3870
      %v3872 = vpop.f32.mrf.mxu0
      %v3873 = vpop.f32.mrf.mxu0
      %v3874 = vadd.f32 %v690, %v3873
      %v3875 = vpop.f32.mrf.mxu0
      %3876 = vmatprep.mubr.bf16.mxu0 0
      %3877 = vmatmul.mubr.bf16.gmra.mxu0 %v2342
      %v3878 = vpop.f32.mrf.mxu0
      %v3879 = vadd.f32 %v690, %v3878
      %v3880 = vpop.f32.mrf.mxu0
      %v3881 = vpop.f32.mrf.mxu0
      %v3882 = vadd.f32 %v690, %v3881
      %v3883 = vpop.f32.mrf.mxu0
      %3884 = vmatprep.mubr.bf16.mxu0 0
      %3885 = vmatmul.mubr.bf16.gmra.mxu0 %v2345
      %v3886 = vpop.f32.mrf.mxu0
      %v3887 = vadd.f32 %v690, %v3886
      %v3888 = vpop.f32.mrf.mxu0
      %v3889 = vpop.f32.mrf.mxu0
      %v3890 = vadd.f32 %v690, %v3889
      %v3891 = vpop.f32.mrf.mxu0
      %3892 = vmatprep.mubr.bf16.mxu0 0
      %3893 = vmatmul.mubr.bf16.gmra.mxu0 %v2348
      %v3894 = vpop.f32.mrf.mxu0
      %v3895 = vadd.f32 %v690, %v3894
      %v3896 = vpop.f32.mrf.mxu0
      %v3897 = vpop.f32.mrf.mxu0
      %v3898 = vadd.f32 %v690, %v3897
      %v3899 = vpop.f32.mrf.mxu0
      %3900 = vmatprep.mubr.bf16.mxu0 0
      %3901 = vmatmul.mubr.bf16.gmra.mxu0 %v2351
      %v3902 = vpop.f32.mrf.mxu0
      %v3903 = vadd.f32 %v690, %v3902
      %v3904 = vpop.f32.mrf.mxu0
      %v3905 = vpop.f32.mrf.mxu0
      %v3906 = vadd.f32 %v690, %v3905
      %v3907 = vpop.f32.mrf.mxu0
      %3908 = vmatprep.mubr.bf16.mxu0 0
      %3909 = vmatmul.mubr.bf16.gmra.mxu0 %v2354
      %v3910 = vpop.f32.mrf.mxu0
      %v3911 = vadd.f32 %v690, %v3910
      %v3912 = vpop.f32.mrf.mxu0
      %v3913 = vpop.f32.mrf.mxu0
      %v3914 = vadd.f32 %v690, %v3913
      %v3915 = vpop.f32.mrf.mxu0
      %3916 = vmatprep.mubr.bf16.mxu0 0
      %3917 = vmatmul.mubr.bf16.gmra.mxu0 %v2357
      %v3918 = vpop.f32.mrf.mxu0
      %v3919 = vadd.f32 %v690, %v3918
      %v3920 = vpop.f32.mrf.mxu0
      %v3921 = vpop.f32.mrf.mxu0
      %v3922 = vadd.f32 %v690, %v3921
      %v3923 = vpop.f32.mrf.mxu0
      %3924 = vmatprep.mubr.bf16.mxu0 0
      %3925 = vmatmul.mubr.bf16.gmra.mxu0 %v2360
      %v3926 = vpop.f32.mrf.mxu0
      %v3927 = vadd.f32 %v690, %v3926
      %v3928 = vpop.f32.mrf.mxu0
      %v3929 = vpop.f32.mrf.mxu0
      %v3930 = vadd.f32 %v690, %v3929
      %v3931 = vpop.f32.mrf.mxu0
      %3932 = vmatprep.mubr.bf16.mxu0 0
      %3933 = vmatmul.mubr.bf16.gmra.mxu0 %v2363
      %v3934 = vpop.f32.mrf.mxu0
      %v3935 = vadd.f32 %v690, %v3934
      %v3936 = vpop.f32.mrf.mxu0
      %v3937 = vpop.f32.mrf.mxu0
      %v3938 = vadd.f32 %v690, %v3937
      %v3939 = vpop.f32.mrf.mxu0
      %3940 = vmatprep.mubr.bf16.mxu0 0
      %3941 = vmatmul.mubr.bf16.gmra.mxu0 %v2366
      %v3942 = vpop.f32.mrf.mxu0
      %v3943 = vadd.f32 %v690, %v3942
      %v3944 = vpop.f32.mrf.mxu0
      %v3945 = vpop.f32.mrf.mxu0
      %v3946 = vadd.f32 %v690, %v3945
      %v3947 = vpop.f32.mrf.mxu0
      %3948 = vmatprep.mubr.bf16.mxu0 0
      %3949 = vmatmul.mubr.bf16.gmra.mxu0 %v2369
      %v3950 = vpop.f32.mrf.mxu0
      %v3951 = vadd.f32 %v690, %v3950
      %v3952 = vpop.f32.mrf.mxu0
      %v3953 = vpop.f32.mrf.mxu0
      %v3954 = vadd.f32 %v690, %v3953
      %v3955 = vpop.f32.mrf.mxu0
      %3956 = vmatprep.mubr.bf16.mxu0 0
      %3957 = vmatmul.mubr.bf16.gmra.mxu0 %v2372
      %v3958 = vpop.f32.mrf.mxu0
      %v3959 = vadd.f32 %v690, %v3958
      %v3960 = vpop.f32.mrf.mxu0
      %v3961 = vpop.f32.mrf.mxu0
      %v3962 = vadd.f32 %v690, %v3961
      %v3963 = vpop.f32.mrf.mxu0
      %3964 = vmatprep.mubr.bf16.mxu0 0
      %3965 = vmatmul.mubr.bf16.gmra.mxu0 %v2375
      %v3966 = vpop.f32.mrf.mxu0
      %v3967 = vadd.f32 %v690, %v3966
      %v3968 = vpop.f32.mrf.mxu0
      %v3969 = vpop.f32.mrf.mxu0
      %v3970 = vadd.f32 %v690, %v3969
      %v3971 = vpop.f32.mrf.mxu0
      %3972 = vmatprep.mubr.bf16.mxu0 0
      %3973 = vmatmul.mubr.bf16.gmra.mxu0 %v2378
      %v3974 = vpop.f32.mrf.mxu0
      %v3975 = vadd.f32 %v690, %v3974
      %v3976 = vpop.f32.mrf.mxu0
      %v3977 = vpop.f32.mrf.mxu0
      %v3978 = vadd.f32 %v690, %v3977
      %v3979 = vpop.f32.mrf.mxu0
      %3980 = vmatprep.mubr.bf16.mxu0 0
      %3981 = vmatmul.mubr.bf16.gmra.mxu0 %v2381
      %v3982 = vpop.f32.mrf.mxu0
      %v3983 = vadd.f32 %v690, %v3982
      %v3984 = vpop.f32.mrf.mxu0
      %v3985 = vpop.f32.mrf.mxu0
      %v3986 = vadd.f32 %v690, %v3985
      %v3987 = vpop.f32.mrf.mxu0
      %3988 = vmatprep.mubr.bf16.mxu0 0
      %3989 = vmatmul.mubr.bf16.gmra.mxu0 %v2384
      %v3990 = vpop.f32.mrf.mxu0
      %v3991 = vadd.f32 %v690, %v3990
      %v3992 = vpop.f32.mrf.mxu0
      %v3993 = vpop.f32.mrf.mxu0
      %v3994 = vadd.f32 %v690, %v3993
      %v3995 = vpop.f32.mrf.mxu0
      %3996 = vmatprep.mubr.bf16.mxu0 0
      %3997 = vmatmul.mubr.bf16.gmra.mxu0 %v2387
      %v3998 = vpop.f32.mrf.mxu0
      %v3999 = vadd.f32 %v690, %v3998
      %v4000 = vpop.f32.mrf.mxu0
      %v4001 = vpop.f32.mrf.mxu0
      %v4002 = vadd.f32 %v690, %v4001
      %v4003 = vpop.f32.mrf.mxu0
      %4004 = vmatprep.mubr.bf16.mxu0 0
      %4005 = vmatmul.mubr.bf16.gmra.mxu0 %v2390
      %v4006 = vpop.f32.mrf.mxu0
      %v4007 = vadd.f32 %v690, %v4006
      %v4008 = vpop.f32.mrf.mxu0
      %v4009 = vpop.f32.mrf.mxu0
      %v4010 = vadd.f32 %v690, %v4009
      %v4011 = vpop.f32.mrf.mxu0
      %4012 = vmatprep.mubr.bf16.mxu0 0
      %4013 = vmatmul.mubr.bf16.gmra.mxu0 %v2393
      %v4014 = vpop.f32.mrf.mxu0
      %v4015 = vadd.f32 %v690, %v4014
      %v4016 = vpop.f32.mrf.mxu0
      %v4017 = vpop.f32.mrf.mxu0
      %v4018 = vadd.f32 %v690, %v4017
      %v4019 = vpop.f32.mrf.mxu0
      %4020 = vmatprep.mubr.bf16.mxu0 0
      %4021 = vmatmul.mubr.bf16.gmra.mxu0 %v2396
      %v4022 = vpop.f32.mrf.mxu0
      %v4023 = vadd.f32 %v690, %v4022
      %v4024 = vpop.f32.mrf.mxu0
      %v4025 = vpop.f32.mrf.mxu0
      %v4026 = vadd.f32 %v690, %v4025
      %v4027 = vpop.f32.mrf.mxu0
      %4028 = vmatprep.mubr.bf16.mxu0 0
      %4029 = vmatmul.mubr.bf16.gmra.mxu0 %v2399
      %v4030 = vpop.f32.mrf.mxu0
      %v4031 = vadd.f32 %v690, %v4030
      %v4032 = vpop.f32.mrf.mxu0
      %v4033 = vpop.f32.mrf.mxu0
      %v4034 = vadd.f32 %v690, %v4033
      %v4035 = vpop.f32.mrf.mxu0
      %4036 = vmatprep.mubr.bf16.mxu0 0
      %4037 = vmatmul.mubr.bf16.gmra.mxu0 %v2402
      %v4038 = vpop.f32.mrf.mxu0
      %v4039 = vadd.f32 %v690, %v4038
      %v4040 = vpop.f32.mrf.mxu0
      %v4041 = vpop.f32.mrf.mxu0
      %v4042 = vadd.f32 %v690, %v4041
      %v4043 = vpop.f32.mrf.mxu0
      %4044 = vmatprep.mubr.bf16.mxu0 0
      %4045 = vmatmul.mubr.bf16.gmra.mxu0 %v2405
      %v4046 = vpop.f32.mrf.mxu0
      %v4047 = vadd.f32 %v690, %v4046
      %v4048 = vpop.f32.mrf.mxu0
      %v4049 = vpop.f32.mrf.mxu0
      %v4050 = vadd.f32 %v690, %v4049
      %v4051 = vpop.f32.mrf.mxu0
      %4052 = vmatprep.mubr.bf16.mxu0 0
      %4053 = vmatmul.mubr.bf16.gmra.mxu0 %v2408
      %v4054 = vpop.f32.mrf.mxu0
      %v4055 = vadd.f32 %v690, %v4054
      %v4056 = vpop.f32.mrf.mxu0
      %v4057 = vpop.f32.mrf.mxu0
      %v4058 = vadd.f32 %v690, %v4057
      %v4059 = vpop.f32.mrf.mxu0
      %4060 = vmatprep.mubr.bf16.mxu0 0
      %4061 = vmatmul.mubr.bf16.gmra.mxu0 %v2411
      %v4062 = vpop.f32.mrf.mxu0
      %v4063 = vadd.f32 %v690, %v4062
      %v4064 = vpop.f32.mrf.mxu0
      %v4065 = vpop.f32.mrf.mxu0
      %v4066 = vadd.f32 %v690, %v4065
      %v4067 = vpop.f32.mrf.mxu0
      %4068 = vmatprep.mubr.bf16.mxu0 0
      %4069 = vmatmul.mubr.bf16.gmra.mxu0 %v2414
      %v4070 = vpop.f32.mrf.mxu0
      %v4071 = vadd.f32 %v690, %v4070
      %v4072 = vpop.f32.mrf.mxu0
      %v4073 = vpop.f32.mrf.mxu0
      %v4074 = vadd.f32 %v690, %v4073
      %v4075 = vpop.f32.mrf.mxu0
      %4076 = vmatprep.mubr.bf16.mxu0 0
      %4077 = vmatmul.mubr.bf16.gmra.mxu0 %v2417
      %v4078 = vpop.f32.mrf.mxu0
      %v4079 = vadd.f32 %v690, %v4078
      %v4080 = vpop.f32.mrf.mxu0
      %v4081 = vpop.f32.mrf.mxu0
      %v4082 = vadd.f32 %v690, %v4081
      %v4083 = vpop.f32.mrf.mxu0
      %4084 = vmatprep.mubr.bf16.mxu0 0
      %4085 = vmatmul.mubr.bf16.gmra.mxu0 %v2420
      %v4086 = vpop.f32.mrf.mxu0
      %v4087 = vadd.f32 %v690, %v4086
      %v4088 = vpop.f32.mrf.mxu0
      %v4089 = vpop.f32.mrf.mxu0
      %v4090 = vadd.f32 %v690, %v4089
      %v4091 = vpop.f32.mrf.mxu0
      %4092 = vmatprep.mubr.bf16.mxu0 0
      %4093 = vmatmul.mubr.bf16.gmra.mxu0 %v2423
      %v4094 = vpop.f32.mrf.mxu0
      %v4095 = vadd.f32 %v690, %v4094
      %v4096 = vpop.f32.mrf.mxu0
      %v4097 = vpop.f32.mrf.mxu0
      %v4098 = vadd.f32 %v690, %v4097
      %v4099 = vpop.f32.mrf.mxu0
      %4100 = vmatprep.mubr.bf16.mxu0 0
      %4101 = vmatmul.mubr.bf16.gmra.mxu0 %v2426
      %v4102 = vpop.f32.mrf.mxu0
      %v4103 = vadd.f32 %v690, %v4102
      %v4104 = vpop.f32.mrf.mxu0
      %v4105 = vpop.f32.mrf.mxu0
      %v4106 = vadd.f32 %v690, %v4105
      %v4107 = vpop.f32.mrf.mxu0
      %4108 = vmatprep.mubr.bf16.mxu0 0
      %4109 = vmatmul.mubr.bf16.gmra.mxu0 %v2429
      %v4110 = vpop.f32.mrf.mxu0
      %v4111 = vadd.f32 %v690, %v4110
      %v4112 = vpop.f32.mrf.mxu0
      %v4113 = vpop.f32.mrf.mxu0
      %v4114 = vadd.f32 %v690, %v4113
      %v4115 = vpop.f32.mrf.mxu0
      %4116 = vmatprep.mubr.bf16.mxu0 0
      %4117 = vmatmul.mubr.bf16.gmra.mxu0 %v2432
      %v4118 = vpop.f32.mrf.mxu0
      %v4119 = vadd.f32 %v690, %v4118
      %v4120 = vpop.f32.mrf.mxu0
      %v4121 = vpop.f32.mrf.mxu0
      %v4122 = vadd.f32 %v690, %v4121
      %v4123 = vpop.f32.mrf.mxu0
      %4124 = vmatprep.mubr.bf16.mxu0 0
      %4125 = vmatmul.mubr.bf16.gmra.mxu0 %v2435
      %v4126 = vpop.f32.mrf.mxu0
      %v4127 = vadd.f32 %v690, %v4126
      %v4128 = vpop.f32.mrf.mxu0
      %v4129 = vpop.f32.mrf.mxu0
      %v4130 = vadd.f32 %v690, %v4129
      %v4131 = vpop.f32.mrf.mxu0
      %4132 = vmatprep.mubr.bf16.mxu0 0
      %4133 = vmatmul.mubr.bf16.gmra.mxu0 %v2438
      %v4134 = vpop.f32.mrf.mxu0
      %v4135 = vadd.f32 %v690, %v4134
      %v4136 = vpop.f32.mrf.mxu0
      %v4137 = vpop.f32.mrf.mxu0
      %v4138 = vadd.f32 %v690, %v4137
      %v4139 = vpop.f32.mrf.mxu0
      %4140 = vmatprep.mubr.bf16.mxu0 0
      %4141 = vmatmul.mubr.bf16.gmra.mxu0 %v2441
      %v4142 = vpop.f32.mrf.mxu0
      %v4143 = vadd.f32 %v690, %v4142
      %v4144 = vpop.f32.mrf.mxu0
      %v4145 = vpop.f32.mrf.mxu0
      %v4146 = vadd.f32 %v690, %v4145
      %v4147 = vpop.f32.mrf.mxu0
      %4148 = vmatprep.mubr.bf16.mxu0 0
      %4149 = vmatmul.mubr.bf16.gmra.mxu0 %v2444
      %v4150 = vpop.f32.mrf.mxu0
      %v4151 = vadd.f32 %v690, %v4150
      %v4152 = vpop.f32.mrf.mxu0
      %v4153 = vpop.f32.mrf.mxu0
      %v4154 = vadd.f32 %v690, %v4153
      %v4155 = vpop.f32.mrf.mxu0
      %4156 = vmatprep.mubr.bf16.mxu0 0
      %4157 = vmatmul.mubr.bf16.gmra.mxu0 %v2447
      %v4158 = vpop.f32.mrf.mxu0
      %v4159 = vadd.f32 %v690, %v4158
      %v4160 = vpop.f32.mrf.mxu0
      %v4161 = vpop.f32.mrf.mxu0
      %v4162 = vadd.f32 %v690, %v4161
      %v4163 = vpop.f32.mrf.mxu0
      %4164 = vmatprep.mubr.bf16.mxu0 0
      %4165 = vmatmul.mubr.bf16.gmra.mxu0 %v2450
      %v4166 = vpop.f32.mrf.mxu0
      %v4167 = vadd.f32 %v690, %v4166
      %v4168 = vpop.f32.mrf.mxu0
      %v4169 = vpop.f32.mrf.mxu0
      %v4170 = vadd.f32 %v690, %v4169
      %v4171 = vpop.f32.mrf.mxu0
      %4172 = vmatprep.mubr.bf16.mxu0 0
      %4173 = vmatmul.mubr.bf16.gmra.mxu0 %v2453
      %v4174 = vpop.f32.mrf.mxu0
      %v4175 = vadd.f32 %v690, %v4174
      %v4176 = vpop.f32.mrf.mxu0
      %v4177 = vpop.f32.mrf.mxu0
      %v4178 = vadd.f32 %v690, %v4177
      %v4179 = vpop.f32.mrf.mxu0
      %4180 = vmatprep.mubr.bf16.mxu0 0
      %4181 = vmatmul.mubr.bf16.gmra.mxu0 %v2456
      %v4182 = vpop.f32.mrf.mxu0
      %v4183 = vadd.f32 %v690, %v4182
      %v4184 = vpop.f32.mrf.mxu0
      %v4185 = vpop.f32.mrf.mxu0
      %v4186 = vadd.f32 %v690, %v4185
      %v4187 = vpop.f32.mrf.mxu0
      %4188 = vmatprep.mubr.bf16.mxu0 0
      %4189 = vmatmul.mubr.bf16.gmra.mxu0 %v2459
      %v4190 = vpop.f32.mrf.mxu0
      %v4191 = vadd.f32 %v690, %v4190
      %v4192 = vpop.f32.mrf.mxu0
      %v4193 = vpop.f32.mrf.mxu0
      %v4194 = vadd.f32 %v690, %v4193
      %v4195 = vpop.f32.mrf.mxu0
      %4196 = vmatprep.mubr.bf16.mxu0 0
      %4197 = vmatmul.mubr.bf16.gmra.mxu0 %v2462
      %v4198 = vpop.f32.mrf.mxu0
      %v4199 = vadd.f32 %v690, %v4198
      %v4200 = vpop.f32.mrf.mxu0
      %v4201 = vpop.f32.mrf.mxu0
      %v4202 = vadd.f32 %v690, %v4201
      %v4203 = vpop.f32.mrf.mxu0
      %4204 = vmatprep.mubr.bf16.mxu0 0
      %4205 = vmatmul.mubr.bf16.gmra.mxu0 %v2465
      %v4206 = vpop.f32.mrf.mxu0
      %v4207 = vadd.f32 %v690, %v4206
      %v4208 = vpop.f32.mrf.mxu0
      %v4209 = vpop.f32.mrf.mxu0
      %v4210 = vadd.f32 %v690, %v4209
      %v4211 = vpop.f32.mrf.mxu0
      %4212 = vmatprep.mubr.bf16.mxu0 0
      %4213 = vmatmul.mubr.bf16.gmra.mxu0 %v2468
      %v4214 = vpop.f32.mrf.mxu0
      %v4215 = vadd.f32 %v690, %v4214
      %v4216 = vpop.f32.mrf.mxu0
      %v4217 = vpop.f32.mrf.mxu0
      %v4218 = vadd.f32 %v690, %v4217
      %v4219 = vpop.f32.mrf.mxu0
      %4220 = vmatprep.mubr.bf16.mxu0 0
      %4221 = vmatmul.mubr.bf16.gmra.mxu0 %v2471
      %v4222 = vpop.f32.mrf.mxu0
      %v4223 = vadd.f32 %v690, %v4222
      %v4224 = vpop.f32.mrf.mxu0
      %v4225 = vpop.f32.mrf.mxu0
      %v4226 = vadd.f32 %v690, %v4225
      %v4227 = vpop.f32.mrf.mxu0
      %4228 = vmatprep.mubr.bf16.mxu0 0
      %4229 = vmatmul.mubr.bf16.gmra.mxu0 %v2474
      %v4230 = vpop.f32.mrf.mxu0
      %v4231 = vadd.f32 %v690, %v4230
      %v4232 = vpop.f32.mrf.mxu0
      %v4233 = vpop.f32.mrf.mxu0
      %v4234 = vadd.f32 %v690, %v4233
      %v4235 = vpop.f32.mrf.mxu0
      %4236 = vmatprep.mubr.bf16.mxu0 0
      %4237 = vmatmul.mubr.bf16.gmra.mxu0 %v2477
      %v4238 = vpop.f32.mrf.mxu0
      %v4239 = vadd.f32 %v690, %v4238
      %v4240 = vpop.f32.mrf.mxu0
      %v4241 = vpop.f32.mrf.mxu0
      %v4242 = vadd.f32 %v690, %v4241
      %v4243 = vpop.f32.mrf.mxu0
      %4244 = vmatprep.mubr.bf16.mxu0 0
      %4245 = vmatmul.mubr.bf16.gmra.mxu0 %v2480
      %v4246 = vpop.f32.mrf.mxu0
      %v4247 = vadd.f32 %v690, %v4246
      %v4248 = vpop.f32.mrf.mxu0
      %v4249 = vpop.f32.mrf.mxu0
      %v4250 = vadd.f32 %v690, %v4249
      %v4251 = vpop.f32.mrf.mxu0
      %4252 = vmatprep.mubr.bf16.mxu0 0
      %4253 = vmatmul.mubr.bf16.gmra.mxu0 %v2483
      %v4254 = vpop.f32.mrf.mxu0
      %v4255 = vadd.f32 %v690, %v4254
      %v4256 = vpop.f32.mrf.mxu0
      %v4257 = vpop.f32.mrf.mxu0
      %v4258 = vadd.f32 %v690, %v4257
      %v4259 = vpop.f32.mrf.mxu0
      %4260 = vmatprep.mubr.bf16.mxu0 0
      %4261 = vmatmul.mubr.bf16.gmra.mxu0 %v2486
      %v4262 = vpop.f32.mrf.mxu0
      %v4263 = vadd.f32 %v690, %v4262
      %v4264 = vpop.f32.mrf.mxu0
      %v4265 = vpop.f32.mrf.mxu0
      %v4266 = vadd.f32 %v690, %v4265
      %v4267 = vpop.f32.mrf.mxu0
      %4268 = vmatprep.mubr.bf16.mxu0 0
      %4269 = vmatmul.mubr.bf16.gmra.mxu0 %v2489
      %v4270 = vpop.f32.mrf.mxu0
      %v4271 = vadd.f32 %v690, %v4270
      %v4272 = vpop.f32.mrf.mxu0
      %v4273 = vpop.f32.mrf.mxu0
      %v4274 = vadd.f32 %v690, %v4273
      %v4275 = vpop.f32.mrf.mxu0
      %4276 = vmatprep.mubr.bf16.mxu0 0
      %4277 = vmatmul.mubr.bf16.gmra.mxu0 %v2492
      %v4278 = vpop.f32.mrf.mxu0
      %v4279 = vadd.f32 %v690, %v4278
      %v4280 = vpop.f32.mrf.mxu0
      %v4281 = vpop.f32.mrf.mxu0
      %v4282 = vadd.f32 %v690, %v4281
      %v4283 = vpop.f32.mrf.mxu0
      %4284 = vmatprep.mubr.bf16.mxu0 0
      %4285 = vmatmul.mubr.bf16.gmra.mxu0 %v2495
      %v4286 = vpop.f32.mrf.mxu0
      %v4287 = vadd.f32 %v690, %v4286
      %v4288 = vpop.f32.mrf.mxu0
      %v4289 = vpop.f32.mrf.mxu0
      %v4290 = vadd.f32 %v690, %v4289
      %v4291 = vpop.f32.mrf.mxu0
      %4292 = vmatprep.mubr.bf16.mxu0 0
      %4293 = vmatmul.mubr.bf16.gmra.mxu0 %v2498
      %v4294 = vpop.f32.mrf.mxu0
      %v4295 = vadd.f32 %v690, %v4294
      %v4296 = vpop.f32.mrf.mxu0
      %v4297 = vpop.f32.mrf.mxu0
      %v4298 = vadd.f32 %v690, %v4297
      %v4299 = vpop.f32.mrf.mxu0
      %4300 = vmatprep.mubr.bf16.mxu0 0
      %4301 = vmatmul.mubr.bf16.gmra.mxu0 %v2501
      %v4302 = vpop.f32.mrf.mxu0
      %v4303 = vadd.f32 %v690, %v4302
      %v4304 = vpop.f32.mrf.mxu0
      %v4305 = vpop.f32.mrf.mxu0
      %v4306 = vadd.f32 %v690, %v4305
      %v4307 = vpop.f32.mrf.mxu0
      %4308 = vmatprep.mubr.bf16.mxu0 0
      %4309 = vmatmul.mubr.bf16.gmra.mxu0 %v2504
      %v4310 = vpop.f32.mrf.mxu0
      %v4311 = vadd.f32 %v690, %v4310
      %v4312 = vpop.f32.mrf.mxu0
      %v4313 = vpop.f32.mrf.mxu0
      %v4314 = vadd.f32 %v690, %v4313
      %v4315 = vpop.f32.mrf.mxu0
      %4316 = vmatprep.mubr.bf16.mxu0 0
      %4317 = vmatmul.mubr.bf16.gmra.mxu0 %v2507
      %v4318 = vpop.f32.mrf.mxu0
      %v4319 = vadd.f32 %v690, %v4318
      %v4320 = vpop.f32.mrf.mxu0
      %v4321 = vpop.f32.mrf.mxu0
      %v4322 = vadd.f32 %v690, %v4321
      %v4323 = vpop.f32.mrf.mxu0
      %4324 = vmatprep.mubr.bf16.mxu0 0
      %4325 = vmatmul.mubr.bf16.gmra.mxu0 %v2510
      %v4326 = vpop.f32.mrf.mxu0
      %v4327 = vadd.f32 %v690, %v4326
      %v4328 = vpop.f32.mrf.mxu0
      %v4329 = vpop.f32.mrf.mxu0
      %v4330 = vadd.f32 %v690, %v4329
      %v4331 = vpop.f32.mrf.mxu0
      %4332 = vmatprep.mubr.bf16.mxu0 0
      %4333 = vmatmul.mubr.bf16.gmra.mxu0 %v2513
      %v4334 = vpop.f32.mrf.mxu0
      %v4335 = vadd.f32 %v690, %v4334
      %v4336 = vpop.f32.mrf.mxu0
      %v4337 = vpop.f32.mrf.mxu0
      %v4338 = vadd.f32 %v690, %v4337
      %v4339 = vpop.f32.mrf.mxu0
      %4340 = vmatprep.mubr.bf16.mxu0 0
      %4341 = vmatmul.mubr.bf16.gmra.mxu0 %v2516
      %v4342 = vpop.f32.mrf.mxu0
      %v4343 = vadd.f32 %v690, %v4342
      %v4344 = vpop.f32.mrf.mxu0
      %v4345 = vpop.f32.mrf.mxu0
      %v4346 = vadd.f32 %v690, %v4345
      %v4347 = vpop.f32.mrf.mxu0
      %4348 = vdwg.mxu0
      %v4349 = vmax.f32 %v2559, 0.0
      %v4350 = vmax.f32 %v2562, 0.0
      %v4351 = vmax.f32 %v2567, 0.0
      %v4352 = vmax.f32 %v2570, 0.0
      %v4353 = vmax.f32 %v2575, 0.0
      %v4354 = vmax.f32 %v2578, 0.0
      %v4355 = vmax.f32 %v2583, 0.0
      %v4356 = vmax.f32 %v2586, 0.0
      %v4357 = vmax.f32 %v2591, 0.0
      %v4358 = vmax.f32 %v2594, 0.0
      %v4359 = vmax.f32 %v2599, 0.0
      %v4360 = vmax.f32 %v2602, 0.0
      %v4361 = vmax.f32 %v2607, 0.0
      %v4362 = vmax.f32 %v2610, 0.0
      %v4363 = vmax.f32 %v2615, 0.0
      %v4364 = vmax.f32 %v2618, 0.0
      %v4365 = vmax.f32 %v2623, 0.0
      %v4366 = vmax.f32 %v2626, 0.0
      %v4367 = vmax.f32 %v2631, 0.0
      %v4368 = vmax.f32 %v2634, 0.0
      %v4369 = vmax.f32 %v2639, 0.0
      %v4370 = vmax.f32 %v2642, 0.0
      %v4371 = vmax.f32 %v2647, 0.0
      %v4372 = vmax.f32 %v2650, 0.0
      %v4373 = vmax.f32 %v2655, 0.0
      %v4374 = vmax.f32 %v2658, 0.0
      %v4375 = vmax.f32 %v2663, 0.0
      %v4376 = vmax.f32 %v2666, 0.0
      %v4377 = vmax.f32 %v2671, 0.0
      %v4378 = vmax.f32 %v2674, 0.0
      %v4379 = vmax.f32 %v2679, 0.0
      %v4380 = vmax.f32 %v2682, 0.0
      %v4381 = vmax.f32 %v2687, 0.0
      %v4382 = vmax.f32 %v2690, 0.0
      %v4383 = vmax.f32 %v2695, 0.0
      %v4384 = vmax.f32 %v2698, 0.0
      %v4385 = vmax.f32 %v2703, 0.0
      %v4386 = vmax.f32 %v2706, 0.0
      %v4387 = vmax.f32 %v2711, 0.0
      %v4388 = vmax.f32 %v2714, 0.0
      %v4389 = vmax.f32 %v2719, 0.0
      %v4390 = vmax.f32 %v2722, 0.0
      %v4391 = vmax.f32 %v2727, 0.0
      %v4392 = vmax.f32 %v2730, 0.0
      %v4393 = vmax.f32 %v2735, 0.0
      %v4394 = vmax.f32 %v2738, 0.0
      %v4395 = vmax.f32 %v2743, 0.0
      %v4396 = vmax.f32 %v2746, 0.0
      %v4397 = vmax.f32 %v2751, 0.0
      %v4398 = vmax.f32 %v2754, 0.0
      %v4399 = vmax.f32 %v2759, 0.0
      %v4400 = vmax.f32 %v2762, 0.0
      %v4401 = vmax.f32 %v2767, 0.0
      %v4402 = vmax.f32 %v2770, 0.0
      %v4403 = vmax.f32 %v2775, 0.0
      %v4404 = vmax.f32 %v2778, 0.0
      %v4405 = vmax.f32 %v2783, 0.0
      %v4406 = vmax.f32 %v2786, 0.0
      %v4407 = vmax.f32 %v2791, 0.0
      %v4408 = vmax.f32 %v2794, 0.0
      %v4409 = vmax.f32 %v2799, 0.0
      %v4410 = vmax.f32 %v2802, 0.0
      %v4411 = vmax.f32 %v2807, 0.0
      %v4412 = vmax.f32 %v2810, 0.0
      %v4413 = vmax.f32 %v2815, 0.0
      %v4414 = vmax.f32 %v2818, 0.0
      %v4415 = vmax.f32 %v2823, 0.0
      %v4416 = vmax.f32 %v2826, 0.0
      %v4417 = vmax.f32 %v2831, 0.0
      %v4418 = vmax.f32 %v2834, 0.0
      %v4419 = vmax.f32 %v2839, 0.0
      %v4420 = vmax.f32 %v2842, 0.0
      %v4421 = vmax.f32 %v2847, 0.0
      %v4422 = vmax.f32 %v2850, 0.0
      %v4423 = vmax.f32 %v2855, 0.0
      %v4424 = vmax.f32 %v2858, 0.0
      %v4425 = vmax.f32 %v2863, 0.0
      %v4426 = vmax.f32 %v2866, 0.0
      %v4427 = vmax.f32 %v2871, 0.0
      %v4428 = vmax.f32 %v2874, 0.0
      %v4429 = vmax.f32 %v2879, 0.0
      %v4430 = vmax.f32 %v2882, 0.0
      %v4431 = vmax.f32 %v2887, 0.0
      %v4432 = vmax.f32 %v2890, 0.0
      %v4433 = vmax.f32 %v2895, 0.0
      %v4434 = vmax.f32 %v2898, 0.0
      %v4435 = vmax.f32 %v2903, 0.0
      %v4436 = vmax.f32 %v2906, 0.0
      %v4437 = vmax.f32 %v2911, 0.0
      %v4438 = vmax.f32 %v2914, 0.0
      %v4439 = vmax.f32 %v2919, 0.0
      %v4440 = vmax.f32 %v2922, 0.0
      %v4441 = vmax.f32 %v2927, 0.0
      %v4442 = vmax.f32 %v2930, 0.0
      %v4443 = vmax.f32 %v2935, 0.0
      %v4444 = vmax.f32 %v2938, 0.0
      %v4445 = vmax.f32 %v2943, 0.0
      %v4446 = vmax.f32 %v2946, 0.0
      %v4447 = vmax.f32 %v2951, 0.0
      %v4448 = vmax.f32 %v2954, 0.0
      %v4449 = vmax.f32 %v2959, 0.0
      %v4450 = vmax.f32 %v2962, 0.0
      %v4451 = vmax.f32 %v2967, 0.0
      %v4452 = vmax.f32 %v2970, 0.0
      %v4453 = vmax.f32 %v2975, 0.0
      %v4454 = vmax.f32 %v2978, 0.0
      %v4455 = vmax.f32 %v2983, 0.0
      %v4456 = vmax.f32 %v2986, 0.0
      %v4457 = vmax.f32 %v2991, 0.0
      %v4458 = vmax.f32 %v2994, 0.0
      %v4459 = vmax.f32 %v2999, 0.0
      %v4460 = vmax.f32 %v3002, 0.0
      %v4461 = vmax.f32 %v3007, 0.0
      %v4462 = vmax.f32 %v3010, 0.0
      %v4463 = vmax.f32 %v3015, 0.0
      %v4464 = vmax.f32 %v3018, 0.0
      %v4465 = vmax.f32 %v3023, 0.0
      %v4466 = vmax.f32 %v3026, 0.0
      %v4467 = vmax.f32 %v3031, 0.0
      %v4468 = vmax.f32 %v3034, 0.0
      %v4469 = vmax.f32 %v3039, 0.0
      %v4470 = vmax.f32 %v3042, 0.0
      %v4471 = vmax.f32 %v3047, 0.0
      %v4472 = vmax.f32 %v3050, 0.0
      %v4473 = vmax.f32 %v3055, 0.0
      %v4474 = vmax.f32 %v3058, 0.0
      %v4475 = vmax.f32 %v3063, 0.0
      %v4476 = vmax.f32 %v3066, 0.0
      %v4477 = vmax.f32 %v3071, 0.0
      %v4478 = vmax.f32 %v3074, 0.0
      %v4479 = vmax.f32 %v3079, 0.0
      %v4480 = vmax.f32 %v3082, 0.0
      %v4481 = vmax.f32 %v3087, 0.0
      %v4482 = vmax.f32 %v3090, 0.0
      %v4483 = vmax.f32 %v3095, 0.0
      %v4484 = vmax.f32 %v3098, 0.0
      %v4485 = vmax.f32 %v3103, 0.0
      %v4486 = vmax.f32 %v3106, 0.0
      %v4487 = vmax.f32 %v3111, 0.0
      %v4488 = vmax.f32 %v3114, 0.0
      %v4489 = vmax.f32 %v3119, 0.0
      %v4490 = vmax.f32 %v3122, 0.0
      %v4491 = vmax.f32 %v3127, 0.0
      %v4492 = vmax.f32 %v3130, 0.0
      %v4493 = vmax.f32 %v3135, 0.0
      %v4494 = vmax.f32 %v3138, 0.0
      %v4495 = vmax.f32 %v3143, 0.0
      %v4496 = vmax.f32 %v3146, 0.0
      %v4497 = vmax.f32 %v3151, 0.0
      %v4498 = vmax.f32 %v3154, 0.0
      %v4499 = vmax.f32 %v3159, 0.0
      %v4500 = vmax.f32 %v3162, 0.0
      %v4501 = vmax.f32 %v3167, 0.0
      %v4502 = vmax.f32 %v3170, 0.0
      %v4503 = vmax.f32 %v3175, 0.0
      %v4504 = vmax.f32 %v3178, 0.0
      %v4505 = vmax.f32 %v3183, 0.0
      %v4506 = vmax.f32 %v3186, 0.0
      %v4507 = vmax.f32 %v3191, 0.0
      %v4508 = vmax.f32 %v3194, 0.0
      %v4509 = vmax.f32 %v3199, 0.0
      %v4510 = vmax.f32 %v3202, 0.0
      %v4511 = vmax.f32 %v3207, 0.0
      %v4512 = vmax.f32 %v3210, 0.0
      %v4513 = vmax.f32 %v3215, 0.0
      %v4514 = vmax.f32 %v3218, 0.0
      %v4515 = vmax.f32 %v3223, 0.0
      %v4516 = vmax.f32 %v3226, 0.0
      %v4517 = vmax.f32 %v3231, 0.0
      %v4518 = vmax.f32 %v3234, 0.0
      %v4519 = vmax.f32 %v3239, 0.0
      %v4520 = vmax.f32 %v3242, 0.0
      %v4521 = vmax.f32 %v3247, 0.0
      %v4522 = vmax.f32 %v3250, 0.0
      %v4523 = vmax.f32 %v3255, 0.0
      %v4524 = vmax.f32 %v3258, 0.0
      %v4525 = vmax.f32 %v3263, 0.0
      %v4526 = vmax.f32 %v3266, 0.0
      %v4527 = vmax.f32 %v3271, 0.0
      %v4528 = vmax.f32 %v3274, 0.0
      %v4529 = vmax.f32 %v3279, 0.0
      %v4530 = vmax.f32 %v3282, 0.0
      %v4531 = vmax.f32 %v3287, 0.0
      %v4532 = vmax.f32 %v3290, 0.0
      %v4533 = vmax.f32 %v3295, 0.0
      %v4534 = vmax.f32 %v3298, 0.0
      %v4535 = vmax.f32 %v3303, 0.0
      %v4536 = vmax.f32 %v3306, 0.0
      %v4537 = vmax.f32 %v3311, 0.0
      %v4538 = vmax.f32 %v3314, 0.0
      %v4539 = vmax.f32 %v3319, 0.0
      %v4540 = vmax.f32 %v3322, 0.0
      %v4541 = vmax.f32 %v3327, 0.0
      %v4542 = vmax.f32 %v3330, 0.0
      %v4543 = vmax.f32 %v3335, 0.0
      %v4544 = vmax.f32 %v3338, 0.0
      %v4545 = vmax.f32 %v3343, 0.0
      %v4546 = vmax.f32 %v3346, 0.0
      %v4547 = vmax.f32 %v3351, 0.0
      %v4548 = vmax.f32 %v3354, 0.0
      %v4549 = vmax.f32 %v3359, 0.0
      %v4550 = vmax.f32 %v3362, 0.0
      %v4551 = vmax.f32 %v3367, 0.0
      %v4552 = vmax.f32 %v3370, 0.0
      %v4553 = vmax.f32 %v3375, 0.0
      %v4554 = vmax.f32 %v3378, 0.0
      %v4555 = vmax.f32 %v3383, 0.0
      %v4556 = vmax.f32 %v3386, 0.0
      %v4557 = vmax.f32 %v3391, 0.0
      %v4558 = vmax.f32 %v3394, 0.0
      %v4559 = vmax.f32 %v3399, 0.0
      %v4560 = vmax.f32 %v3402, 0.0
      %v4561 = vmax.f32 %v3407, 0.0
      %v4562 = vmax.f32 %v3410, 0.0
      %v4563 = vmax.f32 %v3415, 0.0
      %v4564 = vmax.f32 %v3418, 0.0
      %v4565 = vmax.f32 %v3423, 0.0
      %v4566 = vmax.f32 %v3426, 0.0
      %v4567 = vmax.f32 %v3431, 0.0
      %v4568 = vmax.f32 %v3434, 0.0
      %v4569 = vmax.f32 %v3439, 0.0
      %v4570 = vmax.f32 %v3442, 0.0
      %v4571 = vmax.f32 %v3447, 0.0
      %v4572 = vmax.f32 %v3450, 0.0
      %v4573 = vmax.f32 %v3455, 0.0
      %v4574 = vmax.f32 %v3458, 0.0
      %v4575 = vmax.f32 %v3463, 0.0
      %v4576 = vmax.f32 %v3466, 0.0
      %v4577 = vmax.f32 %v3471, 0.0
      %v4578 = vmax.f32 %v3474, 0.0
      %v4579 = vmax.f32 %v3479, 0.0
      %v4580 = vmax.f32 %v3482, 0.0
      %v4581 = vmax.f32 %v3487, 0.0
      %v4582 = vmax.f32 %v3490, 0.0
      %v4583 = vmax.f32 %v3495, 0.0
      %v4584 = vmax.f32 %v3498, 0.0
      %v4585 = vmax.f32 %v3503, 0.0
      %v4586 = vmax.f32 %v3506, 0.0
      %v4587 = vmax.f32 %v3511, 0.0
      %v4588 = vmax.f32 %v3514, 0.0
      %v4589 = vmax.f32 %v3519, 0.0
      %v4590 = vmax.f32 %v3522, 0.0
      %v4591 = vmax.f32 %v3527, 0.0
      %v4592 = vmax.f32 %v3530, 0.0
      %v4593 = vmax.f32 %v3535, 0.0
      %v4594 = vmax.f32 %v3538, 0.0
      %v4595 = vmax.f32 %v3543, 0.0
      %v4596 = vmax.f32 %v3546, 0.0
      %v4597 = vmax.f32 %v3551, 0.0
      %v4598 = vmax.f32 %v3554, 0.0
      %v4599 = vmax.f32 %v3559, 0.0
      %v4600 = vmax.f32 %v3562, 0.0
      %v4601 = vmax.f32 %v3567, 0.0
      %v4602 = vmax.f32 %v3570, 0.0
      %v4603 = vmax.f32 %v3575, 0.0
      %v4604 = vmax.f32 %v3578, 0.0
      %v4605 = vmax.f32 %v3583, 0.0
      %v4606 = vmax.f32 %v3586, 0.0
      %v4607 = vmax.f32 %v3591, 0.0
      %v4608 = vmax.f32 %v3594, 0.0
      %v4609 = vmax.f32 %v3599, 0.0
      %v4610 = vmax.f32 %v3602, 0.0
      %v4611 = vmax.f32 %v3607, 0.0
      %v4612 = vmax.f32 %v3610, 0.0
      %v4613 = vmax.f32 %v3615, 0.0
      %v4614 = vmax.f32 %v3618, 0.0
      %v4615 = vmax.f32 %v3623, 0.0
      %v4616 = vmax.f32 %v3626, 0.0
      %v4617 = vmax.f32 %v3631, 0.0
      %v4618 = vmax.f32 %v3634, 0.0
      %v4619 = vmax.f32 %v3639, 0.0
      %v4620 = vmax.f32 %v3642, 0.0
      %v4621 = vmax.f32 %v3647, 0.0
      %v4622 = vmax.f32 %v3650, 0.0
      %v4623 = vmax.f32 %v3655, 0.0
      %v4624 = vmax.f32 %v3658, 0.0
      %v4625 = vmax.f32 %v3663, 0.0
      %v4626 = vmax.f32 %v3666, 0.0
      %v4627 = vmax.f32 %v3671, 0.0
      %v4628 = vmax.f32 %v3674, 0.0
      %v4629 = vmax.f32 %v3679, 0.0
      %v4630 = vmax.f32 %v3682, 0.0
      %v4631 = vmax.f32 %v3687, 0.0
      %v4632 = vmax.f32 %v3690, 0.0
      %v4633 = vmax.f32 %v3695, 0.0
      %v4634 = vmax.f32 %v3698, 0.0
      %v4635 = vmax.f32 %v3703, 0.0
      %v4636 = vmax.f32 %v3706, 0.0
      %v4637 = vmax.f32 %v3711, 0.0
      %v4638 = vmax.f32 %v3714, 0.0
      %v4639 = vmax.f32 %v3719, 0.0
      %v4640 = vmax.f32 %v3722, 0.0
      %v4641 = vmax.f32 %v3727, 0.0
      %v4642 = vmax.f32 %v3730, 0.0
      %v4643 = vmax.f32 %v3735, 0.0
      %v4644 = vmax.f32 %v3738, 0.0
      %v4645 = vmax.f32 %v3743, 0.0
      %v4646 = vmax.f32 %v3746, 0.0
      %v4647 = vmax.f32 %v3751, 0.0
      %v4648 = vmax.f32 %v3754, 0.0
      %v4649 = vmax.f32 %v3759, 0.0
      %v4650 = vmax.f32 %v3762, 0.0
      %v4651 = vmax.f32 %v3767, 0.0
      %v4652 = vmax.f32 %v3770, 0.0
      %v4653 = vmax.f32 %v3775, 0.0
      %v4654 = vmax.f32 %v3778, 0.0
      %v4655 = vmax.f32 %v3783, 0.0
      %v4656 = vmax.f32 %v3786, 0.0
      %v4657 = vmax.f32 %v3791, 0.0
      %v4658 = vmax.f32 %v3794, 0.0
      %v4659 = vmax.f32 %v3799, 0.0
      %v4660 = vmax.f32 %v3802, 0.0
      %v4661 = vmax.f32 %v3807, 0.0
      %v4662 = vmax.f32 %v3810, 0.0
      %v4663 = vmax.f32 %v3815, 0.0
      %v4664 = vmax.f32 %v3818, 0.0
      %v4665 = vmax.f32 %v3823, 0.0
      %v4666 = vmax.f32 %v3826, 0.0
      %v4667 = vmax.f32 %v3831, 0.0
      %v4668 = vmax.f32 %v3834, 0.0
      %v4669 = vmax.f32 %v3839, 0.0
      %v4670 = vmax.f32 %v3842, 0.0
      %v4671 = vmax.f32 %v3847, 0.0
      %v4672 = vmax.f32 %v3850, 0.0
      %v4673 = vmax.f32 %v3855, 0.0
      %v4674 = vmax.f32 %v3858, 0.0
      %v4675 = vmax.f32 %v3863, 0.0
      %v4676 = vmax.f32 %v3866, 0.0
      %v4677 = vmax.f32 %v3871, 0.0
      %v4678 = vmax.f32 %v3874, 0.0
      %v4679 = vmax.f32 %v3879, 0.0
      %v4680 = vmax.f32 %v3882, 0.0
      %v4681 = vmax.f32 %v3887, 0.0
      %v4682 = vmax.f32 %v3890, 0.0
      %v4683 = vmax.f32 %v3895, 0.0
      %v4684 = vmax.f32 %v3898, 0.0
      %v4685 = vmax.f32 %v3903, 0.0
      %v4686 = vmax.f32 %v3906, 0.0
      %v4687 = vmax.f32 %v3911, 0.0
      %v4688 = vmax.f32 %v3914, 0.0
      %v4689 = vmax.f32 %v3919, 0.0
      %v4690 = vmax.f32 %v3922, 0.0
      %v4691 = vmax.f32 %v3927, 0.0
      %v4692 = vmax.f32 %v3930, 0.0
      %v4693 = vmax.f32 %v3935, 0.0
      %v4694 = vmax.f32 %v3938, 0.0
      %v4695 = vmax.f32 %v3943, 0.0
      %v4696 = vmax.f32 %v3946, 0.0
      %v4697 = vmax.f32 %v3951, 0.0
      %v4698 = vmax.f32 %v3954, 0.0
      %v4699 = vmax.f32 %v3959, 0.0
      %v4700 = vmax.f32 %v3962, 0.0
      %v4701 = vmax.f32 %v3967, 0.0
      %v4702 = vmax.f32 %v3970, 0.0
      %v4703 = vmax.f32 %v3975, 0.0
      %v4704 = vmax.f32 %v3978, 0.0
      %v4705 = vmax.f32 %v3983, 0.0
      %v4706 = vmax.f32 %v3986, 0.0
      %v4707 = vmax.f32 %v3991, 0.0
      %v4708 = vmax.f32 %v3994, 0.0
      %v4709 = vmax.f32 %v3999, 0.0
      %v4710 = vmax.f32 %v4002, 0.0
      %v4711 = vmax.f32 %v4007, 0.0
      %v4712 = vmax.f32 %v4010, 0.0
      %v4713 = vmax.f32 %v4015, 0.0
      %v4714 = vmax.f32 %v4018, 0.0
      %v4715 = vmax.f32 %v4023, 0.0
      %v4716 = vmax.f32 %v4026, 0.0
      %v4717 = vmax.f32 %v4031, 0.0
      %v4718 = vmax.f32 %v4034, 0.0
      %v4719 = vmax.f32 %v4039, 0.0
      %v4720 = vmax.f32 %v4042, 0.0
      %v4721 = vmax.f32 %v4047, 0.0
      %v4722 = vmax.f32 %v4050, 0.0
      %v4723 = vmax.f32 %v4055, 0.0
      %v4724 = vmax.f32 %v4058, 0.0
      %v4725 = vmax.f32 %v4063, 0.0
      %v4726 = vmax.f32 %v4066, 0.0
      %v4727 = vmax.f32 %v4071, 0.0
      %v4728 = vmax.f32 %v4074, 0.0
      %v4729 = vmax.f32 %v4079, 0.0
      %v4730 = vmax.f32 %v4082, 0.0
      %v4731 = vmax.f32 %v4087, 0.0
      %v4732 = vmax.f32 %v4090, 0.0
      %v4733 = vmax.f32 %v4095, 0.0
      %v4734 = vmax.f32 %v4098, 0.0
      %v4735 = vmax.f32 %v4103, 0.0
      %v4736 = vmax.f32 %v4106, 0.0
      %v4737 = vmax.f32 %v4111, 0.0
      %v4738 = vmax.f32 %v4114, 0.0
      %v4739 = vmax.f32 %v4119, 0.0
      %v4740 = vmax.f32 %v4122, 0.0
      %v4741 = vmax.f32 %v4127, 0.0
      %v4742 = vmax.f32 %v4130, 0.0
      %v4743 = vmax.f32 %v4135, 0.0
      %v4744 = vmax.f32 %v4138, 0.0
      %v4745 = vmax.f32 %v4143, 0.0
      %v4746 = vmax.f32 %v4146, 0.0
      %v4747 = vmax.f32 %v4151, 0.0
      %v4748 = vmax.f32 %v4154, 0.0
      %v4749 = vmax.f32 %v4159, 0.0
      %v4750 = vmax.f32 %v4162, 0.0
      %v4751 = vmax.f32 %v4167, 0.0
      %v4752 = vmax.f32 %v4170, 0.0
      %v4753 = vmax.f32 %v4175, 0.0
      %v4754 = vmax.f32 %v4178, 0.0
      %v4755 = vmax.f32 %v4183, 0.0
      %v4756 = vmax.f32 %v4186, 0.0
      %v4757 = vmax.f32 %v4191, 0.0
      %v4758 = vmax.f32 %v4194, 0.0
      %v4759 = vmax.f32 %v4199, 0.0
      %v4760 = vmax.f32 %v4202, 0.0
      %v4761 = vmax.f32 %v4207, 0.0
      %v4762 = vmax.f32 %v4210, 0.0
      %v4763 = vmax.f32 %v4215, 0.0
      %v4764 = vmax.f32 %v4218, 0.0
      %v4765 = vmax.f32 %v4223, 0.0
      %v4766 = vmax.f32 %v4226, 0.0
      %v4767 = vmax.f32 %v4231, 0.0
      %v4768 = vmax.f32 %v4234, 0.0
      %v4769 = vmax.f32 %v4239, 0.0
      %v4770 = vmax.f32 %v4242, 0.0
      %v4771 = vmax.f32 %v4247, 0.0
      %v4772 = vmax.f32 %v4250, 0.0
      %v4773 = vmax.f32 %v4255, 0.0
      %v4774 = vmax.f32 %v4258, 0.0
      %v4775 = vmax.f32 %v4263, 0.0
      %v4776 = vmax.f32 %v4266, 0.0
      %v4777 = vmax.f32 %v4271, 0.0
      %v4778 = vmax.f32 %v4274, 0.0
      %v4779 = vmax.f32 %v4279, 0.0
      %v4780 = vmax.f32 %v4282, 0.0
      %v4781 = vmax.f32 %v4287, 0.0
      %v4782 = vmax.f32 %v4290, 0.0
      %v4783 = vmax.f32 %v4295, 0.0
      %v4784 = vmax.f32 %v4298, 0.0
      %v4785 = vmax.f32 %v4303, 0.0
      %v4786 = vmax.f32 %v4306, 0.0
      %v4787 = vmax.f32 %v4311, 0.0
      %v4788 = vmax.f32 %v4314, 0.0
      %v4789 = vmax.f32 %v4319, 0.0
      %v4790 = vmax.f32 %v4322, 0.0
      %v4791 = vmax.f32 %v4327, 0.0
      %v4792 = vmax.f32 %v4330, 0.0
      %v4793 = vmax.f32 %v4335, 0.0
      %v4794 = vmax.f32 %v4338, 0.0
      %v4795 = vmax.f32 %v4343, 0.0
      %v4796 = vmax.f32 %v4346, 0.0
      %v4797 = vpack.c.bf16 %v4350, %v4349
      %v4798 = vpack.c.bf16 %v4352, %v4351
      %v4799 = vpack.c.bf16 %v4354, %v4353
      %v4800 = vpack.c.bf16 %v4356, %v4355
      %v4801 = vpack.c.bf16 %v4358, %v4357
      %v4802 = vpack.c.bf16 %v4360, %v4359
      %v4803 = vpack.c.bf16 %v4362, %v4361
      %v4804 = vpack.c.bf16 %v4364, %v4363
      %v4805 = vpack.c.bf16 %v4366, %v4365
      %v4806 = vpack.c.bf16 %v4368, %v4367
      %v4807 = vpack.c.bf16 %v4370, %v4369
      %v4808 = vpack.c.bf16 %v4372, %v4371
      %v4809 = vpack.c.bf16 %v4374, %v4373
      %v4810 = vpack.c.bf16 %v4376, %v4375
      %v4811 = vpack.c.bf16 %v4378, %v4377
      %v4812 = vpack.c.bf16 %v4380, %v4379
      %v4813 = vpack.c.bf16 %v4382, %v4381
      %v4814 = vpack.c.bf16 %v4384, %v4383
      %v4815 = vpack.c.bf16 %v4386, %v4385
      %v4816 = vpack.c.bf16 %v4388, %v4387
      %v4817 = vpack.c.bf16 %v4390, %v4389
      %v4818 = vpack.c.bf16 %v4392, %v4391
      %v4819 = vpack.c.bf16 %v4394, %v4393
      %v4820 = vpack.c.bf16 %v4396, %v4395
      %v4821 = vpack.c.bf16 %v4398, %v4397
      %v4822 = vpack.c.bf16 %v4400, %v4399
      %v4823 = vpack.c.bf16 %v4402, %v4401
      %v4824 = vpack.c.bf16 %v4404, %v4403
      %v4825 = vpack.c.bf16 %v4406, %v4405
      %v4826 = vpack.c.bf16 %v4408, %v4407
      %v4827 = vpack.c.bf16 %v4410, %v4409
      %v4828 = vpack.c.bf16 %v4412, %v4411
      %v4829 = vpack.c.bf16 %v4414, %v4413
      %v4830 = vpack.c.bf16 %v4416, %v4415
      %v4831 = vpack.c.bf16 %v4418, %v4417
      %v4832 = vpack.c.bf16 %v4420, %v4419
      %v4833 = vpack.c.bf16 %v4422, %v4421
      %v4834 = vpack.c.bf16 %v4424, %v4423
      %v4835 = vpack.c.bf16 %v4426, %v4425
      %v4836 = vpack.c.bf16 %v4428, %v4427
      %v4837 = vpack.c.bf16 %v4430, %v4429
      %v4838 = vpack.c.bf16 %v4432, %v4431
      %v4839 = vpack.c.bf16 %v4434, %v4433
      %v4840 = vpack.c.bf16 %v4436, %v4435
      %v4841 = vpack.c.bf16 %v4438, %v4437
      %v4842 = vpack.c.bf16 %v4440, %v4439
      %v4843 = vpack.c.bf16 %v4442, %v4441
      %v4844 = vpack.c.bf16 %v4444, %v4443
      %v4845 = vpack.c.bf16 %v4446, %v4445
      %v4846 = vpack.c.bf16 %v4448, %v4447
      %v4847 = vpack.c.bf16 %v4450, %v4449
      %v4848 = vpack.c.bf16 %v4452, %v4451
      %v4849 = vpack.c.bf16 %v4454, %v4453
      %v4850 = vpack.c.bf16 %v4456, %v4455
      %v4851 = vpack.c.bf16 %v4458, %v4457
      %v4852 = vpack.c.bf16 %v4460, %v4459
      %v4853 = vpack.c.bf16 %v4462, %v4461
      %v4854 = vpack.c.bf16 %v4464, %v4463
      %v4855 = vpack.c.bf16 %v4466, %v4465
      %v4856 = vpack.c.bf16 %v4468, %v4467
      %v4857 = vpack.c.bf16 %v4470, %v4469
      %v4858 = vpack.c.bf16 %v4472, %v4471
      %v4859 = vpack.c.bf16 %v4474, %v4473
      %v4860 = vpack.c.bf16 %v4476, %v4475
      %v4861 = vpack.c.bf16 %v4478, %v4477
      %v4862 = vpack.c.bf16 %v4480, %v4479
      %v4863 = vpack.c.bf16 %v4482, %v4481
      %v4864 = vpack.c.bf16 %v4484, %v4483
      %v4865 = vpack.c.bf16 %v4486, %v4485
      %v4866 = vpack.c.bf16 %v4488, %v4487
      %v4867 = vpack.c.bf16 %v4490, %v4489
      %v4868 = vpack.c.bf16 %v4492, %v4491
      %v4869 = vpack.c.bf16 %v4494, %v4493
      %v4870 = vpack.c.bf16 %v4496, %v4495
      %v4871 = vpack.c.bf16 %v4498, %v4497
      %v4872 = vpack.c.bf16 %v4500, %v4499
      %v4873 = vpack.c.bf16 %v4502, %v4501
      %v4874 = vpack.c.bf16 %v4504, %v4503
      %v4875 = vpack.c.bf16 %v4506, %v4505
      %v4876 = vpack.c.bf16 %v4508, %v4507
      %v4877 = vpack.c.bf16 %v4510, %v4509
      %v4878 = vpack.c.bf16 %v4512, %v4511
      %v4879 = vpack.c.bf16 %v4514, %v4513
      %v4880 = vpack.c.bf16 %v4516, %v4515
      %v4881 = vpack.c.bf16 %v4518, %v4517
      %v4882 = vpack.c.bf16 %v4520, %v4519
      %v4883 = vpack.c.bf16 %v4522, %v4521
      %v4884 = vpack.c.bf16 %v4524, %v4523
      %v4885 = vpack.c.bf16 %v4526, %v4525
      %v4886 = vpack.c.bf16 %v4528, %v4527
      %v4887 = vpack.c.bf16 %v4530, %v4529
      %v4888 = vpack.c.bf16 %v4532, %v4531
      %v4889 = vpack.c.bf16 %v4534, %v4533
      %v4890 = vpack.c.bf16 %v4536, %v4535
      %v4891 = vpack.c.bf16 %v4538, %v4537
      %v4892 = vpack.c.bf16 %v4540, %v4539
      %v4893 = vpack.c.bf16 %v4542, %v4541
      %v4894 = vpack.c.bf16 %v4544, %v4543
      %v4895 = vpack.c.bf16 %v4546, %v4545
      %v4896 = vpack.c.bf16 %v4548, %v4547
      %v4897 = vpack.c.bf16 %v4550, %v4549
      %v4898 = vpack.c.bf16 %v4552, %v4551
      %v4899 = vpack.c.bf16 %v4554, %v4553
      %v4900 = vpack.c.bf16 %v4556, %v4555
      %v4901 = vpack.c.bf16 %v4558, %v4557
      %v4902 = vpack.c.bf16 %v4560, %v4559
      %v4903 = vpack.c.bf16 %v4562, %v4561
      %v4904 = vpack.c.bf16 %v4564, %v4563
      %v4905 = vpack.c.bf16 %v4566, %v4565
      %v4906 = vpack.c.bf16 %v4568, %v4567
      %v4907 = vpack.c.bf16 %v4570, %v4569
      %v4908 = vpack.c.bf16 %v4572, %v4571
      %v4909 = vpack.c.bf16 %v4574, %v4573
      %v4910 = vpack.c.bf16 %v4576, %v4575
      %v4911 = vpack.c.bf16 %v4578, %v4577
      %v4912 = vpack.c.bf16 %v4580, %v4579
      %v4913 = vpack.c.bf16 %v4582, %v4581
      %v4914 = vpack.c.bf16 %v4584, %v4583
      %v4915 = vpack.c.bf16 %v4586, %v4585
      %v4916 = vpack.c.bf16 %v4588, %v4587
      %v4917 = vpack.c.bf16 %v4590, %v4589
      %v4918 = vpack.c.bf16 %v4592, %v4591
      %v4919 = vpack.c.bf16 %v4594, %v4593
      %v4920 = vpack.c.bf16 %v4596, %v4595
      %v4921 = vpack.c.bf16 %v4598, %v4597
      %v4922 = vpack.c.bf16 %v4600, %v4599
      %v4923 = vpack.c.bf16 %v4602, %v4601
      %v4924 = vpack.c.bf16 %v4604, %v4603
      %v4925 = vpack.c.bf16 %v4606, %v4605
      %v4926 = vpack.c.bf16 %v4608, %v4607
      %v4927 = vpack.c.bf16 %v4610, %v4609
      %v4928 = vpack.c.bf16 %v4612, %v4611
      %v4929 = vpack.c.bf16 %v4614, %v4613
      %v4930 = vpack.c.bf16 %v4616, %v4615
      %v4931 = vpack.c.bf16 %v4618, %v4617
      %v4932 = vpack.c.bf16 %v4620, %v4619
      %v4933 = vpack.c.bf16 %v4622, %v4621
      %v4934 = vpack.c.bf16 %v4624, %v4623
      %v4935 = vpack.c.bf16 %v4626, %v4625
      %v4936 = vpack.c.bf16 %v4628, %v4627
      %v4937 = vpack.c.bf16 %v4630, %v4629
      %v4938 = vpack.c.bf16 %v4632, %v4631
      %v4939 = vpack.c.bf16 %v4634, %v4633
      %v4940 = vpack.c.bf16 %v4636, %v4635
      %v4941 = vpack.c.bf16 %v4638, %v4637
      %v4942 = vpack.c.bf16 %v4640, %v4639
      %v4943 = vpack.c.bf16 %v4642, %v4641
      %v4944 = vpack.c.bf16 %v4644, %v4643
      %v4945 = vpack.c.bf16 %v4646, %v4645
      %v4946 = vpack.c.bf16 %v4648, %v4647
      %v4947 = vpack.c.bf16 %v4650, %v4649
      %v4948 = vpack.c.bf16 %v4652, %v4651
      %v4949 = vpack.c.bf16 %v4654, %v4653
      %v4950 = vpack.c.bf16 %v4656, %v4655
      %v4951 = vpack.c.bf16 %v4658, %v4657
      %v4952 = vpack.c.bf16 %v4660, %v4659
      %v4953 = vpack.c.bf16 %v4662, %v4661
      %v4954 = vpack.c.bf16 %v4664, %v4663
      %v4955 = vpack.c.bf16 %v4666, %v4665
      %v4956 = vpack.c.bf16 %v4668, %v4667
      %v4957 = vpack.c.bf16 %v4670, %v4669
      %v4958 = vpack.c.bf16 %v4672, %v4671
      %v4959 = vpack.c.bf16 %v4674, %v4673
      %v4960 = vpack.c.bf16 %v4676, %v4675
      %v4961 = vpack.c.bf16 %v4678, %v4677
      %v4962 = vpack.c.bf16 %v4680, %v4679
      %v4963 = vpack.c.bf16 %v4682, %v4681
      %v4964 = vpack.c.bf16 %v4684, %v4683
      %v4965 = vpack.c.bf16 %v4686, %v4685
      %v4966 = vpack.c.bf16 %v4688, %v4687
      %v4967 = vpack.c.bf16 %v4690, %v4689
      %v4968 = vpack.c.bf16 %v4692, %v4691
      %v4969 = vpack.c.bf16 %v4694, %v4693
      %v4970 = vpack.c.bf16 %v4696, %v4695
      %v4971 = vpack.c.bf16 %v4698, %v4697
      %v4972 = vpack.c.bf16 %v4700, %v4699
      %v4973 = vpack.c.bf16 %v4702, %v4701
      %v4974 = vpack.c.bf16 %v4704, %v4703
      %v4975 = vpack.c.bf16 %v4706, %v4705
      %v4976 = vpack.c.bf16 %v4708, %v4707
      %v4977 = vpack.c.bf16 %v4710, %v4709
      %v4978 = vpack.c.bf16 %v4712, %v4711
      %v4979 = vpack.c.bf16 %v4714, %v4713
      %v4980 = vpack.c.bf16 %v4716, %v4715
      %v4981 = vpack.c.bf16 %v4718, %v4717
      %v4982 = vpack.c.bf16 %v4720, %v4719
      %v4983 = vpack.c.bf16 %v4722, %v4721
      %v4984 = vpack.c.bf16 %v4724, %v4723
      %v4985 = vpack.c.bf16 %v4726, %v4725
      %v4986 = vpack.c.bf16 %v4728, %v4727
      %v4987 = vpack.c.bf16 %v4730, %v4729
      %v4988 = vpack.c.bf16 %v4732, %v4731
      %v4989 = vpack.c.bf16 %v4734, %v4733
      %v4990 = vpack.c.bf16 %v4736, %v4735
      %v4991 = vpack.c.bf16 %v4738, %v4737
      %v4992 = vpack.c.bf16 %v4740, %v4739
      %v4993 = vpack.c.bf16 %v4742, %v4741
      %v4994 = vpack.c.bf16 %v4744, %v4743
      %v4995 = vpack.c.bf16 %v4746, %v4745
      %v4996 = vpack.c.bf16 %v4748, %v4747
      %v4997 = vpack.c.bf16 %v4750, %v4749
      %v4998 = vpack.c.bf16 %v4752, %v4751
      %v4999 = vpack.c.bf16 %v4754, %v4753
      %v5000 = vpack.c.bf16 %v4756, %v4755
      %v5001 = vpack.c.bf16 %v4758, %v4757
      %v5002 = vpack.c.bf16 %v4760, %v4759
      %v5003 = vpack.c.bf16 %v4762, %v4761
      %v5004 = vpack.c.bf16 %v4764, %v4763
      %v5005 = vpack.c.bf16 %v4766, %v4765
      %v5006 = vpack.c.bf16 %v4768, %v4767
      %v5007 = vpack.c.bf16 %v4770, %v4769
      %v5008 = vpack.c.bf16 %v4772, %v4771
      %v5009 = vpack.c.bf16 %v4774, %v4773
      %v5010 = vpack.c.bf16 %v4776, %v4775
      %v5011 = vpack.c.bf16 %v4778, %v4777
      %v5012 = vpack.c.bf16 %v4780, %v4779
      %v5013 = vpack.c.bf16 %v4782, %v4781
      %v5014 = vpack.c.bf16 %v4784, %v4783
      %v5015 = vpack.c.bf16 %v4786, %v4785
      %v5016 = vpack.c.bf16 %v4788, %v4787
      %v5017 = vpack.c.bf16 %v4790, %v4789
      %v5018 = vpack.c.bf16 %v4792, %v4791
      %v5019 = vpack.c.bf16 %v4794, %v4793
      %v5020 = vpack.c.bf16 %v4796, %v4795
      %v5245 = vunpack.c.l.b16 %v4797
      %v5246 = vunpack.c.h.b16 %v4797
      %v5247 = vunpack.c.l.b16 %v4798
      %v5248 = vunpack.c.h.b16 %v4798
      %v5249 = vunpack.c.l.b16 %v4799
      %v5250 = vunpack.c.h.b16 %v4799
      %v5251 = vunpack.c.l.b16 %v4800
      %v5252 = vunpack.c.h.b16 %v4800
      %v5253 = vunpack.c.l.b16 %v4801
      %v5254 = vunpack.c.h.b16 %v4801
      %v5255 = vunpack.c.l.b16 %v4802
      %v5256 = vunpack.c.h.b16 %v4802
      %v5257 = vunpack.c.l.b16 %v4803
      %v5258 = vunpack.c.h.b16 %v4803
      %v5259 = vunpack.c.l.b16 %v4804
      %v5260 = vunpack.c.h.b16 %v4804
      %v5261 = vunpack.c.l.b16 %v4805
      %v5262 = vunpack.c.h.b16 %v4805
      %v5263 = vunpack.c.l.b16 %v4806
      %v5264 = vunpack.c.h.b16 %v4806
      %v5265 = vunpack.c.l.b16 %v4807
      %v5266 = vunpack.c.h.b16 %v4807
      %v5267 = vunpack.c.l.b16 %v4808
      %v5268 = vunpack.c.h.b16 %v4808
      %v5269 = vunpack.c.l.b16 %v4809
      %v5270 = vunpack.c.h.b16 %v4809
      %v5271 = vunpack.c.l.b16 %v4810
      %v5272 = vunpack.c.h.b16 %v4810
      %v5273 = vunpack.c.l.b16 %v4811
      %v5274 = vunpack.c.h.b16 %v4811
      %v5275 = vunpack.c.l.b16 %v4812
      %v5276 = vunpack.c.h.b16 %v4812
      %v5277 = vunpack.c.l.b16 %v4813
      %v5278 = vunpack.c.h.b16 %v4813
      %v5279 = vunpack.c.l.b16 %v4814
      %v5280 = vunpack.c.h.b16 %v4814
      %v5281 = vunpack.c.l.b16 %v4815
      %v5282 = vunpack.c.h.b16 %v4815
      %v5283 = vunpack.c.l.b16 %v4816
      %v5284 = vunpack.c.h.b16 %v4816
      %v5285 = vunpack.c.l.b16 %v4817
      %v5286 = vunpack.c.h.b16 %v4817
      %v5287 = vunpack.c.l.b16 %v4818
      %v5288 = vunpack.c.h.b16 %v4818
      %v5289 = vunpack.c.l.b16 %v4819
      %v5290 = vunpack.c.h.b16 %v4819
      %v5291 = vunpack.c.l.b16 %v4820
      %v5292 = vunpack.c.h.b16 %v4820
      %v5293 = vunpack.c.l.b16 %v4821
      %v5294 = vunpack.c.h.b16 %v4821
      %v5295 = vunpack.c.l.b16 %v4822
      %v5296 = vunpack.c.h.b16 %v4822
      %v5297 = vunpack.c.l.b16 %v4823
      %v5298 = vunpack.c.h.b16 %v4823
      %v5299 = vunpack.c.l.b16 %v4824
      %v5300 = vunpack.c.h.b16 %v4824
      %v5301 = vunpack.c.l.b16 %v4825
      %v5302 = vunpack.c.h.b16 %v4825
      %v5303 = vunpack.c.l.b16 %v4826
      %v5304 = vunpack.c.h.b16 %v4826
      %v5305 = vunpack.c.l.b16 %v4827
      %v5306 = vunpack.c.h.b16 %v4827
      %v5307 = vunpack.c.l.b16 %v4828
      %v5308 = vunpack.c.h.b16 %v4828
      %v5309 = vunpack.c.l.b16 %v4829
      %v5310 = vunpack.c.h.b16 %v4829
      %v5311 = vunpack.c.l.b16 %v4830
      %v5312 = vunpack.c.h.b16 %v4830
      %v5313 = vunpack.c.l.b16 %v4831
      %v5314 = vunpack.c.h.b16 %v4831
      %v5315 = vunpack.c.l.b16 %v4832
      %v5316 = vunpack.c.h.b16 %v4832
      %v5317 = vunpack.c.l.b16 %v4833
      %v5318 = vunpack.c.h.b16 %v4833
      %v5319 = vunpack.c.l.b16 %v4834
      %v5320 = vunpack.c.h.b16 %v4834
      %v5321 = vunpack.c.l.b16 %v4835
      %v5322 = vunpack.c.h.b16 %v4835
      %v5323 = vunpack.c.l.b16 %v4836
      %v5324 = vunpack.c.h.b16 %v4836
      %v5325 = vunpack.c.l.b16 %v4837
      %v5326 = vunpack.c.h.b16 %v4837
      %v5327 = vunpack.c.l.b16 %v4838
      %v5328 = vunpack.c.h.b16 %v4838
      %v5329 = vunpack.c.l.b16 %v4839
      %v5330 = vunpack.c.h.b16 %v4839
      %v5331 = vunpack.c.l.b16 %v4840
      %v5332 = vunpack.c.h.b16 %v4840
      %v5333 = vunpack.c.l.b16 %v4841
      %v5334 = vunpack.c.h.b16 %v4841
      %v5335 = vunpack.c.l.b16 %v4842
      %v5336 = vunpack.c.h.b16 %v4842
      %v5337 = vunpack.c.l.b16 %v4843
      %v5338 = vunpack.c.h.b16 %v4843
      %v5339 = vunpack.c.l.b16 %v4844
      %v5340 = vunpack.c.h.b16 %v4844
      %v5341 = vunpack.c.l.b16 %v4845
      %v5342 = vunpack.c.h.b16 %v4845
      %v5343 = vunpack.c.l.b16 %v4846
      %v5344 = vunpack.c.h.b16 %v4846
      %v5345 = vunpack.c.l.b16 %v4847
      %v5346 = vunpack.c.h.b16 %v4847
      %v5347 = vunpack.c.l.b16 %v4848
      %v5348 = vunpack.c.h.b16 %v4848
      %v5349 = vunpack.c.l.b16 %v4849
      %v5350 = vunpack.c.h.b16 %v4849
      %v5351 = vunpack.c.l.b16 %v4850
      %v5352 = vunpack.c.h.b16 %v4850
      %v5353 = vunpack.c.l.b16 %v4851
      %v5354 = vunpack.c.h.b16 %v4851
      %v5355 = vunpack.c.l.b16 %v4852
      %v5356 = vunpack.c.h.b16 %v4852
      %v5357 = vunpack.c.l.b16 %v4853
      %v5358 = vunpack.c.h.b16 %v4853
      %v5359 = vunpack.c.l.b16 %v4854
      %v5360 = vunpack.c.h.b16 %v4854
      %v5361 = vunpack.c.l.b16 %v4855
      %v5362 = vunpack.c.h.b16 %v4855
      %v5363 = vunpack.c.l.b16 %v4856
      %v5364 = vunpack.c.h.b16 %v4856
      %v5365 = vunpack.c.l.b16 %v4857
      %v5366 = vunpack.c.h.b16 %v4857
      %v5367 = vunpack.c.l.b16 %v4858
      %v5368 = vunpack.c.h.b16 %v4858
      %v5369 = vunpack.c.l.b16 %v4859
      %v5370 = vunpack.c.h.b16 %v4859
      %v5371 = vunpack.c.l.b16 %v4860
      %v5372 = vunpack.c.h.b16 %v4860
      %v5373 = vunpack.c.l.b16 %v4861
      %v5374 = vunpack.c.h.b16 %v4861
      %v5375 = vunpack.c.l.b16 %v4862
      %v5376 = vunpack.c.h.b16 %v4862
      %v5377 = vunpack.c.l.b16 %v4863
      %v5378 = vunpack.c.h.b16 %v4863
      %v5379 = vunpack.c.l.b16 %v4864
      %v5380 = vunpack.c.h.b16 %v4864
      %v5381 = vunpack.c.l.b16 %v4865
      %v5382 = vunpack.c.h.b16 %v4865
      %v5383 = vunpack.c.l.b16 %v4866
      %v5384 = vunpack.c.h.b16 %v4866
      %v5385 = vunpack.c.l.b16 %v4867
      %v5386 = vunpack.c.h.b16 %v4867
      %v5387 = vunpack.c.l.b16 %v4868
      %v5388 = vunpack.c.h.b16 %v4868
      %v5389 = vunpack.c.l.b16 %v4869
      %v5390 = vunpack.c.h.b16 %v4869
      %v5391 = vunpack.c.l.b16 %v4870
      %v5392 = vunpack.c.h.b16 %v4870
      %v5393 = vunpack.c.l.b16 %v4871
      %v5394 = vunpack.c.h.b16 %v4871
      %v5395 = vunpack.c.l.b16 %v4872
      %v5396 = vunpack.c.h.b16 %v4872
      %v5397 = vunpack.c.l.b16 %v4873
      %v5398 = vunpack.c.h.b16 %v4873
      %v5399 = vunpack.c.l.b16 %v4874
      %v5400 = vunpack.c.h.b16 %v4874
      %v5401 = vunpack.c.l.b16 %v4875
      %v5402 = vunpack.c.h.b16 %v4875
      %v5403 = vunpack.c.l.b16 %v4876
      %v5404 = vunpack.c.h.b16 %v4876
      %v5405 = vunpack.c.l.b16 %v4877
      %v5406 = vunpack.c.h.b16 %v4877
      %v5407 = vunpack.c.l.b16 %v4878
      %v5408 = vunpack.c.h.b16 %v4878
      %v5409 = vunpack.c.l.b16 %v4879
      %v5410 = vunpack.c.h.b16 %v4879
      %v5411 = vunpack.c.l.b16 %v4880
      %v5412 = vunpack.c.h.b16 %v4880
      %v5413 = vunpack.c.l.b16 %v4881
      %v5414 = vunpack.c.h.b16 %v4881
      %v5415 = vunpack.c.l.b16 %v4882
      %v5416 = vunpack.c.h.b16 %v4882
      %v5417 = vunpack.c.l.b16 %v4883
      %v5418 = vunpack.c.h.b16 %v4883
      %v5419 = vunpack.c.l.b16 %v4884
      %v5420 = vunpack.c.h.b16 %v4884
      %v5421 = vunpack.c.l.b16 %v4885
      %v5422 = vunpack.c.h.b16 %v4885
      %v5423 = vunpack.c.l.b16 %v4886
      %v5424 = vunpack.c.h.b16 %v4886
      %v5425 = vunpack.c.l.b16 %v4887
      %v5426 = vunpack.c.h.b16 %v4887
      %v5427 = vunpack.c.l.b16 %v4888
      %v5428 = vunpack.c.h.b16 %v4888
      %v5429 = vunpack.c.l.b16 %v4889
      %v5430 = vunpack.c.h.b16 %v4889
      %v5431 = vunpack.c.l.b16 %v4890
      %v5432 = vunpack.c.h.b16 %v4890
      %v5433 = vunpack.c.l.b16 %v4891
      %v5434 = vunpack.c.h.b16 %v4891
      %v5435 = vunpack.c.l.b16 %v4892
      %v5436 = vunpack.c.h.b16 %v4892
      %v5437 = vunpack.c.l.b16 %v4893
      %v5438 = vunpack.c.h.b16 %v4893
      %v5439 = vunpack.c.l.b16 %v4894
      %v5440 = vunpack.c.h.b16 %v4894
      %v5441 = vunpack.c.l.b16 %v4895
      %v5442 = vunpack.c.h.b16 %v4895
      %v5443 = vunpack.c.l.b16 %v4896
      %v5444 = vunpack.c.h.b16 %v4896
      %v5445 = vunpack.c.l.b16 %v4897
      %v5446 = vunpack.c.h.b16 %v4897
      %v5447 = vunpack.c.l.b16 %v4898
      %v5448 = vunpack.c.h.b16 %v4898
      %v5449 = vunpack.c.l.b16 %v4899
      %v5450 = vunpack.c.h.b16 %v4899
      %v5451 = vunpack.c.l.b16 %v4900
      %v5452 = vunpack.c.h.b16 %v4900
      %v5453 = vunpack.c.l.b16 %v4901
      %v5454 = vunpack.c.h.b16 %v4901
      %v5455 = vunpack.c.l.b16 %v4902
      %v5456 = vunpack.c.h.b16 %v4902
      %v5457 = vunpack.c.l.b16 %v4903
      %v5458 = vunpack.c.h.b16 %v4903
      %v5459 = vunpack.c.l.b16 %v4904
      %v5460 = vunpack.c.h.b16 %v4904
      %v5461 = vunpack.c.l.b16 %v4905
      %v5462 = vunpack.c.h.b16 %v4905
      %v5463 = vunpack.c.l.b16 %v4906
      %v5464 = vunpack.c.h.b16 %v4906
      %v5465 = vunpack.c.l.b16 %v4907
      %v5466 = vunpack.c.h.b16 %v4907
      %v5467 = vunpack.c.l.b16 %v4908
      %v5468 = vunpack.c.h.b16 %v4908
      %v5469 = vunpack.c.l.b16 %v4909
      %v5470 = vunpack.c.h.b16 %v4909
      %v5471 = vunpack.c.l.b16 %v4910
      %v5472 = vunpack.c.h.b16 %v4910
      %v5473 = vunpack.c.l.b16 %v4911
      %v5474 = vunpack.c.h.b16 %v4911
      %v5475 = vunpack.c.l.b16 %v4912
      %v5476 = vunpack.c.h.b16 %v4912
      %v5477 = vunpack.c.l.b16 %v4913
      %v5478 = vunpack.c.h.b16 %v4913
      %v5479 = vunpack.c.l.b16 %v4914
      %v5480 = vunpack.c.h.b16 %v4914
      %v5481 = vunpack.c.l.b16 %v4915
      %v5482 = vunpack.c.h.b16 %v4915
      %v5483 = vunpack.c.l.b16 %v4916
      %v5484 = vunpack.c.h.b16 %v4916
      %v5485 = vunpack.c.l.b16 %v4917
      %v5486 = vunpack.c.h.b16 %v4917
      %v5487 = vunpack.c.l.b16 %v4918
      %v5488 = vunpack.c.h.b16 %v4918
      %v5489 = vunpack.c.l.b16 %v4919
      %v5490 = vunpack.c.h.b16 %v4919
      %v5491 = vunpack.c.l.b16 %v4920
      %v5492 = vunpack.c.h.b16 %v4920
      %v5493 = vunpack.c.l.b16 %v4921
      %v5494 = vunpack.c.h.b16 %v4921
      %v5495 = vunpack.c.l.b16 %v4922
      %v5496 = vunpack.c.h.b16 %v4922
      %v5497 = vunpack.c.l.b16 %v4923
      %v5498 = vunpack.c.h.b16 %v4923
      %v5499 = vunpack.c.l.b16 %v4924
      %v5500 = vunpack.c.h.b16 %v4924
      %v5501 = vunpack.c.l.b16 %v4925
      %v5502 = vunpack.c.h.b16 %v4925
      %v5503 = vunpack.c.l.b16 %v4926
      %v5504 = vunpack.c.h.b16 %v4926
      %v5505 = vunpack.c.l.b16 %v4927
      %v5506 = vunpack.c.h.b16 %v4927
      %v5507 = vunpack.c.l.b16 %v4928
      %v5508 = vunpack.c.h.b16 %v4928
      %v5509 = vunpack.c.l.b16 %v4929
      %v5510 = vunpack.c.h.b16 %v4929
      %v5511 = vunpack.c.l.b16 %v4930
      %v5512 = vunpack.c.h.b16 %v4930
      %v5513 = vunpack.c.l.b16 %v4931
      %v5514 = vunpack.c.h.b16 %v4931
      %v5515 = vunpack.c.l.b16 %v4932
      %v5516 = vunpack.c.h.b16 %v4932
      %v5517 = vunpack.c.l.b16 %v4933
      %v5518 = vunpack.c.h.b16 %v4933
      %v5519 = vunpack.c.l.b16 %v4934
      %v5520 = vunpack.c.h.b16 %v4934
      %v5521 = vunpack.c.l.b16 %v4935
      %v5522 = vunpack.c.h.b16 %v4935
      %v5523 = vunpack.c.l.b16 %v4936
      %v5524 = vunpack.c.h.b16 %v4936
      %v5525 = vunpack.c.l.b16 %v4937
      %v5526 = vunpack.c.h.b16 %v4937
      %v5527 = vunpack.c.l.b16 %v4938
      %v5528 = vunpack.c.h.b16 %v4938
      %v5529 = vunpack.c.l.b16 %v4939
      %v5530 = vunpack.c.h.b16 %v4939
      %v5531 = vunpack.c.l.b16 %v4940
      %v5532 = vunpack.c.h.b16 %v4940
      %v5533 = vunpack.c.l.b16 %v4941
      %v5534 = vunpack.c.h.b16 %v4941
      %v5535 = vunpack.c.l.b16 %v4942
      %v5536 = vunpack.c.h.b16 %v4942
      %v5537 = vunpack.c.l.b16 %v4943
      %v5538 = vunpack.c.h.b16 %v4943
      %v5539 = vunpack.c.l.b16 %v4944
      %v5540 = vunpack.c.h.b16 %v4944
      %v5541 = vunpack.c.l.b16 %v4945
      %v5542 = vunpack.c.h.b16 %v4945
      %v5543 = vunpack.c.l.b16 %v4946
      %v5544 = vunpack.c.h.b16 %v4946
      %v5545 = vunpack.c.l.b16 %v4947
      %v5546 = vunpack.c.h.b16 %v4947
      %v5547 = vunpack.c.l.b16 %v4948
      %v5548 = vunpack.c.h.b16 %v4948
      %v5549 = vunpack.c.l.b16 %v4949
      %v5550 = vunpack.c.h.b16 %v4949
      %v5551 = vunpack.c.l.b16 %v4950
      %v5552 = vunpack.c.h.b16 %v4950
      %v5553 = vunpack.c.l.b16 %v4951
      %v5554 = vunpack.c.h.b16 %v4951
      %v5555 = vunpack.c.l.b16 %v4952
      %v5556 = vunpack.c.h.b16 %v4952
      %v5557 = vunpack.c.l.b16 %v4953
      %v5558 = vunpack.c.h.b16 %v4953
      %v5559 = vunpack.c.l.b16 %v4954
      %v5560 = vunpack.c.h.b16 %v4954
      %v5561 = vunpack.c.l.b16 %v4955
      %v5562 = vunpack.c.h.b16 %v4955
      %v5563 = vunpack.c.l.b16 %v4956
      %v5564 = vunpack.c.h.b16 %v4956
      %v5565 = vunpack.c.l.b16 %v4957
      %v5566 = vunpack.c.h.b16 %v4957
      %v5567 = vunpack.c.l.b16 %v4958
      %v5568 = vunpack.c.h.b16 %v4958
      %v5569 = vunpack.c.l.b16 %v4959
      %v5570 = vunpack.c.h.b16 %v4959
      %v5571 = vunpack.c.l.b16 %v4960
      %v5572 = vunpack.c.h.b16 %v4960
      %v5573 = vunpack.c.l.b16 %v4961
      %v5574 = vunpack.c.h.b16 %v4961
      %v5575 = vunpack.c.l.b16 %v4962
      %v5576 = vunpack.c.h.b16 %v4962
      %v5577 = vunpack.c.l.b16 %v4963
      %v5578 = vunpack.c.h.b16 %v4963
      %v5579 = vunpack.c.l.b16 %v4964
      %v5580 = vunpack.c.h.b16 %v4964
      %v5581 = vunpack.c.l.b16 %v4965
      %v5582 = vunpack.c.h.b16 %v4965
      %v5583 = vunpack.c.l.b16 %v4966
      %v5584 = vunpack.c.h.b16 %v4966
      %v5585 = vunpack.c.l.b16 %v4967
      %v5586 = vunpack.c.h.b16 %v4967
      %v5587 = vunpack.c.l.b16 %v4968
      %v5588 = vunpack.c.h.b16 %v4968
      %v5589 = vunpack.c.l.b16 %v4969
      %v5590 = vunpack.c.h.b16 %v4969
      %v5591 = vunpack.c.l.b16 %v4970
      %v5592 = vunpack.c.h.b16 %v4970
      %v5593 = vunpack.c.l.b16 %v4971
      %v5594 = vunpack.c.h.b16 %v4971
      %v5595 = vunpack.c.l.b16 %v4972
      %v5596 = vunpack.c.h.b16 %v4972
      %v5597 = vunpack.c.l.b16 %v4973
      %v5598 = vunpack.c.h.b16 %v4973
      %v5599 = vunpack.c.l.b16 %v4974
      %v5600 = vunpack.c.h.b16 %v4974
      %v5601 = vunpack.c.l.b16 %v4975
      %v5602 = vunpack.c.h.b16 %v4975
      %v5603 = vunpack.c.l.b16 %v4976
      %v5604 = vunpack.c.h.b16 %v4976
      %v5605 = vunpack.c.l.b16 %v4977
      %v5606 = vunpack.c.h.b16 %v4977
      %v5607 = vunpack.c.l.b16 %v4978
      %v5608 = vunpack.c.h.b16 %v4978
      %v5609 = vunpack.c.l.b16 %v4979
      %v5610 = vunpack.c.h.b16 %v4979
      %v5611 = vunpack.c.l.b16 %v4980
      %v5612 = vunpack.c.h.b16 %v4980
      %v5613 = vunpack.c.l.b16 %v4981
      %v5614 = vunpack.c.h.b16 %v4981
      %v5615 = vunpack.c.l.b16 %v4982
      %v5616 = vunpack.c.h.b16 %v4982
      %v5617 = vunpack.c.l.b16 %v4983
      %v5618 = vunpack.c.h.b16 %v4983
      %v5619 = vunpack.c.l.b16 %v4984
      %v5620 = vunpack.c.h.b16 %v4984
      %v5621 = vunpack.c.l.b16 %v4985
      %v5622 = vunpack.c.h.b16 %v4985
      %v5623 = vunpack.c.l.b16 %v4986
      %v5624 = vunpack.c.h.b16 %v4986
      %v5625 = vunpack.c.l.b16 %v4987
      %v5626 = vunpack.c.h.b16 %v4987
      %v5627 = vunpack.c.l.b16 %v4988
      %v5628 = vunpack.c.h.b16 %v4988
      %v5629 = vunpack.c.l.b16 %v4989
      %v5630 = vunpack.c.h.b16 %v4989
      %v5631 = vunpack.c.l.b16 %v4990
      %v5632 = vunpack.c.h.b16 %v4990
      %v5633 = vunpack.c.l.b16 %v4991
      %v5634 = vunpack.c.h.b16 %v4991
      %v5635 = vunpack.c.l.b16 %v4992
      %v5636 = vunpack.c.h.b16 %v4992
      %v5637 = vunpack.c.l.b16 %v4993
      %v5638 = vunpack.c.h.b16 %v4993
      %v5639 = vunpack.c.l.b16 %v4994
      %v5640 = vunpack.c.h.b16 %v4994
      %v5641 = vunpack.c.l.b16 %v4995
      %v5642 = vunpack.c.h.b16 %v4995
      %v5643 = vunpack.c.l.b16 %v4996
      %v5644 = vunpack.c.h.b16 %v4996
      %v5645 = vunpack.c.l.b16 %v4997
      %v5646 = vunpack.c.h.b16 %v4997
      %v5647 = vunpack.c.l.b16 %v4998
      %v5648 = vunpack.c.h.b16 %v4998
      %v5649 = vunpack.c.l.b16 %v4999
      %v5650 = vunpack.c.h.b16 %v4999
      %v5651 = vunpack.c.l.b16 %v5000
      %v5652 = vunpack.c.h.b16 %v5000
      %v5653 = vunpack.c.l.b16 %v5001
      %v5654 = vunpack.c.h.b16 %v5001
      %v5655 = vunpack.c.l.b16 %v5002
      %v5656 = vunpack.c.h.b16 %v5002
      %v5657 = vunpack.c.l.b16 %v5003
      %v5658 = vunpack.c.h.b16 %v5003
      %v5659 = vunpack.c.l.b16 %v5004
      %v5660 = vunpack.c.h.b16 %v5004
      %v5661 = vunpack.c.l.b16 %v5005
      %v5662 = vunpack.c.h.b16 %v5005
      %v5663 = vunpack.c.l.b16 %v5006
      %v5664 = vunpack.c.h.b16 %v5006
      %v5665 = vunpack.c.l.b16 %v5007
      %v5666 = vunpack.c.h.b16 %v5007
      %v5667 = vunpack.c.l.b16 %v5008
      %v5668 = vunpack.c.h.b16 %v5008
      %v5669 = vunpack.c.l.b16 %v5009
      %v5670 = vunpack.c.h.b16 %v5009
      %v5671 = vunpack.c.l.b16 %v5010
      %v5672 = vunpack.c.h.b16 %v5010
      %v5673 = vunpack.c.l.b16 %v5011
      %v5674 = vunpack.c.h.b16 %v5011
      %v5675 = vunpack.c.l.b16 %v5012
      %v5676 = vunpack.c.h.b16 %v5012
      %v5677 = vunpack.c.l.b16 %v5013
      %v5678 = vunpack.c.h.b16 %v5013
      %v5679 = vunpack.c.l.b16 %v5014
      %v5680 = vunpack.c.h.b16 %v5014
      %v5681 = vunpack.c.l.b16 %v5015
      %v5682 = vunpack.c.h.b16 %v5015
      %v5683 = vunpack.c.l.b16 %v5016
      %v5684 = vunpack.c.h.b16 %v5016
      %v5685 = vunpack.c.l.b16 %v5017
      %v5686 = vunpack.c.h.b16 %v5017
      %v5687 = vunpack.c.l.b16 %v5018
      %v5688 = vunpack.c.h.b16 %v5018
      %v5689 = vunpack.c.l.b16 %v5019
      %v5690 = vunpack.c.h.b16 %v5019
      %v5691 = vunpack.c.l.b16 %v5020
      %v5692 = vunpack.c.h.b16 %v5020
      %v5693 = vpack.c.b16 %v5245, %v5245
      %v5694 = vpack.c.b16 %v5246, %v5246
      %v5695 = vpack.c.b16 %v5247, %v5247
      %v5696 = vpack.c.b16 %v5248, %v5248
      %v5697 = vpack.c.b16 %v5249, %v5249
      %v5698 = vpack.c.b16 %v5250, %v5250
      %v5699 = vpack.c.b16 %v5251, %v5251
      %v5700 = vpack.c.b16 %v5252, %v5252
      %v5701 = vpack.c.b16 %v5253, %v5253
      %v5702 = vpack.c.b16 %v5254, %v5254
      %v5703 = vpack.c.b16 %v5255, %v5255
      %v5704 = vpack.c.b16 %v5256, %v5256
      %v5705 = vpack.c.b16 %v5257, %v5257
      %v5706 = vpack.c.b16 %v5258, %v5258
      %v5707 = vpack.c.b16 %v5259, %v5259
      %v5708 = vpack.c.b16 %v5260, %v5260
      %v5709 = vpack.c.b16 %v5261, %v5261
      %v5710 = vpack.c.b16 %v5262, %v5262
      %v5711 = vpack.c.b16 %v5263, %v5263
      %v5712 = vpack.c.b16 %v5264, %v5264
      %v5713 = vpack.c.b16 %v5265, %v5265
      %v5714 = vpack.c.b16 %v5266, %v5266
      %v5715 = vpack.c.b16 %v5267, %v5267
      %v5716 = vpack.c.b16 %v5268, %v5268
      %v5717 = vpack.c.b16 %v5269, %v5269
      %v5718 = vpack.c.b16 %v5270, %v5270
      %v5719 = vpack.c.b16 %v5271, %v5271
      %v5720 = vpack.c.b16 %v5272, %v5272
      %v5721 = vpack.c.b16 %v5273, %v5273
      %v5722 = vpack.c.b16 %v5274, %v5274
      %v5723 = vpack.c.b16 %v5275, %v5275
      %v5724 = vpack.c.b16 %v5276, %v5276
      %v5725 = vpack.c.b16 %v5277, %v5277
      %v5726 = vpack.c.b16 %v5278, %v5278
      %v5727 = vpack.c.b16 %v5279, %v5279
      %v5728 = vpack.c.b16 %v5280, %v5280
      %v5729 = vpack.c.b16 %v5281, %v5281
      %v5730 = vpack.c.b16 %v5282, %v5282
      %v5731 = vpack.c.b16 %v5283, %v5283
      %v5732 = vpack.c.b16 %v5284, %v5284
      %v5733 = vpack.c.b16 %v5285, %v5285
      %v5734 = vpack.c.b16 %v5286, %v5286
      %v5735 = vpack.c.b16 %v5287, %v5287
      %v5736 = vpack.c.b16 %v5288, %v5288
      %v5737 = vpack.c.b16 %v5289, %v5289
      %v5738 = vpack.c.b16 %v5290, %v5290
      %v5739 = vpack.c.b16 %v5291, %v5291
      %v5740 = vpack.c.b16 %v5292, %v5292
      %v5741 = vpack.c.b16 %v5293, %v5293
      %v5742 = vpack.c.b16 %v5294, %v5294
      %v5743 = vpack.c.b16 %v5295, %v5295
      %v5744 = vpack.c.b16 %v5296, %v5296
      %v5745 = vpack.c.b16 %v5297, %v5297
      %v5746 = vpack.c.b16 %v5298, %v5298
      %v5747 = vpack.c.b16 %v5299, %v5299
      %v5748 = vpack.c.b16 %v5300, %v5300
      %v5749 = vpack.c.b16 %v5301, %v5301
      %v5750 = vpack.c.b16 %v5302, %v5302
      %v5751 = vpack.c.b16 %v5303, %v5303
      %v5752 = vpack.c.b16 %v5304, %v5304
      %v5753 = vpack.c.b16 %v5305, %v5305
      %v5754 = vpack.c.b16 %v5306, %v5306
      %v5755 = vpack.c.b16 %v5307, %v5307
      %v5756 = vpack.c.b16 %v5308, %v5308
      %v5757 = vpack.c.b16 %v5309, %v5309
      %v5758 = vpack.c.b16 %v5310, %v5310
      %v5759 = vpack.c.b16 %v5311, %v5311
      %v5760 = vpack.c.b16 %v5312, %v5312
      %v5761 = vpack.c.b16 %v5313, %v5313
      %v5762 = vpack.c.b16 %v5314, %v5314
      %v5763 = vpack.c.b16 %v5315, %v5315
      %v5764 = vpack.c.b16 %v5316, %v5316
      %v5765 = vpack.c.b16 %v5317, %v5317
      %v5766 = vpack.c.b16 %v5318, %v5318
      %v5767 = vpack.c.b16 %v5319, %v5319
      %v5768 = vpack.c.b16 %v5320, %v5320
      %v5769 = vpack.c.b16 %v5321, %v5321
      %v5770 = vpack.c.b16 %v5322, %v5322
      %v5771 = vpack.c.b16 %v5323, %v5323
      %v5772 = vpack.c.b16 %v5324, %v5324
      %v5773 = vpack.c.b16 %v5325, %v5325
      %v5774 = vpack.c.b16 %v5326, %v5326
      %v5775 = vpack.c.b16 %v5327, %v5327
      %v5776 = vpack.c.b16 %v5328, %v5328
      %v5777 = vpack.c.b16 %v5329, %v5329
      %v5778 = vpack.c.b16 %v5330, %v5330
      %v5779 = vpack.c.b16 %v5331, %v5331
      %v5780 = vpack.c.b16 %v5332, %v5332
      %v5781 = vpack.c.b16 %v5333, %v5333
      %v5782 = vpack.c.b16 %v5334, %v5334
      %v5783 = vpack.c.b16 %v5335, %v5335
      %v5784 = vpack.c.b16 %v5336, %v5336
      %v5785 = vpack.c.b16 %v5337, %v5337
      %v5786 = vpack.c.b16 %v5338, %v5338
      %v5787 = vpack.c.b16 %v5339, %v5339
      %v5788 = vpack.c.b16 %v5340, %v5340
      %v5789 = vpack.c.b16 %v5341, %v5341
      %v5790 = vpack.c.b16 %v5342, %v5342
      %v5791 = vpack.c.b16 %v5343, %v5343
      %v5792 = vpack.c.b16 %v5344, %v5344
      %v5793 = vpack.c.b16 %v5345, %v5345
      %v5794 = vpack.c.b16 %v5346, %v5346
      %v5795 = vpack.c.b16 %v5347, %v5347
      %v5796 = vpack.c.b16 %v5348, %v5348
      %v5797 = vpack.c.b16 %v5349, %v5349
      %v5798 = vpack.c.b16 %v5350, %v5350
      %v5799 = vpack.c.b16 %v5351, %v5351
      %v5800 = vpack.c.b16 %v5352, %v5352
      %v5801 = vpack.c.b16 %v5353, %v5353
      %v5802 = vpack.c.b16 %v5354, %v5354
      %v5803 = vpack.c.b16 %v5355, %v5355
      %v5804 = vpack.c.b16 %v5356, %v5356
      %v5805 = vpack.c.b16 %v5357, %v5357
      %v5806 = vpack.c.b16 %v5358, %v5358
      %v5807 = vpack.c.b16 %v5359, %v5359
      %v5808 = vpack.c.b16 %v5360, %v5360
      %v5809 = vpack.c.b16 %v5361, %v5361
      %v5810 = vpack.c.b16 %v5362, %v5362
      %v5811 = vpack.c.b16 %v5363, %v5363
      %v5812 = vpack.c.b16 %v5364, %v5364
      %v5813 = vpack.c.b16 %v5365, %v5365
      %v5814 = vpack.c.b16 %v5366, %v5366
      %v5815 = vpack.c.b16 %v5367, %v5367
      %v5816 = vpack.c.b16 %v5368, %v5368
      %v5817 = vpack.c.b16 %v5369, %v5369
      %v5818 = vpack.c.b16 %v5370, %v5370
      %v5819 = vpack.c.b16 %v5371, %v5371
      %v5820 = vpack.c.b16 %v5372, %v5372
      %v5821 = vpack.c.b16 %v5373, %v5373
      %v5822 = vpack.c.b16 %v5374, %v5374
      %v5823 = vpack.c.b16 %v5375, %v5375
      %v5824 = vpack.c.b16 %v5376, %v5376
      %v5825 = vpack.c.b16 %v5377, %v5377
      %v5826 = vpack.c.b16 %v5378, %v5378
      %v5827 = vpack.c.b16 %v5379, %v5379
      %v5828 = vpack.c.b16 %v5380, %v5380
      %v5829 = vpack.c.b16 %v5381, %v5381
      %v5830 = vpack.c.b16 %v5382, %v5382
      %v5831 = vpack.c.b16 %v5383, %v5383
      %v5832 = vpack.c.b16 %v5384, %v5384
      %v5833 = vpack.c.b16 %v5385, %v5385
      %v5834 = vpack.c.b16 %v5386, %v5386
      %v5835 = vpack.c.b16 %v5387, %v5387
      %v5836 = vpack.c.b16 %v5388, %v5388
      %v5837 = vpack.c.b16 %v5389, %v5389
      %v5838 = vpack.c.b16 %v5390, %v5390
      %v5839 = vpack.c.b16 %v5391, %v5391
      %v5840 = vpack.c.b16 %v5392, %v5392
      %v5841 = vpack.c.b16 %v5393, %v5393
      %v5842 = vpack.c.b16 %v5394, %v5394
      %v5843 = vpack.c.b16 %v5395, %v5395
      %v5844 = vpack.c.b16 %v5396, %v5396
      %v5845 = vpack.c.b16 %v5397, %v5397
      %v5846 = vpack.c.b16 %v5398, %v5398
      %v5847 = vpack.c.b16 %v5399, %v5399
      %v5848 = vpack.c.b16 %v5400, %v5400
      %v5849 = vpack.c.b16 %v5401, %v5401
      %v5850 = vpack.c.b16 %v5402, %v5402
      %v5851 = vpack.c.b16 %v5403, %v5403
      %v5852 = vpack.c.b16 %v5404, %v5404
      %v5853 = vpack.c.b16 %v5405, %v5405
      %v5854 = vpack.c.b16 %v5406, %v5406
      %v5855 = vpack.c.b16 %v5407, %v5407
      %v5856 = vpack.c.b16 %v5408, %v5408
      %v5857 = vpack.c.b16 %v5409, %v5409
      %v5858 = vpack.c.b16 %v5410, %v5410
      %v5859 = vpack.c.b16 %v5411, %v5411
      %v5860 = vpack.c.b16 %v5412, %v5412
      %v5861 = vpack.c.b16 %v5413, %v5413
      %v5862 = vpack.c.b16 %v5414, %v5414
      %v5863 = vpack.c.b16 %v5415, %v5415
      %v5864 = vpack.c.b16 %v5416, %v5416
      %v5865 = vpack.c.b16 %v5417, %v5417
      %v5866 = vpack.c.b16 %v5418, %v5418
      %v5867 = vpack.c.b16 %v5419, %v5419
      %v5868 = vpack.c.b16 %v5420, %v5420
      %v5869 = vpack.c.b16 %v5421, %v5421
      %v5870 = vpack.c.b16 %v5422, %v5422
      %v5871 = vpack.c.b16 %v5423, %v5423
      %v5872 = vpack.c.b16 %v5424, %v5424
      %v5873 = vpack.c.b16 %v5425, %v5425
      %v5874 = vpack.c.b16 %v5426, %v5426
      %v5875 = vpack.c.b16 %v5427, %v5427
      %v5876 = vpack.c.b16 %v5428, %v5428
      %v5877 = vpack.c.b16 %v5429, %v5429
      %v5878 = vpack.c.b16 %v5430, %v5430
      %v5879 = vpack.c.b16 %v5431, %v5431
      %v5880 = vpack.c.b16 %v5432, %v5432
      %v5881 = vpack.c.b16 %v5433, %v5433
      %v5882 = vpack.c.b16 %v5434, %v5434
      %v5883 = vpack.c.b16 %v5435, %v5435
      %v5884 = vpack.c.b16 %v5436, %v5436
      %v5885 = vpack.c.b16 %v5437, %v5437
      %v5886 = vpack.c.b16 %v5438, %v5438
      %v5887 = vpack.c.b16 %v5439, %v5439
      %v5888 = vpack.c.b16 %v5440, %v5440
      %v5889 = vpack.c.b16 %v5441, %v5441
      %v5890 = vpack.c.b16 %v5442, %v5442
      %v5891 = vpack.c.b16 %v5443, %v5443
      %v5892 = vpack.c.b16 %v5444, %v5444
      %v5893 = vpack.c.b16 %v5445, %v5445
      %v5894 = vpack.c.b16 %v5446, %v5446
      %v5895 = vpack.c.b16 %v5447, %v5447
      %v5896 = vpack.c.b16 %v5448, %v5448
      %v5897 = vpack.c.b16 %v5449, %v5449
      %v5898 = vpack.c.b16 %v5450, %v5450
      %v5899 = vpack.c.b16 %v5451, %v5451
      %v5900 = vpack.c.b16 %v5452, %v5452
      %v5901 = vpack.c.b16 %v5453, %v5453
      %v5902 = vpack.c.b16 %v5454, %v5454
      %v5903 = vpack.c.b16 %v5455, %v5455
      %v5904 = vpack.c.b16 %v5456, %v5456
      %v5905 = vpack.c.b16 %v5457, %v5457
      %v5906 = vpack.c.b16 %v5458, %v5458
      %v5907 = vpack.c.b16 %v5459, %v5459
      %v5908 = vpack.c.b16 %v5460, %v5460
      %v5909 = vpack.c.b16 %v5461, %v5461
      %v5910 = vpack.c.b16 %v5462, %v5462
      %v5911 = vpack.c.b16 %v5463, %v5463
      %v5912 = vpack.c.b16 %v5464, %v5464
      %v5913 = vpack.c.b16 %v5465, %v5465
      %v5914 = vpack.c.b16 %v5466, %v5466
      %v5915 = vpack.c.b16 %v5467, %v5467
      %v5916 = vpack.c.b16 %v5468, %v5468
      %v5917 = vpack.c.b16 %v5469, %v5469
      %v5918 = vpack.c.b16 %v5470, %v5470
      %v5919 = vpack.c.b16 %v5471, %v5471
      %v5920 = vpack.c.b16 %v5472, %v5472
      %v5921 = vpack.c.b16 %v5473, %v5473
      %v5922 = vpack.c.b16 %v5474, %v5474
      %v5923 = vpack.c.b16 %v5475, %v5475
      %v5924 = vpack.c.b16 %v5476, %v5476
      %v5925 = vpack.c.b16 %v5477, %v5477
      %v5926 = vpack.c.b16 %v5478, %v5478
      %v5927 = vpack.c.b16 %v5479, %v5479
      %v5928 = vpack.c.b16 %v5480, %v5480
      %v5929 = vpack.c.b16 %v5481, %v5481
      %v5930 = vpack.c.b16 %v5482, %v5482
      %v5931 = vpack.c.b16 %v5483, %v5483
      %v5932 = vpack.c.b16 %v5484, %v5484
      %v5933 = vpack.c.b16 %v5485, %v5485
      %v5934 = vpack.c.b16 %v5486, %v5486
      %v5935 = vpack.c.b16 %v5487, %v5487
      %v5936 = vpack.c.b16 %v5488, %v5488
      %v5937 = vpack.c.b16 %v5489, %v5489
      %v5938 = vpack.c.b16 %v5490, %v5490
      %v5939 = vpack.c.b16 %v5491, %v5491
      %v5940 = vpack.c.b16 %v5492, %v5492
      %v5941 = vpack.c.b16 %v5493, %v5493
      %v5942 = vpack.c.b16 %v5494, %v5494
      %v5943 = vpack.c.b16 %v5495, %v5495
      %v5944 = vpack.c.b16 %v5496, %v5496
      %v5945 = vpack.c.b16 %v5497, %v5497
      %v5946 = vpack.c.b16 %v5498, %v5498
      %v5947 = vpack.c.b16 %v5499, %v5499
      %v5948 = vpack.c.b16 %v5500, %v5500
      %v5949 = vpack.c.b16 %v5501, %v5501
      %v5950 = vpack.c.b16 %v5502, %v5502
      %v5951 = vpack.c.b16 %v5503, %v5503
      %v5952 = vpack.c.b16 %v5504, %v5504
      %v5953 = vpack.c.b16 %v5505, %v5505
      %v5954 = vpack.c.b16 %v5506, %v5506
      %v5955 = vpack.c.b16 %v5507, %v5507
      %v5956 = vpack.c.b16 %v5508, %v5508
      %v5957 = vpack.c.b16 %v5509, %v5509
      %v5958 = vpack.c.b16 %v5510, %v5510
      %v5959 = vpack.c.b16 %v5511, %v5511
      %v5960 = vpack.c.b16 %v5512, %v5512
      %v5961 = vpack.c.b16 %v5513, %v5513
      %v5962 = vpack.c.b16 %v5514, %v5514
      %v5963 = vpack.c.b16 %v5515, %v5515
      %v5964 = vpack.c.b16 %v5516, %v5516
      %v5965 = vpack.c.b16 %v5517, %v5517
      %v5966 = vpack.c.b16 %v5518, %v5518
      %v5967 = vpack.c.b16 %v5519, %v5519
      %v5968 = vpack.c.b16 %v5520, %v5520
      %v5969 = vpack.c.b16 %v5521, %v5521
      %v5970 = vpack.c.b16 %v5522, %v5522
      %v5971 = vpack.c.b16 %v5523, %v5523
      %v5972 = vpack.c.b16 %v5524, %v5524
      %v5973 = vpack.c.b16 %v5525, %v5525
      %v5974 = vpack.c.b16 %v5526, %v5526
      %v5975 = vpack.c.b16 %v5527, %v5527
      %v5976 = vpack.c.b16 %v5528, %v5528
      %v5977 = vpack.c.b16 %v5529, %v5529
      %v5978 = vpack.c.b16 %v5530, %v5530
      %v5979 = vpack.c.b16 %v5531, %v5531
      %v5980 = vpack.c.b16 %v5532, %v5532
      %v5981 = vpack.c.b16 %v5533, %v5533
      %v5982 = vpack.c.b16 %v5534, %v5534
      %v5983 = vpack.c.b16 %v5535, %v5535
      %v5984 = vpack.c.b16 %v5536, %v5536
      %v5985 = vpack.c.b16 %v5537, %v5537
      %v5986 = vpack.c.b16 %v5538, %v5538
      %v5987 = vpack.c.b16 %v5539, %v5539
      %v5988 = vpack.c.b16 %v5540, %v5540
      %v5989 = vpack.c.b16 %v5541, %v5541
      %v5990 = vpack.c.b16 %v5542, %v5542
      %v5991 = vpack.c.b16 %v5543, %v5543
      %v5992 = vpack.c.b16 %v5544, %v5544
      %v5993 = vpack.c.b16 %v5545, %v5545
      %v5994 = vpack.c.b16 %v5546, %v5546
      %v5995 = vpack.c.b16 %v5547, %v5547
      %v5996 = vpack.c.b16 %v5548, %v5548
      %v5997 = vpack.c.b16 %v5549, %v5549
      %v5998 = vpack.c.b16 %v5550, %v5550
      %v5999 = vpack.c.b16 %v5551, %v5551
      %v6000 = vpack.c.b16 %v5552, %v5552
      %v6001 = vpack.c.b16 %v5553, %v5553
      %v6002 = vpack.c.b16 %v5554, %v5554
      %v6003 = vpack.c.b16 %v5555, %v5555
      %v6004 = vpack.c.b16 %v5556, %v5556
      %v6005 = vpack.c.b16 %v5557, %v5557
      %v6006 = vpack.c.b16 %v5558, %v5558
      %v6007 = vpack.c.b16 %v5559, %v5559
      %v6008 = vpack.c.b16 %v5560, %v5560
      %v6009 = vpack.c.b16 %v5561, %v5561
      %v6010 = vpack.c.b16 %v5562, %v5562
      %v6011 = vpack.c.b16 %v5563, %v5563
      %v6012 = vpack.c.b16 %v5564, %v5564
      %v6013 = vpack.c.b16 %v5565, %v5565
      %v6014 = vpack.c.b16 %v5566, %v5566
      %v6015 = vpack.c.b16 %v5567, %v5567
      %v6016 = vpack.c.b16 %v5568, %v5568
      %v6017 = vpack.c.b16 %v5569, %v5569
      %v6018 = vpack.c.b16 %v5570, %v5570
      %v6019 = vpack.c.b16 %v5571, %v5571
      %v6020 = vpack.c.b16 %v5572, %v5572
      %v6021 = vpack.c.b16 %v5573, %v5573
      %v6022 = vpack.c.b16 %v5574, %v5574
      %v6023 = vpack.c.b16 %v5575, %v5575
      %v6024 = vpack.c.b16 %v5576, %v5576
      %v6025 = vpack.c.b16 %v5577, %v5577
      %v6026 = vpack.c.b16 %v5578, %v5578
      %v6027 = vpack.c.b16 %v5579, %v5579
      %v6028 = vpack.c.b16 %v5580, %v5580
      %v6029 = vpack.c.b16 %v5581, %v5581
      %v6030 = vpack.c.b16 %v5582, %v5582
      %v6031 = vpack.c.b16 %v5583, %v5583
      %v6032 = vpack.c.b16 %v5584, %v5584
      %v6033 = vpack.c.b16 %v5585, %v5585
      %v6034 = vpack.c.b16 %v5586, %v5586
      %v6035 = vpack.c.b16 %v5587, %v5587
      %v6036 = vpack.c.b16 %v5588, %v5588
      %v6037 = vpack.c.b16 %v5589, %v5589
      %v6038 = vpack.c.b16 %v5590, %v5590
      %v6039 = vpack.c.b16 %v5591, %v5591
      %v6040 = vpack.c.b16 %v5592, %v5592
      %v6041 = vpack.c.b16 %v5593, %v5593
      %v6042 = vpack.c.b16 %v5594, %v5594
      %v6043 = vpack.c.b16 %v5595, %v5595
      %v6044 = vpack.c.b16 %v5596, %v5596
      %v6045 = vpack.c.b16 %v5597, %v5597
      %v6046 = vpack.c.b16 %v5598, %v5598
      %v6047 = vpack.c.b16 %v5599, %v5599
      %v6048 = vpack.c.b16 %v5600, %v5600
      %v6049 = vpack.c.b16 %v5601, %v5601
      %v6050 = vpack.c.b16 %v5602, %v5602
      %v6051 = vpack.c.b16 %v5603, %v5603
      %v6052 = vpack.c.b16 %v5604, %v5604
      %v6053 = vpack.c.b16 %v5605, %v5605
      %v6054 = vpack.c.b16 %v5606, %v5606
      %v6055 = vpack.c.b16 %v5607, %v5607
      %v6056 = vpack.c.b16 %v5608, %v5608
      %v6057 = vpack.c.b16 %v5609, %v5609
      %v6058 = vpack.c.b16 %v5610, %v5610
      %v6059 = vpack.c.b16 %v5611, %v5611
      %v6060 = vpack.c.b16 %v5612, %v5612
      %v6061 = vpack.c.b16 %v5613, %v5613
      %v6062 = vpack.c.b16 %v5614, %v5614
      %v6063 = vpack.c.b16 %v5615, %v5615
      %v6064 = vpack.c.b16 %v5616, %v5616
      %v6065 = vpack.c.b16 %v5617, %v5617
      %v6066 = vpack.c.b16 %v5618, %v5618
      %v6067 = vpack.c.b16 %v5619, %v5619
      %v6068 = vpack.c.b16 %v5620, %v5620
      %v6069 = vpack.c.b16 %v5621, %v5621
      %v6070 = vpack.c.b16 %v5622, %v5622
      %v6071 = vpack.c.b16 %v5623, %v5623
      %v6072 = vpack.c.b16 %v5624, %v5624
      %v6073 = vpack.c.b16 %v5625, %v5625
      %v6074 = vpack.c.b16 %v5626, %v5626
      %v6075 = vpack.c.b16 %v5627, %v5627
      %v6076 = vpack.c.b16 %v5628, %v5628
      %v6077 = vpack.c.b16 %v5629, %v5629
      %v6078 = vpack.c.b16 %v5630, %v5630
      %v6079 = vpack.c.b16 %v5631, %v5631
      %v6080 = vpack.c.b16 %v5632, %v5632
      %v6081 = vpack.c.b16 %v5633, %v5633
      %v6082 = vpack.c.b16 %v5634, %v5634
      %v6083 = vpack.c.b16 %v5635, %v5635
      %v6084 = vpack.c.b16 %v5636, %v5636
      %v6085 = vpack.c.b16 %v5637, %v5637
      %v6086 = vpack.c.b16 %v5638, %v5638
      %v6087 = vpack.c.b16 %v5639, %v5639
      %v6088 = vpack.c.b16 %v5640, %v5640
      %v6089 = vpack.c.b16 %v5641, %v5641
      %v6090 = vpack.c.b16 %v5642, %v5642
      %v6091 = vpack.c.b16 %v5643, %v5643
      %v6092 = vpack.c.b16 %v5644, %v5644
      %v6093 = vpack.c.b16 %v5645, %v5645
      %v6094 = vpack.c.b16 %v5646, %v5646
      %v6095 = vpack.c.b16 %v5647, %v5647
      %v6096 = vpack.c.b16 %v5648, %v5648
      %v6097 = vpack.c.b16 %v5649, %v5649
      %v6098 = vpack.c.b16 %v5650, %v5650
      %v6099 = vpack.c.b16 %v5651, %v5651
      %v6100 = vpack.c.b16 %v5652, %v5652
      %v6101 = vpack.c.b16 %v5653, %v5653
      %v6102 = vpack.c.b16 %v5654, %v5654
      %v6103 = vpack.c.b16 %v5655, %v5655
      %v6104 = vpack.c.b16 %v5656, %v5656
      %v6105 = vpack.c.b16 %v5657, %v5657
      %v6106 = vpack.c.b16 %v5658, %v5658
      %v6107 = vpack.c.b16 %v5659, %v5659
      %v6108 = vpack.c.b16 %v5660, %v5660
      %v6109 = vpack.c.b16 %v5661, %v5661
      %v6110 = vpack.c.b16 %v5662, %v5662
      %v6111 = vpack.c.b16 %v5663, %v5663
      %v6112 = vpack.c.b16 %v5664, %v5664
      %v6113 = vpack.c.b16 %v5665, %v5665
      %v6114 = vpack.c.b16 %v5666, %v5666
      %v6115 = vpack.c.b16 %v5667, %v5667
      %v6116 = vpack.c.b16 %v5668, %v5668
      %v6117 = vpack.c.b16 %v5669, %v5669
      %v6118 = vpack.c.b16 %v5670, %v5670
      %v6119 = vpack.c.b16 %v5671, %v5671
      %v6120 = vpack.c.b16 %v5672, %v5672
      %v6121 = vpack.c.b16 %v5673, %v5673
      %v6122 = vpack.c.b16 %v5674, %v5674
      %v6123 = vpack.c.b16 %v5675, %v5675
      %v6124 = vpack.c.b16 %v5676, %v5676
      %v6125 = vpack.c.b16 %v5677, %v5677
      %v6126 = vpack.c.b16 %v5678, %v5678
      %v6127 = vpack.c.b16 %v5679, %v5679
      %v6128 = vpack.c.b16 %v5680, %v5680
      %v6129 = vpack.c.b16 %v5681, %v5681
      %v6130 = vpack.c.b16 %v5682, %v5682
      %v6131 = vpack.c.b16 %v5683, %v5683
      %v6132 = vpack.c.b16 %v5684, %v5684
      %v6133 = vpack.c.b16 %v5685, %v5685
      %v6134 = vpack.c.b16 %v5686, %v5686
      %v6135 = vpack.c.b16 %v5687, %v5687
      %v6136 = vpack.c.b16 %v5688, %v5688
      %v6137 = vpack.c.b16 %v5689, %v5689
      %v6138 = vpack.c.b16 %v5690, %v5690
      %v6139 = vpack.c.b16 %v5691, %v5691
      %v6140 = vpack.c.b16 %v5692, %v5692
      %vm6589 = vcmask 191488
      %6590 = vst.msk [vmem:[%s223] sm:$0xf] %vm6589, %v5693
      %6591 = vst.msk [vmem:[%s223 + $0x4] sm:$0xf] %vm6589, %v5694
      %6592 = vst.msk [vmem:[%s223 + $0x8] sm:$0xf] %vm6589, %v5695
      %6593 = vst.msk [vmem:[%s223 + $0xc] sm:$0xf] %vm6589, %v5696
      %6594 = vst.msk [vmem:[%s223 + $0x10] sm:$0xf] %vm6589, %v5697
      %6595 = vst.msk [vmem:[%s223 + $0x14] sm:$0xf] %vm6589, %v5698
      %6596 = vst.msk [vmem:[%s223 + $0x18] sm:$0xf] %vm6589, %v5699
      %6597 = vst.msk [vmem:[%s223 + $0x1c] sm:$0xf] %vm6589, %v5700
      %6598 = vst.msk [vmem:[%s223 + $0x20] sm:$0xf] %vm6589, %v5701
      %6599 = vst.msk [vmem:[%s223 + $0x24] sm:$0xf] %vm6589, %v5702
      %6600 = vst.msk [vmem:[%s223 + $0x28] sm:$0xf] %vm6589, %v5703
      %6601 = vst.msk [vmem:[%s223 + $0x2c] sm:$0xf] %vm6589, %v5704
      %6602 = vst.msk [vmem:[%s223 + $0x30] sm:$0xf] %vm6589, %v5705
      %6603 = vst.msk [vmem:[%s223 + $0x34] sm:$0xf] %vm6589, %v5706
      %6604 = vst.msk [vmem:[%s223 + $0x38] sm:$0xf] %vm6589, %v5707
      %6605 = vst.msk [vmem:[%s223 + $0x3c] sm:$0xf] %vm6589, %v5708
      %6606 = vst.msk [vmem:[%s223 + $0x40] sm:$0xf] %vm6589, %v5709
      %6607 = vst.msk [vmem:[%s223 + $0x44] sm:$0xf] %vm6589, %v5710
      %6608 = vst.msk [vmem:[%s223 + $0x48] sm:$0xf] %vm6589, %v5711
      %6609 = vst.msk [vmem:[%s223 + $0x4c] sm:$0xf] %vm6589, %v5712
      %6610 = vst.msk [vmem:[%s223 + $0x50] sm:$0xf] %vm6589, %v5713
      %6611 = vst.msk [vmem:[%s223 + $0x54] sm:$0xf] %vm6589, %v5714
      %6612 = vst.msk [vmem:[%s223 + $0x58] sm:$0xf] %vm6589, %v5715
      %6613 = vst.msk [vmem:[%s223 + $0x5c] sm:$0xf] %vm6589, %v5716
      %6614 = vst.msk [vmem:[%s223 + $0x60] sm:$0xf] %vm6589, %v5717
      %6615 = vst.msk [vmem:[%s223 + $0x64] sm:$0xf] %vm6589, %v5718
      %6616 = vst.msk [vmem:[%s223 + $0x68] sm:$0xf] %vm6589, %v5719
      %6617 = vst.msk [vmem:[%s223 + $0x6c] sm:$0xf] %vm6589, %v5720
      %6618 = vst.msk [vmem:[%s223 + $0x70] sm:$0xf] %vm6589, %v5721
      %6619 = vst.msk [vmem:[%s223 + $0x74] sm:$0xf] %vm6589, %v5722
      %6620 = vst.msk [vmem:[%s223 + $0x78] sm:$0xf] %vm6589, %v5723
      %6621 = vst.msk [vmem:[%s223 + $0x7c] sm:$0xf] %vm6589, %v5724
      %6622 = vst.msk [vmem:[%s223 + $0x80] sm:$0xf] %vm6589, %v5725
      %6623 = vst.msk [vmem:[%s223 + $0x84] sm:$0xf] %vm6589, %v5726
      %6624 = vst.msk [vmem:[%s223 + $0x88] sm:$0xf] %vm6589, %v5727
      %6625 = vst.msk [vmem:[%s223 + $0x8c] sm:$0xf] %vm6589, %v5728
      %6626 = vst.msk [vmem:[%s223 + $0x90] sm:$0xf] %vm6589, %v5729
      %6627 = vst.msk [vmem:[%s223 + $0x94] sm:$0xf] %vm6589, %v5730
      %6628 = vst.msk [vmem:[%s223 + $0x98] sm:$0xf] %vm6589, %v5731
      %6629 = vst.msk [vmem:[%s223 + $0x9c] sm:$0xf] %vm6589, %v5732
      %6630 = vst.msk [vmem:[%s223 + $0xa0] sm:$0xf] %vm6589, %v5733
      %6631 = vst.msk [vmem:[%s223 + $0xa4] sm:$0xf] %vm6589, %v5734
      %6632 = vst.msk [vmem:[%s223 + $0xa8] sm:$0xf] %vm6589, %v5735
      %6633 = vst.msk [vmem:[%s223 + $0xac] sm:$0xf] %vm6589, %v5736
      %6634 = vst.msk [vmem:[%s223 + $0xb0] sm:$0xf] %vm6589, %v5737
      %6635 = vst.msk [vmem:[%s223 + $0xb4] sm:$0xf] %vm6589, %v5738
      %6636 = vst.msk [vmem:[%s223 + $0xb8] sm:$0xf] %vm6589, %v5739
      %6637 = vst.msk [vmem:[%s223 + $0xbc] sm:$0xf] %vm6589, %v5740
      %6638 = vst.msk [vmem:[%s223 + $0xc0] sm:$0xf] %vm6589, %v5741
      %6639 = vst.msk [vmem:[%s223 + $0xc4] sm:$0xf] %vm6589, %v5742
      %6640 = vst.msk [vmem:[%s223 + $0xc8] sm:$0xf] %vm6589, %v5743
      %6641 = vst.msk [vmem:[%s223 + $0xcc] sm:$0xf] %vm6589, %v5744
      %6642 = vst.msk [vmem:[%s223 + $0xd0] sm:$0xf] %vm6589, %v5745
      %6643 = vst.msk [vmem:[%s223 + $0xd4] sm:$0xf] %vm6589, %v5746
      %6644 = vst.msk [vmem:[%s223 + $0xd8] sm:$0xf] %vm6589, %v5747
      %6645 = vst.msk [vmem:[%s223 + $0xdc] sm:$0xf] %vm6589, %v5748
      %6646 = vst.msk [vmem:[%s223 + $0xe0] sm:$0xf] %vm6589, %v5749
      %6647 = vst.msk [vmem:[%s223 + $0xe4] sm:$0xf] %vm6589, %v5750
      %6648 = vst.msk [vmem:[%s223 + $0xe8] sm:$0xf] %vm6589, %v5751
      %6649 = vst.msk [vmem:[%s223 + $0xec] sm:$0xf] %vm6589, %v5752
      %6650 = vst.msk [vmem:[%s223 + $0xf0] sm:$0xf] %vm6589, %v5753
      %6651 = vst.msk [vmem:[%s223 + $0xf4] sm:$0xf] %vm6589, %v5754
      %6652 = vst.msk [vmem:[%s223 + $0xf8] sm:$0xf] %vm6589, %v5755
      %6653 = vst.msk [vmem:[%s223 + $0xfc] sm:$0xf] %vm6589, %v5756
      %6654 = vst.msk [vmem:[%s223 + $0x100] sm:$0xf] %vm6589, %v5757
      %6655 = vst.msk [vmem:[%s223 + $0x104] sm:$0xf] %vm6589, %v5758
      %6656 = vst.msk [vmem:[%s223 + $0x108] sm:$0xf] %vm6589, %v5759
      %6657 = vst.msk [vmem:[%s223 + $0x10c] sm:$0xf] %vm6589, %v5760
      %6658 = vst.msk [vmem:[%s223 + $0x110] sm:$0xf] %vm6589, %v5761
      %6659 = vst.msk [vmem:[%s223 + $0x114] sm:$0xf] %vm6589, %v5762
      %6660 = vst.msk [vmem:[%s223 + $0x118] sm:$0xf] %vm6589, %v5763
      %6661 = vst.msk [vmem:[%s223 + $0x11c] sm:$0xf] %vm6589, %v5764
      %6662 = vst.msk [vmem:[%s223 + $0x120] sm:$0xf] %vm6589, %v5765
      %6663 = vst.msk [vmem:[%s223 + $0x124] sm:$0xf] %vm6589, %v5766
      %6664 = vst.msk [vmem:[%s223 + $0x128] sm:$0xf] %vm6589, %v5767
      %6665 = vst.msk [vmem:[%s223 + $0x12c] sm:$0xf] %vm6589, %v5768
      %6666 = vst.msk [vmem:[%s223 + $0x130] sm:$0xf] %vm6589, %v5769
      %6667 = vst.msk [vmem:[%s223 + $0x134] sm:$0xf] %vm6589, %v5770
      %6668 = vst.msk [vmem:[%s223 + $0x138] sm:$0xf] %vm6589, %v5771
      %6669 = vst.msk [vmem:[%s223 + $0x13c] sm:$0xf] %vm6589, %v5772
      %6670 = vst.msk [vmem:[%s223 + $0x140] sm:$0xf] %vm6589, %v5773
      %6671 = vst.msk [vmem:[%s223 + $0x144] sm:$0xf] %vm6589, %v5774
      %6672 = vst.msk [vmem:[%s223 + $0x148] sm:$0xf] %vm6589, %v5775
      %6673 = vst.msk [vmem:[%s223 + $0x14c] sm:$0xf] %vm6589, %v5776
      %6674 = vst.msk [vmem:[%s223 + $0x150] sm:$0xf] %vm6589, %v5777
      %6675 = vst.msk [vmem:[%s223 + $0x154] sm:$0xf] %vm6589, %v5778
      %6676 = vst.msk [vmem:[%s223 + $0x158] sm:$0xf] %vm6589, %v5779
      %6677 = vst.msk [vmem:[%s223 + $0x15c] sm:$0xf] %vm6589, %v5780
      %6678 = vst.msk [vmem:[%s223 + $0x160] sm:$0xf] %vm6589, %v5781
      %6679 = vst.msk [vmem:[%s223 + $0x164] sm:$0xf] %vm6589, %v5782
      %6680 = vst.msk [vmem:[%s223 + $0x168] sm:$0xf] %vm6589, %v5783
      %6681 = vst.msk [vmem:[%s223 + $0x16c] sm:$0xf] %vm6589, %v5784
      %6682 = vst.msk [vmem:[%s223 + $0x170] sm:$0xf] %vm6589, %v5785
      %6683 = vst.msk [vmem:[%s223 + $0x174] sm:$0xf] %vm6589, %v5786
      %6684 = vst.msk [vmem:[%s223 + $0x178] sm:$0xf] %vm6589, %v5787
      %6685 = vst.msk [vmem:[%s223 + $0x17c] sm:$0xf] %vm6589, %v5788
      %6686 = vst.msk [vmem:[%s223 + $0x180] sm:$0xf] %vm6589, %v5789
      %6687 = vst.msk [vmem:[%s223 + $0x184] sm:$0xf] %vm6589, %v5790
      %6688 = vst.msk [vmem:[%s223 + $0x188] sm:$0xf] %vm6589, %v5791
      %6689 = vst.msk [vmem:[%s223 + $0x18c] sm:$0xf] %vm6589, %v5792
      %6690 = vst.msk [vmem:[%s223 + $0x190] sm:$0xf] %vm6589, %v5793
      %6691 = vst.msk [vmem:[%s223 + $0x194] sm:$0xf] %vm6589, %v5794
      %6692 = vst.msk [vmem:[%s223 + $0x198] sm:$0xf] %vm6589, %v5795
      %6693 = vst.msk [vmem:[%s223 + $0x19c] sm:$0xf] %vm6589, %v5796
      %6694 = vst.msk [vmem:[%s223 + $0x1a0] sm:$0xf] %vm6589, %v5797
      %6695 = vst.msk [vmem:[%s223 + $0x1a4] sm:$0xf] %vm6589, %v5798
      %6696 = vst.msk [vmem:[%s223 + $0x1a8] sm:$0xf] %vm6589, %v5799
      %6697 = vst.msk [vmem:[%s223 + $0x1ac] sm:$0xf] %vm6589, %v5800
      %6698 = vst.msk [vmem:[%s223 + $0x1b0] sm:$0xf] %vm6589, %v5801
      %6699 = vst.msk [vmem:[%s223 + $0x1b4] sm:$0xf] %vm6589, %v5802
      %6700 = vst.msk [vmem:[%s223 + $0x1b8] sm:$0xf] %vm6589, %v5803
      %6701 = vst.msk [vmem:[%s223 + $0x1bc] sm:$0xf] %vm6589, %v5804
      %6702 = vst.msk [vmem:[%s223 + $0x1c0] sm:$0xf] %vm6589, %v5805
      %6703 = vst.msk [vmem:[%s223 + $0x1c4] sm:$0xf] %vm6589, %v5806
      %6704 = vst.msk [vmem:[%s223 + $0x1c8] sm:$0xf] %vm6589, %v5807
      %6705 = vst.msk [vmem:[%s223 + $0x1cc] sm:$0xf] %vm6589, %v5808
      %6706 = vst.msk [vmem:[%s223 + $0x1d0] sm:$0xf] %vm6589, %v5809
      %6707 = vst.msk [vmem:[%s223 + $0x1d4] sm:$0xf] %vm6589, %v5810
      %6708 = vst.msk [vmem:[%s223 + $0x1d8] sm:$0xf] %vm6589, %v5811
      %6709 = vst.msk [vmem:[%s223 + $0x1dc] sm:$0xf] %vm6589, %v5812
      %6710 = vst.msk [vmem:[%s223 + $0x1e0] sm:$0xf] %vm6589, %v5813
      %6711 = vst.msk [vmem:[%s223 + $0x1e4] sm:$0xf] %vm6589, %v5814
      %6712 = vst.msk [vmem:[%s223 + $0x1e8] sm:$0xf] %vm6589, %v5815
      %6713 = vst.msk [vmem:[%s223 + $0x1ec] sm:$0xf] %vm6589, %v5816
      %6714 = vst.msk [vmem:[%s223 + $0x1f0] sm:$0xf] %vm6589, %v5817
      %6715 = vst.msk [vmem:[%s223 + $0x1f4] sm:$0xf] %vm6589, %v5818
      %6716 = vst.msk [vmem:[%s223 + $0x1f8] sm:$0xf] %vm6589, %v5819
      %6717 = vst.msk [vmem:[%s223 + $0x1fc] sm:$0xf] %vm6589, %v5820
      %6718 = vst.msk [vmem:[%s223 + $0x200] sm:$0xf] %vm6589, %v5821
      %6719 = vst.msk [vmem:[%s223 + $0x204] sm:$0xf] %vm6589, %v5822
      %6720 = vst.msk [vmem:[%s223 + $0x208] sm:$0xf] %vm6589, %v5823
      %6721 = vst.msk [vmem:[%s223 + $0x20c] sm:$0xf] %vm6589, %v5824
      %6722 = vst.msk [vmem:[%s223 + $0x210] sm:$0xf] %vm6589, %v5825
      %6723 = vst.msk [vmem:[%s223 + $0x214] sm:$0xf] %vm6589, %v5826
      %6724 = vst.msk [vmem:[%s223 + $0x218] sm:$0xf] %vm6589, %v5827
      %6725 = vst.msk [vmem:[%s223 + $0x21c] sm:$0xf] %vm6589, %v5828
      %6726 = vst.msk [vmem:[%s223 + $0x220] sm:$0xf] %vm6589, %v5829
      %6727 = vst.msk [vmem:[%s223 + $0x224] sm:$0xf] %vm6589, %v5830
      %6728 = vst.msk [vmem:[%s223 + $0x228] sm:$0xf] %vm6589, %v5831
      %6729 = vst.msk [vmem:[%s223 + $0x22c] sm:$0xf] %vm6589, %v5832
      %6730 = vst.msk [vmem:[%s223 + $0x230] sm:$0xf] %vm6589, %v5833
      %6731 = vst.msk [vmem:[%s223 + $0x234] sm:$0xf] %vm6589, %v5834
      %6732 = vst.msk [vmem:[%s223 + $0x238] sm:$0xf] %vm6589, %v5835
      %6733 = vst.msk [vmem:[%s223 + $0x23c] sm:$0xf] %vm6589, %v5836
      %6734 = vst.msk [vmem:[%s223 + $0x240] sm:$0xf] %vm6589, %v5837
      %6735 = vst.msk [vmem:[%s223 + $0x244] sm:$0xf] %vm6589, %v5838
      %6736 = vst.msk [vmem:[%s223 + $0x248] sm:$0xf] %vm6589, %v5839
      %6737 = vst.msk [vmem:[%s223 + $0x24c] sm:$0xf] %vm6589, %v5840
      %6738 = vst.msk [vmem:[%s223 + $0x250] sm:$0xf] %vm6589, %v5841
      %6739 = vst.msk [vmem:[%s223 + $0x254] sm:$0xf] %vm6589, %v5842
      %6740 = vst.msk [vmem:[%s223 + $0x258] sm:$0xf] %vm6589, %v5843
      %6741 = vst.msk [vmem:[%s223 + $0x25c] sm:$0xf] %vm6589, %v5844
      %6742 = vst.msk [vmem:[%s223 + $0x260] sm:$0xf] %vm6589, %v5845
      %6743 = vst.msk [vmem:[%s223 + $0x264] sm:$0xf] %vm6589, %v5846
      %6744 = vst.msk [vmem:[%s223 + $0x268] sm:$0xf] %vm6589, %v5847
      %6745 = vst.msk [vmem:[%s223 + $0x26c] sm:$0xf] %vm6589, %v5848
      %6746 = vst.msk [vmem:[%s223 + $0x270] sm:$0xf] %vm6589, %v5849
      %6747 = vst.msk [vmem:[%s223 + $0x274] sm:$0xf] %vm6589, %v5850
      %6748 = vst.msk [vmem:[%s223 + $0x278] sm:$0xf] %vm6589, %v5851
      %6749 = vst.msk [vmem:[%s223 + $0x27c] sm:$0xf] %vm6589, %v5852
      %6750 = vst.msk [vmem:[%s223 + $0x280] sm:$0xf] %vm6589, %v5853
      %6751 = vst.msk [vmem:[%s223 + $0x284] sm:$0xf] %vm6589, %v5854
      %6752 = vst.msk [vmem:[%s223 + $0x288] sm:$0xf] %vm6589, %v5855
      %6753 = vst.msk [vmem:[%s223 + $0x28c] sm:$0xf] %vm6589, %v5856
      %6754 = vst.msk [vmem:[%s223 + $0x290] sm:$0xf] %vm6589, %v5857
      %6755 = vst.msk [vmem:[%s223 + $0x294] sm:$0xf] %vm6589, %v5858
      %6756 = vst.msk [vmem:[%s223 + $0x298] sm:$0xf] %vm6589, %v5859
      %6757 = vst.msk [vmem:[%s223 + $0x29c] sm:$0xf] %vm6589, %v5860
      %6758 = vst.msk [vmem:[%s223 + $0x2a0] sm:$0xf] %vm6589, %v5861
      %6759 = vst.msk [vmem:[%s223 + $0x2a4] sm:$0xf] %vm6589, %v5862
      %6760 = vst.msk [vmem:[%s223 + $0x2a8] sm:$0xf] %vm6589, %v5863
      %6761 = vst.msk [vmem:[%s223 + $0x2ac] sm:$0xf] %vm6589, %v5864
      %6762 = vst.msk [vmem:[%s223 + $0x2b0] sm:$0xf] %vm6589, %v5865
      %6763 = vst.msk [vmem:[%s223 + $0x2b4] sm:$0xf] %vm6589, %v5866
      %6764 = vst.msk [vmem:[%s223 + $0x2b8] sm:$0xf] %vm6589, %v5867
      %6765 = vst.msk [vmem:[%s223 + $0x2bc] sm:$0xf] %vm6589, %v5868
      %6766 = vst.msk [vmem:[%s223 + $0x2c0] sm:$0xf] %vm6589, %v5869
      %6767 = vst.msk [vmem:[%s223 + $0x2c4] sm:$0xf] %vm6589, %v5870
      %6768 = vst.msk [vmem:[%s223 + $0x2c8] sm:$0xf] %vm6589, %v5871
      %6769 = vst.msk [vmem:[%s223 + $0x2cc] sm:$0xf] %vm6589, %v5872
      %6770 = vst.msk [vmem:[%s223 + $0x2d0] sm:$0xf] %vm6589, %v5873
      %6771 = vst.msk [vmem:[%s223 + $0x2d4] sm:$0xf] %vm6589, %v5874
      %6772 = vst.msk [vmem:[%s223 + $0x2d8] sm:$0xf] %vm6589, %v5875
      %6773 = vst.msk [vmem:[%s223 + $0x2dc] sm:$0xf] %vm6589, %v5876
      %6774 = vst.msk [vmem:[%s223 + $0x2e0] sm:$0xf] %vm6589, %v5877
      %6775 = vst.msk [vmem:[%s223 + $0x2e4] sm:$0xf] %vm6589, %v5878
      %6776 = vst.msk [vmem:[%s223 + $0x2e8] sm:$0xf] %vm6589, %v5879
      %6777 = vst.msk [vmem:[%s223 + $0x2ec] sm:$0xf] %vm6589, %v5880
      %6778 = vst.msk [vmem:[%s223 + $0x2f0] sm:$0xf] %vm6589, %v5881
      %6779 = vst.msk [vmem:[%s223 + $0x2f4] sm:$0xf] %vm6589, %v5882
      %6780 = vst.msk [vmem:[%s223 + $0x2f8] sm:$0xf] %vm6589, %v5883
      %6781 = vst.msk [vmem:[%s223 + $0x2fc] sm:$0xf] %vm6589, %v5884
      %6782 = vst.msk [vmem:[%s223 + $0x300] sm:$0xf] %vm6589, %v5885
      %6783 = vst.msk [vmem:[%s223 + $0x304] sm:$0xf] %vm6589, %v5886
      %6784 = vst.msk [vmem:[%s223 + $0x308] sm:$0xf] %vm6589, %v5887
      %6785 = vst.msk [vmem:[%s223 + $0x30c] sm:$0xf] %vm6589, %v5888
      %6786 = vst.msk [vmem:[%s223 + $0x310] sm:$0xf] %vm6589, %v5889
      %6787 = vst.msk [vmem:[%s223 + $0x314] sm:$0xf] %vm6589, %v5890
      %6788 = vst.msk [vmem:[%s223 + $0x318] sm:$0xf] %vm6589, %v5891
      %6789 = vst.msk [vmem:[%s223 + $0x31c] sm:$0xf] %vm6589, %v5892
      %6790 = vst.msk [vmem:[%s223 + $0x320] sm:$0xf] %vm6589, %v5893
      %6791 = vst.msk [vmem:[%s223 + $0x324] sm:$0xf] %vm6589, %v5894
      %6792 = vst.msk [vmem:[%s223 + $0x328] sm:$0xf] %vm6589, %v5895
      %6793 = vst.msk [vmem:[%s223 + $0x32c] sm:$0xf] %vm6589, %v5896
      %6794 = vst.msk [vmem:[%s223 + $0x330] sm:$0xf] %vm6589, %v5897
      %6795 = vst.msk [vmem:[%s223 + $0x334] sm:$0xf] %vm6589, %v5898
      %6796 = vst.msk [vmem:[%s223 + $0x338] sm:$0xf] %vm6589, %v5899
      %6797 = vst.msk [vmem:[%s223 + $0x33c] sm:$0xf] %vm6589, %v5900
      %6798 = vst.msk [vmem:[%s223 + $0x340] sm:$0xf] %vm6589, %v5901
      %6799 = vst.msk [vmem:[%s223 + $0x344] sm:$0xf] %vm6589, %v5902
      %6800 = vst.msk [vmem:[%s223 + $0x348] sm:$0xf] %vm6589, %v5903
      %6801 = vst.msk [vmem:[%s223 + $0x34c] sm:$0xf] %vm6589, %v5904
      %6802 = vst.msk [vmem:[%s223 + $0x350] sm:$0xf] %vm6589, %v5905
      %6803 = vst.msk [vmem:[%s223 + $0x354] sm:$0xf] %vm6589, %v5906
      %6804 = vst.msk [vmem:[%s223 + $0x358] sm:$0xf] %vm6589, %v5907
      %6805 = vst.msk [vmem:[%s223 + $0x35c] sm:$0xf] %vm6589, %v5908
      %6806 = vst.msk [vmem:[%s223 + $0x360] sm:$0xf] %vm6589, %v5909
      %6807 = vst.msk [vmem:[%s223 + $0x364] sm:$0xf] %vm6589, %v5910
      %6808 = vst.msk [vmem:[%s223 + $0x368] sm:$0xf] %vm6589, %v5911
      %6809 = vst.msk [vmem:[%s223 + $0x36c] sm:$0xf] %vm6589, %v5912
      %6810 = vst.msk [vmem:[%s223 + $0x370] sm:$0xf] %vm6589, %v5913
      %6811 = vst.msk [vmem:[%s223 + $0x374] sm:$0xf] %vm6589, %v5914
      %6812 = vst.msk [vmem:[%s223 + $0x378] sm:$0xf] %vm6589, %v5915
      %6813 = vst.msk [vmem:[%s223 + $0x37c] sm:$0xf] %vm6589, %v5916
      %6814 = vst.msk [vmem:[%s223 + $0x380] sm:$0xf] %vm6589, %v5917
      %6815 = vst.msk [vmem:[%s223 + $0x384] sm:$0xf] %vm6589, %v5918
      %6816 = vst.msk [vmem:[%s223 + $0x388] sm:$0xf] %vm6589, %v5919
      %6817 = vst.msk [vmem:[%s223 + $0x38c] sm:$0xf] %vm6589, %v5920
      %6818 = vst.msk [vmem:[%s223 + $0x390] sm:$0xf] %vm6589, %v5921
      %6819 = vst.msk [vmem:[%s223 + $0x394] sm:$0xf] %vm6589, %v5922
      %6820 = vst.msk [vmem:[%s223 + $0x398] sm:$0xf] %vm6589, %v5923
      %6821 = vst.msk [vmem:[%s223 + $0x39c] sm:$0xf] %vm6589, %v5924
      %6822 = vst.msk [vmem:[%s223 + $0x3a0] sm:$0xf] %vm6589, %v5925
      %6823 = vst.msk [vmem:[%s223 + $0x3a4] sm:$0xf] %vm6589, %v5926
      %6824 = vst.msk [vmem:[%s223 + $0x3a8] sm:$0xf] %vm6589, %v5927
      %6825 = vst.msk [vmem:[%s223 + $0x3ac] sm:$0xf] %vm6589, %v5928
      %6826 = vst.msk [vmem:[%s223 + $0x3b0] sm:$0xf] %vm6589, %v5929
      %6827 = vst.msk [vmem:[%s223 + $0x3b4] sm:$0xf] %vm6589, %v5930
      %6828 = vst.msk [vmem:[%s223 + $0x3b8] sm:$0xf] %vm6589, %v5931
      %6829 = vst.msk [vmem:[%s223 + $0x3bc] sm:$0xf] %vm6589, %v5932
      %6830 = vst.msk [vmem:[%s223 + $0x3c0] sm:$0xf] %vm6589, %v5933
      %6831 = vst.msk [vmem:[%s223 + $0x3c4] sm:$0xf] %vm6589, %v5934
      %6832 = vst.msk [vmem:[%s223 + $0x3c8] sm:$0xf] %vm6589, %v5935
      %6833 = vst.msk [vmem:[%s223 + $0x3cc] sm:$0xf] %vm6589, %v5936
      %6834 = vst.msk [vmem:[%s223 + $0x3d0] sm:$0xf] %vm6589, %v5937
      %6835 = vst.msk [vmem:[%s223 + $0x3d4] sm:$0xf] %vm6589, %v5938
      %6836 = vst.msk [vmem:[%s223 + $0x3d8] sm:$0xf] %vm6589, %v5939
      %6837 = vst.msk [vmem:[%s223 + $0x3dc] sm:$0xf] %vm6589, %v5940
      %6838 = vst.msk [vmem:[%s223 + $0x3e0] sm:$0xf] %vm6589, %v5941
      %6839 = vst.msk [vmem:[%s223 + $0x3e4] sm:$0xf] %vm6589, %v5942
      %6840 = vst.msk [vmem:[%s223 + $0x3e8] sm:$0xf] %vm6589, %v5943
      %6841 = vst.msk [vmem:[%s223 + $0x3ec] sm:$0xf] %vm6589, %v5944
      %6842 = vst.msk [vmem:[%s223 + $0x3f0] sm:$0xf] %vm6589, %v5945
      %6843 = vst.msk [vmem:[%s223 + $0x3f4] sm:$0xf] %vm6589, %v5946
      %6844 = vst.msk [vmem:[%s223 + $0x3f8] sm:$0xf] %vm6589, %v5947
      %6845 = vst.msk [vmem:[%s223 + $0x3fc] sm:$0xf] %vm6589, %v5948
      %6846 = vst.msk [vmem:[%s223 + $0x400] sm:$0xf] %vm6589, %v5949
      %6847 = vst.msk [vmem:[%s223 + $0x404] sm:$0xf] %vm6589, %v5950
      %6848 = vst.msk [vmem:[%s223 + $0x408] sm:$0xf] %vm6589, %v5951
      %6849 = vst.msk [vmem:[%s223 + $0x40c] sm:$0xf] %vm6589, %v5952
      %6850 = vst.msk [vmem:[%s223 + $0x410] sm:$0xf] %vm6589, %v5953
      %6851 = vst.msk [vmem:[%s223 + $0x414] sm:$0xf] %vm6589, %v5954
      %6852 = vst.msk [vmem:[%s223 + $0x418] sm:$0xf] %vm6589, %v5955
      %6853 = vst.msk [vmem:[%s223 + $0x41c] sm:$0xf] %vm6589, %v5956
      %6854 = vst.msk [vmem:[%s223 + $0x420] sm:$0xf] %vm6589, %v5957
      %6855 = vst.msk [vmem:[%s223 + $0x424] sm:$0xf] %vm6589, %v5958
      %6856 = vst.msk [vmem:[%s223 + $0x428] sm:$0xf] %vm6589, %v5959
      %6857 = vst.msk [vmem:[%s223 + $0x42c] sm:$0xf] %vm6589, %v5960
      %6858 = vst.msk [vmem:[%s223 + $0x430] sm:$0xf] %vm6589, %v5961
      %6859 = vst.msk [vmem:[%s223 + $0x434] sm:$0xf] %vm6589, %v5962
      %6860 = vst.msk [vmem:[%s223 + $0x438] sm:$0xf] %vm6589, %v5963
      %6861 = vst.msk [vmem:[%s223 + $0x43c] sm:$0xf] %vm6589, %v5964
      %6862 = vst.msk [vmem:[%s223 + $0x440] sm:$0xf] %vm6589, %v5965
      %6863 = vst.msk [vmem:[%s223 + $0x444] sm:$0xf] %vm6589, %v5966
      %6864 = vst.msk [vmem:[%s223 + $0x448] sm:$0xf] %vm6589, %v5967
      %6865 = vst.msk [vmem:[%s223 + $0x44c] sm:$0xf] %vm6589, %v5968
      %6866 = vst.msk [vmem:[%s223 + $0x450] sm:$0xf] %vm6589, %v5969
      %6867 = vst.msk [vmem:[%s223 + $0x454] sm:$0xf] %vm6589, %v5970
      %6868 = vst.msk [vmem:[%s223 + $0x458] sm:$0xf] %vm6589, %v5971
      %6869 = vst.msk [vmem:[%s223 + $0x45c] sm:$0xf] %vm6589, %v5972
      %6870 = vst.msk [vmem:[%s223 + $0x460] sm:$0xf] %vm6589, %v5973
      %6871 = vst.msk [vmem:[%s223 + $0x464] sm:$0xf] %vm6589, %v5974
      %6872 = vst.msk [vmem:[%s223 + $0x468] sm:$0xf] %vm6589, %v5975
      %6873 = vst.msk [vmem:[%s223 + $0x46c] sm:$0xf] %vm6589, %v5976
      %6874 = vst.msk [vmem:[%s223 + $0x470] sm:$0xf] %vm6589, %v5977
      %6875 = vst.msk [vmem:[%s223 + $0x474] sm:$0xf] %vm6589, %v5978
      %6876 = vst.msk [vmem:[%s223 + $0x478] sm:$0xf] %vm6589, %v5979
      %6877 = vst.msk [vmem:[%s223 + $0x47c] sm:$0xf] %vm6589, %v5980
      %6878 = vst.msk [vmem:[%s223 + $0x480] sm:$0xf] %vm6589, %v5981
      %6879 = vst.msk [vmem:[%s223 + $0x484] sm:$0xf] %vm6589, %v5982
      %6880 = vst.msk [vmem:[%s223 + $0x488] sm:$0xf] %vm6589, %v5983
      %6881 = vst.msk [vmem:[%s223 + $0x48c] sm:$0xf] %vm6589, %v5984
      %6882 = vst.msk [vmem:[%s223 + $0x490] sm:$0xf] %vm6589, %v5985
      %6883 = vst.msk [vmem:[%s223 + $0x494] sm:$0xf] %vm6589, %v5986
      %6884 = vst.msk [vmem:[%s223 + $0x498] sm:$0xf] %vm6589, %v5987
      %6885 = vst.msk [vmem:[%s223 + $0x49c] sm:$0xf] %vm6589, %v5988
      %6886 = vst.msk [vmem:[%s223 + $0x4a0] sm:$0xf] %vm6589, %v5989
      %6887 = vst.msk [vmem:[%s223 + $0x4a4] sm:$0xf] %vm6589, %v5990
      %6888 = vst.msk [vmem:[%s223 + $0x4a8] sm:$0xf] %vm6589, %v5991
      %6889 = vst.msk [vmem:[%s223 + $0x4ac] sm:$0xf] %vm6589, %v5992
      %6890 = vst.msk [vmem:[%s223 + $0x4b0] sm:$0xf] %vm6589, %v5993
      %6891 = vst.msk [vmem:[%s223 + $0x4b4] sm:$0xf] %vm6589, %v5994
      %6892 = vst.msk [vmem:[%s223 + $0x4b8] sm:$0xf] %vm6589, %v5995
      %6893 = vst.msk [vmem:[%s223 + $0x4bc] sm:$0xf] %vm6589, %v5996
      %6894 = vst.msk [vmem:[%s223 + $0x4c0] sm:$0xf] %vm6589, %v5997
      %6895 = vst.msk [vmem:[%s223 + $0x4c4] sm:$0xf] %vm6589, %v5998
      %6896 = vst.msk [vmem:[%s223 + $0x4c8] sm:$0xf] %vm6589, %v5999
      %6897 = vst.msk [vmem:[%s223 + $0x4cc] sm:$0xf] %vm6589, %v6000
      %6898 = vst.msk [vmem:[%s223 + $0x4d0] sm:$0xf] %vm6589, %v6001
      %6899 = vst.msk [vmem:[%s223 + $0x4d4] sm:$0xf] %vm6589, %v6002
      %6900 = vst.msk [vmem:[%s223 + $0x4d8] sm:$0xf] %vm6589, %v6003
      %6901 = vst.msk [vmem:[%s223 + $0x4dc] sm:$0xf] %vm6589, %v6004
      %6902 = vst.msk [vmem:[%s223 + $0x4e0] sm:$0xf] %vm6589, %v6005
      %6903 = vst.msk [vmem:[%s223 + $0x4e4] sm:$0xf] %vm6589, %v6006
      %6904 = vst.msk [vmem:[%s223 + $0x4e8] sm:$0xf] %vm6589, %v6007
      %6905 = vst.msk [vmem:[%s223 + $0x4ec] sm:$0xf] %vm6589, %v6008
      %6906 = vst.msk [vmem:[%s223 + $0x4f0] sm:$0xf] %vm6589, %v6009
      %6907 = vst.msk [vmem:[%s223 + $0x4f4] sm:$0xf] %vm6589, %v6010
      %6908 = vst.msk [vmem:[%s223 + $0x4f8] sm:$0xf] %vm6589, %v6011
      %6909 = vst.msk [vmem:[%s223 + $0x4fc] sm:$0xf] %vm6589, %v6012
      %6910 = vst.msk [vmem:[%s223 + $0x500] sm:$0xf] %vm6589, %v6013
      %6911 = vst.msk [vmem:[%s223 + $0x504] sm:$0xf] %vm6589, %v6014
      %6912 = vst.msk [vmem:[%s223 + $0x508] sm:$0xf] %vm6589, %v6015
      %6913 = vst.msk [vmem:[%s223 + $0x50c] sm:$0xf] %vm6589, %v6016
      %6914 = vst.msk [vmem:[%s223 + $0x510] sm:$0xf] %vm6589, %v6017
      %6915 = vst.msk [vmem:[%s223 + $0x514] sm:$0xf] %vm6589, %v6018
      %6916 = vst.msk [vmem:[%s223 + $0x518] sm:$0xf] %vm6589, %v6019
      %6917 = vst.msk [vmem:[%s223 + $0x51c] sm:$0xf] %vm6589, %v6020
      %6918 = vst.msk [vmem:[%s223 + $0x520] sm:$0xf] %vm6589, %v6021
      %6919 = vst.msk [vmem:[%s223 + $0x524] sm:$0xf] %vm6589, %v6022
      %6920 = vst.msk [vmem:[%s223 + $0x528] sm:$0xf] %vm6589, %v6023
      %6921 = vst.msk [vmem:[%s223 + $0x52c] sm:$0xf] %vm6589, %v6024
      %6922 = vst.msk [vmem:[%s223 + $0x530] sm:$0xf] %vm6589, %v6025
      %6923 = vst.msk [vmem:[%s223 + $0x534] sm:$0xf] %vm6589, %v6026
      %6924 = vst.msk [vmem:[%s223 + $0x538] sm:$0xf] %vm6589, %v6027
      %6925 = vst.msk [vmem:[%s223 + $0x53c] sm:$0xf] %vm6589, %v6028
      %6926 = vst.msk [vmem:[%s223 + $0x540] sm:$0xf] %vm6589, %v6029
      %6927 = vst.msk [vmem:[%s223 + $0x544] sm:$0xf] %vm6589, %v6030
      %6928 = vst.msk [vmem:[%s223 + $0x548] sm:$0xf] %vm6589, %v6031
      %6929 = vst.msk [vmem:[%s223 + $0x54c] sm:$0xf] %vm6589, %v6032
      %6930 = vst.msk [vmem:[%s223 + $0x550] sm:$0xf] %vm6589, %v6033
      %6931 = vst.msk [vmem:[%s223 + $0x554] sm:$0xf] %vm6589, %v6034
      %6932 = vst.msk [vmem:[%s223 + $0x558] sm:$0xf] %vm6589, %v6035
      %6933 = vst.msk [vmem:[%s223 + $0x55c] sm:$0xf] %vm6589, %v6036
      %6934 = vst.msk [vmem:[%s223 + $0x560] sm:$0xf] %vm6589, %v6037
      %6935 = vst.msk [vmem:[%s223 + $0x564] sm:$0xf] %vm6589, %v6038
      %6936 = vst.msk [vmem:[%s223 + $0x568] sm:$0xf] %vm6589, %v6039
      %6937 = vst.msk [vmem:[%s223 + $0x56c] sm:$0xf] %vm6589, %v6040
      %6938 = vst.msk [vmem:[%s223 + $0x570] sm:$0xf] %vm6589, %v6041
      %6939 = vst.msk [vmem:[%s223 + $0x574] sm:$0xf] %vm6589, %v6042
      %6940 = vst.msk [vmem:[%s223 + $0x578] sm:$0xf] %vm6589, %v6043
      %6941 = vst.msk [vmem:[%s223 + $0x57c] sm:$0xf] %vm6589, %v6044
      %6942 = vst.msk [vmem:[%s223 + $0x580] sm:$0xf] %vm6589, %v6045
      %6943 = vst.msk [vmem:[%s223 + $0x584] sm:$0xf] %vm6589, %v6046
      %6944 = vst.msk [vmem:[%s223 + $0x588] sm:$0xf] %vm6589, %v6047
      %6945 = vst.msk [vmem:[%s223 + $0x58c] sm:$0xf] %vm6589, %v6048
      %6946 = vst.msk [vmem:[%s223 + $0x590] sm:$0xf] %vm6589, %v6049
      %6947 = vst.msk [vmem:[%s223 + $0x594] sm:$0xf] %vm6589, %v6050
      %6948 = vst.msk [vmem:[%s223 + $0x598] sm:$0xf] %vm6589, %v6051
      %6949 = vst.msk [vmem:[%s223 + $0x59c] sm:$0xf] %vm6589, %v6052
      %6950 = vst.msk [vmem:[%s223 + $0x5a0] sm:$0xf] %vm6589, %v6053
      %6951 = vst.msk [vmem:[%s223 + $0x5a4] sm:$0xf] %vm6589, %v6054
      %6952 = vst.msk [vmem:[%s223 + $0x5a8] sm:$0xf] %vm6589, %v6055
      %6953 = vst.msk [vmem:[%s223 + $0x5ac] sm:$0xf] %vm6589, %v6056
      %6954 = vst.msk [vmem:[%s223 + $0x5b0] sm:$0xf] %vm6589, %v6057
      %6955 = vst.msk [vmem:[%s223 + $0x5b4] sm:$0xf] %vm6589, %v6058
      %6956 = vst.msk [vmem:[%s223 + $0x5b8] sm:$0xf] %vm6589, %v6059
      %6957 = vst.msk [vmem:[%s223 + $0x5bc] sm:$0xf] %vm6589, %v6060
      %6958 = vst.msk [vmem:[%s223 + $0x5c0] sm:$0xf] %vm6589, %v6061
      %6959 = vst.msk [vmem:[%s223 + $0x5c4] sm:$0xf] %vm6589, %v6062
      %6960 = vst.msk [vmem:[%s223 + $0x5c8] sm:$0xf] %vm6589, %v6063
      %6961 = vst.msk [vmem:[%s223 + $0x5cc] sm:$0xf] %vm6589, %v6064
      %6962 = vst.msk [vmem:[%s223 + $0x5d0] sm:$0xf] %vm6589, %v6065
      %6963 = vst.msk [vmem:[%s223 + $0x5d4] sm:$0xf] %vm6589, %v6066
      %6964 = vst.msk [vmem:[%s223 + $0x5d8] sm:$0xf] %vm6589, %v6067
      %6965 = vst.msk [vmem:[%s223 + $0x5dc] sm:$0xf] %vm6589, %v6068
      %6966 = vst.msk [vmem:[%s223 + $0x5e0] sm:$0xf] %vm6589, %v6069
      %6967 = vst.msk [vmem:[%s223 + $0x5e4] sm:$0xf] %vm6589, %v6070
      %6968 = vst.msk [vmem:[%s223 + $0x5e8] sm:$0xf] %vm6589, %v6071
      %6969 = vst.msk [vmem:[%s223 + $0x5ec] sm:$0xf] %vm6589, %v6072
      %6970 = vst.msk [vmem:[%s223 + $0x5f0] sm:$0xf] %vm6589, %v6073
      %6971 = vst.msk [vmem:[%s223 + $0x5f4] sm:$0xf] %vm6589, %v6074
      %6972 = vst.msk [vmem:[%s223 + $0x5f8] sm:$0xf] %vm6589, %v6075
      %6973 = vst.msk [vmem:[%s223 + $0x5fc] sm:$0xf] %vm6589, %v6076
      %6974 = vst.msk [vmem:[%s223 + $0x600] sm:$0xf] %vm6589, %v6077
      %6975 = vst.msk [vmem:[%s223 + $0x604] sm:$0xf] %vm6589, %v6078
      %6976 = vst.msk [vmem:[%s223 + $0x608] sm:$0xf] %vm6589, %v6079
      %6977 = vst.msk [vmem:[%s223 + $0x60c] sm:$0xf] %vm6589, %v6080
      %6978 = vst.msk [vmem:[%s223 + $0x610] sm:$0xf] %vm6589, %v6081
      %6979 = vst.msk [vmem:[%s223 + $0x614] sm:$0xf] %vm6589, %v6082
      %6980 = vst.msk [vmem:[%s223 + $0x618] sm:$0xf] %vm6589, %v6083
      %6981 = vst.msk [vmem:[%s223 + $0x61c] sm:$0xf] %vm6589, %v6084
      %6982 = vst.msk [vmem:[%s223 + $0x620] sm:$0xf] %vm6589, %v6085
      %6983 = vst.msk [vmem:[%s223 + $0x624] sm:$0xf] %vm6589, %v6086
      %6984 = vst.msk [vmem:[%s223 + $0x628] sm:$0xf] %vm6589, %v6087
      %6985 = vst.msk [vmem:[%s223 + $0x62c] sm:$0xf] %vm6589, %v6088
      %6986 = vst.msk [vmem:[%s223 + $0x630] sm:$0xf] %vm6589, %v6089
      %6987 = vst.msk [vmem:[%s223 + $0x634] sm:$0xf] %vm6589, %v6090
      %6988 = vst.msk [vmem:[%s223 + $0x638] sm:$0xf] %vm6589, %v6091
      %6989 = vst.msk [vmem:[%s223 + $0x63c] sm:$0xf] %vm6589, %v6092
      %6990 = vst.msk [vmem:[%s223 + $0x640] sm:$0xf] %vm6589, %v6093
      %6991 = vst.msk [vmem:[%s223 + $0x644] sm:$0xf] %vm6589, %v6094
      %6992 = vst.msk [vmem:[%s223 + $0x648] sm:$0xf] %vm6589, %v6095
      %6993 = vst.msk [vmem:[%s223 + $0x64c] sm:$0xf] %vm6589, %v6096
      %6994 = vst.msk [vmem:[%s223 + $0x650] sm:$0xf] %vm6589, %v6097
      %6995 = vst.msk [vmem:[%s223 + $0x654] sm:$0xf] %vm6589, %v6098
      %6996 = vst.msk [vmem:[%s223 + $0x658] sm:$0xf] %vm6589, %v6099
      %6997 = vst.msk [vmem:[%s223 + $0x65c] sm:$0xf] %vm6589, %v6100
      %6998 = vst.msk [vmem:[%s223 + $0x660] sm:$0xf] %vm6589, %v6101
      %6999 = vst.msk [vmem:[%s223 + $0x664] sm:$0xf] %vm6589, %v6102
      %7000 = vst.msk [vmem:[%s223 + $0x668] sm:$0xf] %vm6589, %v6103
      %7001 = vst.msk [vmem:[%s223 + $0x66c] sm:$0xf] %vm6589, %v6104
      %7002 = vst.msk [vmem:[%s223 + $0x670] sm:$0xf] %vm6589, %v6105
      %7003 = vst.msk [vmem:[%s223 + $0x674] sm:$0xf] %vm6589, %v6106
      %7004 = vst.msk [vmem:[%s223 + $0x678] sm:$0xf] %vm6589, %v6107
      %7005 = vst.msk [vmem:[%s223 + $0x67c] sm:$0xf] %vm6589, %v6108
      %7006 = vst.msk [vmem:[%s223 + $0x680] sm:$0xf] %vm6589, %v6109
      %7007 = vst.msk [vmem:[%s223 + $0x684] sm:$0xf] %vm6589, %v6110
      %7008 = vst.msk [vmem:[%s223 + $0x688] sm:$0xf] %vm6589, %v6111
      %7009 = vst.msk [vmem:[%s223 + $0x68c] sm:$0xf] %vm6589, %v6112
      %7010 = vst.msk [vmem:[%s223 + $0x690] sm:$0xf] %vm6589, %v6113
      %7011 = vst.msk [vmem:[%s223 + $0x694] sm:$0xf] %vm6589, %v6114
      %7012 = vst.msk [vmem:[%s223 + $0x698] sm:$0xf] %vm6589, %v6115
      %7013 = vst.msk [vmem:[%s223 + $0x69c] sm:$0xf] %vm6589, %v6116
      %7014 = vst.msk [vmem:[%s223 + $0x6a0] sm:$0xf] %vm6589, %v6117
      %7015 = vst.msk [vmem:[%s223 + $0x6a4] sm:$0xf] %vm6589, %v6118
      %7016 = vst.msk [vmem:[%s223 + $0x6a8] sm:$0xf] %vm6589, %v6119
      %7017 = vst.msk [vmem:[%s223 + $0x6ac] sm:$0xf] %vm6589, %v6120
      %7018 = vst.msk [vmem:[%s223 + $0x6b0] sm:$0xf] %vm6589, %v6121
      %7019 = vst.msk [vmem:[%s223 + $0x6b4] sm:$0xf] %vm6589, %v6122
      %7020 = vst.msk [vmem:[%s223 + $0x6b8] sm:$0xf] %vm6589, %v6123
      %7021 = vst.msk [vmem:[%s223 + $0x6bc] sm:$0xf] %vm6589, %v6124
      %7022 = vst.msk [vmem:[%s223 + $0x6c0] sm:$0xf] %vm6589, %v6125
      %7023 = vst.msk [vmem:[%s223 + $0x6c4] sm:$0xf] %vm6589, %v6126
      %7024 = vst.msk [vmem:[%s223 + $0x6c8] sm:$0xf] %vm6589, %v6127
      %7025 = vst.msk [vmem:[%s223 + $0x6cc] sm:$0xf] %vm6589, %v6128
      %7026 = vst.msk [vmem:[%s223 + $0x6d0] sm:$0xf] %vm6589, %v6129
      %7027 = vst.msk [vmem:[%s223 + $0x6d4] sm:$0xf] %vm6589, %v6130
      %7028 = vst.msk [vmem:[%s223 + $0x6d8] sm:$0xf] %vm6589, %v6131
      %7029 = vst.msk [vmem:[%s223 + $0x6dc] sm:$0xf] %vm6589, %v6132
      %7030 = vst.msk [vmem:[%s223 + $0x6e0] sm:$0xf] %vm6589, %v6133
      %7031 = vst.msk [vmem:[%s223 + $0x6e4] sm:$0xf] %vm6589, %v6134
      %7032 = vst.msk [vmem:[%s223 + $0x6e8] sm:$0xf] %vm6589, %v6135
      %7033 = vst.msk [vmem:[%s223 + $0x6ec] sm:$0xf] %vm6589, %v6136
      %7034 = vst.msk [vmem:[%s223 + $0x6f0] sm:$0xf] %vm6589, %v6137
      %7035 = vst.msk [vmem:[%s223 + $0x6f4] sm:$0xf] %vm6589, %v6138
      %7036 = vst.msk [vmem:[%s223 + $0x6f8] sm:$0xf] %vm6589, %v6139
      %7037 = vst.msk [vmem:[%s223 + $0x6fc] sm:$0xf] %vm6589, %v6140
      %s7038 = smul.u32 448, %s18
      %p7039 = scmp.lt.s32.totalorder %s7038, 3135
      %s7040 = scalar_select %p7039, %s7038, 3135
      %p7041 = scmp.lt.s32.totalorder %s19, 0
      %s7042 = scalar_select %p7041, %s19, 0
      %s7043 = sadd.s32 %s7042, %s7040
      %s7044 = smul.addr %s7043, 4
      %s7045 = scalar_lea.vmem %s3, %s7044
      // Predicated region
      $region33: #{fused_matmul.1} parent=31 // pred_check
        %p7046 = pneg %p124
      $region34: #{fused_matmul.1} parent=31 // pred_check_branch
        %7048 = sbr.rel (%p7046) target = $region36
      $region35: #{fused_matmul.1} parent=31 // pred_region
        %s7049 = smul.u32 448, %s18
      $region36: #{fused_matmul.1} parent=31 // pred_fallthru
        _
    $region32: #{fused_matmul.1} parent=5 // pred_fallthru
      _
    %p7050 = scmp.le.s32.totalorder 2, %s9
    // Predicated region
    $region37: #{fused_matmul.1} parent=5 // pred_check
      %p7051 = pneg %p7050
    $region38: #{fused_matmul.1} parent=5 // pred_check_branch
      %7053 = sbr.rel (%p7051) target = $region40
    $region39: #{fused_matmul.1} parent=5 // pred_region
      %s7054 = ssub.s32 %s9, 2
      // Predicated region
      $region41: #{fused_matmul.1} parent=39 // pred_check
        %p7055 = pneg %p130
      $region42: #{fused_matmul.1} parent=39 // pred_check_branch
        %7057 = sbr.rel (%p7055) target = $region44
      $region43: #{fused_matmul.1} parent=39 // pred_region
        %s7058 = smul.u32 448, %s20
        %p7059 = scmp.lt.s32.totalorder %s7058, 3135
        %s7060 = scalar_select %p7059, %s7058, 3135
        %p7061 = scmp.lt.s32.totalorder %s21, 0
        %s7062 = scalar_select %p7061, %s21, 0
        %s7063 = sadd.s32 %s7062, %s7060
        %s7064 = smul.addr %s7063, 4
        %s7065 = scalar_lea.vmem %s3, %s7064
      $region44: #{fused_matmul.1} parent=39 // pred_fallthru
        _
    $region40: #{fused_matmul.1} parent=5 // pred_fallthru
      _
  $region6: #{fused_matmul.1} parent=0 // loop_footer
    %s13 = sadd.s32 1, %s9
  $region7: #{fused_matmul.1} parent=0 // loop_footer_branch
    %8 = sbr.rel target = $region3
  $region8: #{fused_matmul.1} parent=0 // loop_exit
    _

</llo_original>
